<compile_context>
chip_gen: v7x
topology: tpu7x:2x2x1
jax: 0.10.0
libtpu: 0.0.40
codegen_flags: <defaults>
</compile_context>

<pallas_src>
import functools

import jax
import jax.numpy as jnp
from jax import lax
from jax.experimental import pallas as pl
from jax.experimental.pallas import tpu as pltpu

_EPS = 1e-5
_LANES = 128


def _round_up(x, m):
    return (x + m - 1) // m * m


def _pick_tile(total, target):
    """Largest divisor of `total` that is <= target (always >= 1)."""
    t = max(1, min(total, target))
    while total % t:
        t -= 1
    return t


def _is_v5():
    """True on TPU v5 generation (smaller MXU, single vst slot)."""
    try:
        kind = jax.devices()[0].device_kind.lower()
    except Exception:
        return False
    return "v5" in kind


# ---------------------------------------------------------------------------
# Pallas kernels
# ---------------------------------------------------------------------------
def _tap_accum(x_ref, w_ref, stride, th, wo):
    """Accumulate the 9 taps of a 3x3 conv for one (row-tile, cout-tile).

    x_ref: (stride*stride, Hq, Wq, Cin) bf16 phase-split, spatially padded
           input (whole image VMEM-resident, reused across the row-tile axis).
    w_ref: (9, Cin, tn) bf16, tap index = dy*3 + dx.
    Returns f32 (th*wo, tn).
    """
    # TODO(synk): on v6e/v7x (256-deep MXU) pack pairs of taps along K when
    #             cin_p == 128 to avoid ~2x K-underfill.
    # TODO(synk): derive the dx=1,2 shifts with pltpu.roll (XLU slot) instead
    #             of unaligned sublane slices to cut vld/vst relayout work.
    row0 = pl.program_id(2) * th
    cin = x_ref.shape[-1]
    acc = None
    for dy in range(3):
        for dx in range(3):
            ph = (dy % stride) * stride + (dx % stride)
            xs = x_ref[ph,
                       pl.ds(row0 + dy // stride, th),
                       pl.ds(dx // stride, wo), :]
            xs = xs.reshape(th * wo, cin)
            if xs.dtype != jnp.bfloat16:   # no-op: activations are bf16
                xs = xs.astype(jnp.bfloat16)
            part = jnp.dot(xs, w_ref[dy * 3 + dx],
                           preferred_element_type=jnp.float32)
            acc = part if acc is None else acc + part
    return acc


def _conv_bn_kernel(x_ref, w_ref, s_ref, b_ref, o_ref, *, stride, th, wo, relu):
    acc = _tap_accum(x_ref, w_ref, stride, th, wo)
    y = acc * s_ref[...] + b_ref[...]
    if relu:
        y = jnp.maximum(y, 0.0)
    o_ref[...] = y.reshape(o_ref.shape).astype(o_ref.dtype)


def _conv_bn_add_id_kernel(x_ref, w_ref, s_ref, b_ref, r_ref, o_ref, *,
                           stride, th, wo):
    acc = _tap_accum(x_ref, w_ref, stride, th, wo)
    y = acc * s_ref[...] + b_ref[...]
    r = r_ref[...].reshape(th * wo, r_ref.shape[-1]).astype(jnp.float32)
    o_ref[...] = jnp.maximum(y + r, 0.0).reshape(o_ref.shape).astype(o_ref.dtype)


def _conv_bn_add_proj_kernel(x_ref, w_ref, s_ref, b_ref,
                             r_ref, ws_ref, ss_ref, bs_ref, o_ref, *,
                             stride, th, wo):
    acc = _tap_accum(x_ref, w_ref, stride, th, wo)
    y = acc * s_ref[...] + b_ref[...]
    # The residual block may carry a halo column on the W axis (proj_phase
    # mode uses the full padded width so the BlockSpec stays (8,128)-legal);
    # slice it back to wo here.
    r = r_ref[0, :, 0:wo, :].reshape(th * wo, r_ref.shape[-1])
    if r.dtype != jnp.bfloat16:
        r = r.astype(jnp.bfloat16)
    sc = jnp.dot(r, ws_ref[...], preferred_element_type=jnp.float32)
    sc = sc * ss_ref[...] + bs_ref[...]
    o_ref[...] = jnp.maximum(y + sc, 0.0).reshape(o_ref.shape).astype(o_ref.dtype)


# ---------------------------------------------------------------------------
# pallas_call wrapper for one fused 3x3 conv (+BN, optional shortcut, ReLU)
# ---------------------------------------------------------------------------
def _conv3x3(x_ph, w9, scale, bias, *, n, ho, wo, stride, relu,
             residual=None, residual_mode=None, res_stride=1, proj=None,
             out_dtype=jnp.float32):
    """3x3 conv (pad=1) + folded BN (+ fused shortcut add + ReLU).

    x_ph      : (n * stride^2, Hq, Wq, cin_p) bf16 spatially padded (phase-split).
    w9        : (9, cin_p, cout_p) bf16.
    scale/bias: (1, cout_p) f32 folded BN.
    residual_mode:
      "identity"  : residual is (n, ho, wo, cout_p) bf16, added directly.
      "proj_dense": residual is (n, ho, wo, cin_p) bf16 -> fused 1x1 conv + BN.
      "proj_phase": residual is the phase-split padded x; phase (1,1) is the
                    stride-2 subsample -> fused 1x1 conv + BN.
    """
    p = stride * stride
    _, hq, wq, cin_p = x_ph.shape
    cout_p = w9.shape[-1]

    v5 = _is_v5()
    # v5e: 4x128^2 MXU and a single vector-store slot -> tn=256 buys no MXU
    # throughput but doubles the f32 accumulator writeback; keep tn=128 and a
    # ~256-row accumulator there.  v6e/v7x: tn=256, ~512 rows.
    tn = 128 if (v5 or cout_p % 256) else 256
    target_rows = 256 if v5 else 512
    th = _pick_tile(ho, max(1, target_rows // wo))
    n_jt = cout_p // tn
    n_it = ho // th

    # Grid-order choice: put whichever operand carries more HBM traffic on the
    # outer axis so it is DMA'd once and reused across the inner axis.
    #   batch-outer (b,j,i): ~ n*image + n*weights
    #   cout-outer  (j,b,i): ~ n_jt*n*image + weights
    img_bytes = p * hq * wq * cin_p * x_ph.dtype.itemsize
    w_bytes = 9 * cin_p * cout_p * 2
    weights_outer = (n * w_bytes + n * img_bytes) > (w_bytes + n_jt * n * img_bytes)
    if weights_outer:
        grid = (n_jt, n, n_it)
        bji = lambda g0, g1, g2: (g1, g0, g2)   # grid coords -> (b, j, i)
    else:
        grid = (n, n_jt, n_it)
        bji = lambda g0, g1, g2: (g0, g1, g2)

    def xmap(g0, g1, g2):
        b, j, i = bji(g0, g1, g2)
        return (b, 0, 0, 0)

    def wmap(g0, g1, g2):
        b, j, i = bji(g0, g1, g2)
        return (0, 0, j)

    def sbmap(g0, g1, g2):
        b, j, i = bji(g0, g1, g2)
        return (0, j)

    def omap(g0, g1, g2):
        b, j, i = bji(g0, g1, g2)
        return (b, i, 0, j)

    # TODO(synk): once single-buffering is confirmed supported, mark x_spec
    #             with pipeline_mode=pl.Buffered(1) (its block index only
    #             changes with the batch coordinate) to halve the resident
    #             image VMEM on v7x.
    x_spec = pl.BlockSpec((p, hq, wq, cin_p), xmap)
    w_spec = pl.BlockSpec((9, cin_p, tn), wmap)
    sb_spec = pl.BlockSpec((1, tn), sbmap)
    o_spec = pl.BlockSpec((1, th, wo, tn), omap)
    out_shape = jax.ShapeDtypeStruct((n, ho, wo, cout_p), out_dtype)

    cparams = pltpu.CompilerParams(
        dimension_semantics=("parallel", "parallel", "arbitrary"),
        vmem_limit_bytes=40 * 1024 * 1024)

    if residual is None:
        kern = functools.partial(_conv_bn_kernel, stride=stride, th=th, wo=wo,
                                 relu=relu)
        return pl.pallas_call(
            kern, out_shape=out_shape, grid=grid,
            in_specs=[x_spec, w_spec, sb_spec, sb_spec],
            out_specs=o_spec, compiler_params=cparams,
        )(x_ph, w9, scale, bias)

    cr = residual.shape[-1]
    if residual_mode == "identity":
        r_spec = pl.BlockSpec((1, th, wo, tn), omap)
        kern = functools.partial(_conv_bn_add_id_kernel, stride=stride, th=th,
                                 wo=wo)
        return pl.pallas_call(
            kern, out_shape=out_shape, grid=grid,
            in_specs=[x_spec, w_spec, sb_spec, sb_spec, r_spec],
            out_specs=o_spec, compiler_params=cparams,
        )(x_ph, w9, scale, bias, residual)

    # Projection shortcut fused into the epilogue.
    ws, ss, bs = proj
    wr = residual.shape[2]            # full W of the residual array
    if residual_mode == "proj_dense":
        def rmap(g0, g1, g2):
            b, j, i = bji(g0, g1, g2)
            return (b, i, 0, 0)
    else:  # "proj_phase": phase (1,1) of padded x == x[:, ::2, ::2, :]
        rp = res_stride * res_stride
        def rmap(g0, g1, g2):
            b, j, i = bji(g0, g1, g2)
            return (b * rp + (rp - 1), i, 0, 0)
    # Full-width W block (== array dim) keeps the BlockSpec legal even when
    # wo is not a multiple of 8; the kernel slices off the halo column.
    r_spec = pl.BlockSpec((1, th, wr, cr), rmap)

    def wsmap(g0, g1, g2):
        b, j, i = bji(g0, g1, g2)
        return (0, j)
    ws_spec = pl.BlockSpec((cr, tn), wsmap)

    kern = functools.partial(_conv_bn_add_proj_kernel, stride=stride, th=th,
                             wo=wo)
    return pl.pallas_call(
        kern, out_shape=out_shape, grid=grid,
        in_specs=[x_spec, w_spec, sb_spec, sb_spec, r_spec, ws_spec,
                  sb_spec, sb_spec],
        out_specs=o_spec, compiler_params=cparams,
    )(x_ph, w9, scale, bias, residual, ws, ss, bs)


# ---------------------------------------------------------------------------
# One-time parameter packing (hoisted out of the forward pass)
# ---------------------------------------------------------------------------
def _fold_bn(bn, c_pad):
    gamma, beta, mean, var = bn
    scale = gamma / jnp.sqrt(var + _EPS)
    bias = beta - mean * scale
    c = scale.shape[0]
    scale = jnp.pad(scale, (0, c_pad - c)).reshape(1, c_pad).astype(jnp.float32)
    bias = jnp.pad(bias, (0, c_pad - c)).reshape(1, c_pad).astype(jnp.float32)
    return scale, bias


def _pack_w3x3(w, cin_p, cout_p):
    """(cout, cin, 3, 3) OIHW -> (9, cin_p, cout_p) bf16, tap = dy*3 + dx."""
    cout, cin = w.shape[:2]
    w = jnp.transpose(w, (2, 3, 1, 0))
    w = jnp.pad(w, ((0, 0), (0, 0), (0, cin_p - cin), (0, cout_p - cout)))
    return w.reshape(9, cin_p, cout_p).astype(jnp.bfloat16)


def prepare_params(raw, cin, cout, stride):
    cin_p = _round_up(cin, _LANES)
    cout_p = _round_up(cout, _LANES)
    p = {"cin": cin, "cout": cout, "cin_p": cin_p, "cout_p": cout_p,
         "stride": stride,
         "w1": _pack_w3x3(raw["w1"], cin_p, cout_p),
         "w2": _pack_w3x3(raw["w2"], cout_p, cout_p)}
    p["s1"], p["b1"] = _fold_bn(raw["bn1"], cout_p)
    p["s2"], p["b2"] = _fold_bn(raw["bn2"], cout_p)
    if "ws" in raw:
        ws = jnp.transpose(raw["ws"][:, :, 0, 0], (1, 0))
        p["ws"] = jnp.pad(ws, ((0, cin_p - cin),
                               (0, cout_p - cout))).astype(jnp.bfloat16)
        p["ss"], p["bs"] = _fold_bn(raw["bns"], cout_p)
    return p


# ---------------------------------------------------------------------------
# ResBlock forward (two fused pallas_calls + cheap layout glue)
# ---------------------------------------------------------------------------
def resblock_forward(x_nchw, p):
    stride = p["stride"]
    cin, cout = p["cin"], p["cout"]
    cin_p = p["cin_p"]

    # NCHW->NHWC, lane-pad channels, carry activations in bf16 end-to-end.
    # TODO(synk): in a full ResNet, keep activations in lane-padded NHWC/bf16
    #             between blocks so this transpose/pad glue happens once per
    #             network, not per block.
    x = jnp.transpose(x_nchw, (0, 2, 3, 1))
    n, h, w, _ = x.shape
    x = jnp.pad(x, ((0, 0), (0, 0), (0, 0),
                    (0, cin_p - cin))).astype(jnp.bfloat16)
    if stride == 2:
        assert h % 2 == 0 and w % 2 == 0, "stride-2 phase split needs even H/W"
    ho = (h - 1) // stride + 1
    wo = (w - 1) // stride + 1

    # Spatial pad; for stride 2, split into 2x2 phases so every conv tap is a
    # unit-stride slice of a VMEM-resident block (no HBM im2col).
    xp = jnp.pad(x, ((0, 0), (1, 1), (1, 1), (0, 0)))
    if stride == 1:
        x_ph = xp
    else:                                   # stride == 2
        hp, wp = h + 2, w + 2
        x_ph = xp.reshape(n, hp // 2, 2, wp // 2, 2, cin_p)
        x_ph = jnp.transpose(x_ph, (0, 2, 4, 1, 3, 5))
        x_ph = x_ph.reshape(n * 4, hp // 2, wp // 2, cin_p)

    # conv1 (3x3, stride) + bn1 + relu; output stored in bf16 (it is only ever
    # an MXU operand downstream) -> halves o1's HBM write + readback.
    o1 = _conv3x3(x_ph, p["w1"], p["s1"], p["b1"],
                  n=n, ho=ho, wo=wo, stride=stride, relu=True,
                  out_dtype=jnp.bfloat16)

    # conv2 (3x3, stride 1) + bn2 + shortcut + residual add + relu, all fused.
    # TODO(synk): have conv1 write straight into a (ho+2, wo+2)-padded buffer
    #             to eliminate this extra HBM pad pass.
    o1p = jnp.pad(o1, ((0, 0), (1, 1), (1, 1), (0, 0)))
    if "ws" in p:
        if stride == 1:
            residual, mode = x, "proj_dense"
        else:
            residual, mode = x_ph, "proj_phase"
        out = _conv3x3(o1p, p["w2"], p["s2"], p["b2"],
                       n=n, ho=ho, wo=wo, stride=1, relu=True,
                       residual=residual, residual_mode=mode,
                       res_stride=stride, proj=(p["ws"], p["ss"], p["bs"]))
    else:
        out = _conv3x3(o1p, p["w2"], p["s2"], p["b2"],
                       n=n, ho=ho, wo=wo, stride=1, relu=True,
                       residual=x, residual_mode="identity")

    return jnp.transpose(out[..., :cout], (0, 3, 1, 2))           # NHWC->NCHW


# ---------------------------------------------------------------------------
# Deterministic init + pure-JAX reference (same bf16/f32 mixed precision)
# ---------------------------------------------------------------------------
def init_raw_params(key, cin, cout, stride, dtype=jnp.float32):
    ks = jax.random.split(key, 6)

    def bn(k, c):
        k1, k2, k3, k4 = jax.random.split(k, 4)
        return (jax.random.uniform(k1, (c,), dtype, 0.5, 1.5),   # gamma
                jax.random.normal(k2, (c,), dtype) * 0.1,         # beta
                jax.random.normal(k3, (c,), dtype) * 0.1,         # running mean
                jax.random.uniform(k4, (c,), dtype, 0.5, 1.5))    # running var

    raw = {"w1": jax.random.normal(ks[0], (cout, cin, 3, 3), dtype) * 0.2,
           "bn1": bn(ks[1], cout),
           "w2": jax.random.normal(ks[2], (cout, cout, 3, 3), dtype) * 0.2,
           "bn2": bn(ks[3], cout)}
    if stride != 1 or cin != cout:
        raw["ws"] = jax.random.normal(ks[4], (cout, cin, 1, 1), dtype) * 0.2
        raw["bns"] = bn(ks[5], cout)
    return raw


def _conv_ref(x, w, stride, padding):
    # Matches the kernel's mixed precision: bf16 operands, f32 accumulation.
    return lax.conv_general_dilated(
        x.astype(jnp.bfloat16), w.astype(jnp.bfloat16), (stride, stride),
        [(padding, padding)] * 2,
        dimension_numbers=("NCHW", "OIHW", "NCHW"),
        preferred_element_type=jnp.float32)


def _bn_ref(x, gamma, beta, mean, var):
    s = gamma / jnp.sqrt(var + _EPS)
    return x * s.reshape(1, -1, 1, 1) + (beta - mean * s).reshape(1, -1, 1, 1)


def resblock_ref(x, raw, stride):
    o = jax.nn.relu(_bn_ref(_conv_ref(x, raw["w1"], stride, 1), *raw["bn1"]))
    o = _bn_ref(_conv_ref(o, raw["w2"], 1, 1), *raw["bn2"])
    if "ws" in raw:
        sc = _bn_ref(_conv_ref(x, raw["ws"], stride, 0), *raw["bns"])
    else:
        sc = x
    return jax.nn.relu(o + sc)


# ---------------------------------------------------------------------------
if __name__ == "__main__":
    key = jax.random.PRNGKey(0)
    kx, k1, k2, k3 = jax.random.split(key, 4)

    # (inchannel, outchannel, stride) -- exercises all three shortcut flavours
    cases = [
        (8, 16, 1, k1),    # 1x1 projection shortcut (channel change)
        (16, 16, 1, k2),   # identity shortcut
        (16, 32, 2, k3),   # strided projection shortcut (downsample)
    ]
    n, h, w = 2, 16, 16
    for cin, cout, stride, kp in cases:
        x = jax.random.normal(kx, (n, cin, h, w), jnp.float32)
        raw = init_raw_params(kp, cin, cout, stride)
        params = prepare_params(raw, cin, cout, stride)
        out = jax.block_until_ready(resblock_forward(x, params))
        ref = resblock_ref(x, raw, stride)
        ho = (h - 1) // stride + 1
        wo = (w - 1) // stride + 1
        assert out.shape == (n, cout, ho, wo), out.shape
        err = float(jnp.max(jnp.abs(out - ref)))
        assert jnp.allclose(out, ref, atol=3e-2, rtol=3e-2), err
    print("KERNEL_OK")
</pallas_src>

<mosaic_0001>
module attributes {stable_mosaic.version = 11 : i64} {
  func.func @_conv_bn_kernel(%arg0: i32, %arg1: i32, %arg2: i32, %arg3: memref<1x18x18x128xbf16, #tpu.memory_space<vmem>>, %arg4: memref<9x128x128xbf16, #tpu.memory_space<vmem>>, %arg5: memref<1x128xf32, #tpu.memory_space<vmem>>, %arg6: memref<1x128xf32, #tpu.memory_space<vmem>>, %arg7: memref<1x16x16x128xbf16, #tpu.memory_space<vmem>>) attributes {dimension_semantics = [#tpu.dimension_semantics<parallel>, #tpu.dimension_semantics<parallel>, #tpu.dimension_semantics<arbitrary>], iteration_bounds = array<i64: 1, 2, 1>, scalar_prefetch = 0 : i64, scratch_operands = 0 : i64, tpu.core_type = #tpu.core_type<tc>, window_params = [{transform_indices = @transform_0, window_bounds = array<i64: 1, 18, 18, 128>}, {transform_indices = @transform_1, window_bounds = array<i64: 9, 128, 128>}, {transform_indices = @transform_2, window_bounds = array<i64: 1, 128>}, {transform_indices = @transform_3, window_bounds = array<i64: 1, 128>}, {transform_indices = @transform_4, window_bounds = array<i64: 1, 16, 16, 128>}]} {
    %c16_i32 = arith.constant 16 : i32
    %0 = arith.muli %arg2, %c16_i32 : i32
    %c0_i32 = arith.constant 0 : i32
    %1 = arith.addi %0, %c0_i32 : i32
    %c0 = arith.constant 0 : index
    %2 = arith.index_cast %1 : i32 to index
    %c0_0 = arith.constant 0 : index
    %c0_1 = arith.constant 0 : index
    %3 = vector.load %arg3[%c0, %2, %c0_0, %c0_1] : memref<1x18x18x128xbf16, #tpu.memory_space<vmem>>, vector<1x16x16x128xbf16>
    %4 = vector.shape_cast %3 : vector<1x16x16x128xbf16> to vector<16x16x128xbf16>
    %5 = vector.shape_cast %4 : vector<16x16x128xbf16> to vector<256x128xbf16>
    %c0_2 = arith.constant 0 : index
    %c0_3 = arith.constant 0 : index
    %c0_4 = arith.constant 0 : index
    %6 = vector.load %arg4[%c0_2, %c0_3, %c0_4] : memref<9x128x128xbf16, #tpu.memory_space<vmem>>, vector<1x128x128xbf16>
    %7 = vector.shape_cast %6 : vector<1x128x128xbf16> to vector<128x128xbf16>
    %cst = arith.constant dense<0.000000e+00> : vector<256x128xf32>
    %8 = tpu.matmul %5, %7, %cst {dimension_numbers = #tpu.dot_dimension_numbers<[1], [0], [0], [1], [0, 0, 1, 1], [], []>} : vector<256x128xbf16>, vector<128x128xbf16>, vector<256x128xf32> -> vector<256x128xf32>
    %c0_i32_5 = arith.constant 0 : i32
    %9 = arith.addi %0, %c0_i32_5 : i32
    %c0_6 = arith.constant 0 : index
    %10 = arith.index_cast %9 : i32 to index
    %c1 = arith.constant 1 : index
    %c0_7 = arith.constant 0 : index
    %11 = vector.load %arg3[%c0_6, %10, %c1, %c0_7] : memref<1x18x18x128xbf16, #tpu.memory_space<vmem>>, vector<1x16x16x128xbf16>
    %12 = vector.shape_cast %11 : vector<1x16x16x128xbf16> to vector<16x16x128xbf16>
    %13 = vector.shape_cast %12 : vector<16x16x128xbf16> to vector<256x128xbf16>
    %c1_8 = arith.constant 1 : index
    %c0_9 = arith.constant 0 : index
    %c0_10 = arith.constant 0 : index
    %14 = vector.load %arg4[%c1_8, %c0_9, %c0_10] : memref<9x128x128xbf16, #tpu.memory_space<vmem>>, vector<1x128x128xbf16>
    %15 = vector.shape_cast %14 : vector<1x128x128xbf16> to vector<128x128xbf16>
    %cst_11 = arith.constant dense<0.000000e+00> : vector<256x128xf32>
    %16 = tpu.matmul %13, %15, %cst_11 {dimension_numbers = #tpu.dot_dimension_numbers<[1], [0], [0], [1], [0, 0, 1, 1], [], []>} : vector<256x128xbf16>, vector<128x128xbf16>, vector<256x128xf32> -> vector<256x128xf32>
    %17 = arith.addf %8, %16 : vector<256x128xf32>
    %c0_i32_12 = arith.constant 0 : i32
    %18 = arith.addi %0, %c0_i32_12 : i32
    %c0_13 = arith.constant 0 : index
    %19 = arith.index_cast %18 : i32 to index
    %c2 = arith.constant 2 : index
    %c0_14 = arith.constant 0 : index
    %20 = vector.load %arg3[%c0_13, %19, %c2, %c0_14] : memref<1x18x18x128xbf16, #tpu.memory_space<vmem>>, vector<1x16x16x128xbf16>
    %21 = vector.shape_cast %20 : vector<1x16x16x128xbf16> to vector<16x16x128xbf16>
    %22 = vector.shape_cast %21 : vector<16x16x128xbf16> to vector<256x128xbf16>
    %c2_15 = arith.constant 2 : index
    %c0_16 = arith.constant 0 : index
    %c0_17 = arith.constant 0 : index
    %23 = vector.load %arg4[%c2_15, %c0_16, %c0_17] : memref<9x128x128xbf16, #tpu.memory_space<vmem>>, vector<1x128x128xbf16>
    %24 = vector.shape_cast %23 : vector<1x128x128xbf16> to vector<128x128xbf16>
    %cst_18 = arith.constant dense<0.000000e+00> : vector<256x128xf32>
    %25 = tpu.matmul %22, %24, %cst_18 {dimension_numbers = #tpu.dot_dimension_numbers<[1], [0], [0], [1], [0, 0, 1, 1], [], []>} : vector<256x128xbf16>, vector<128x128xbf16>, vector<256x128xf32> -> vector<256x128xf32>
    %26 = arith.addf %17, %25 : vector<256x128xf32>
    %c1_i32 = arith.constant 1 : i32
    %27 = arith.addi %0, %c1_i32 : i32
    %c0_19 = arith.constant 0 : index
    %28 = arith.index_cast %27 : i32 to index
    %c0_20 = arith.constant 0 : index
    %c0_21 = arith.constant 0 : index
    %29 = vector.load %arg3[%c0_19, %28, %c0_20, %c0_21] : memref<1x18x18x128xbf16, #tpu.memory_space<vmem>>, vector<1x16x16x128xbf16>
    %30 = vector.shape_cast %29 : vector<1x16x16x128xbf16> to vector<16x16x128xbf16>
    %31 = vector.shape_cast %30 : vector<16x16x128xbf16> to vector<256x128xbf16>
    %c3 = arith.constant 3 : index
    %c0_22 = arith.constant 0 : index
    %c0_23 = arith.constant 0 : index
    %32 = vector.load %arg4[%c3, %c0_22, %c0_23] : memref<9x128x128xbf16, #tpu.memory_space<vmem>>, vector<1x128x128xbf16>
    %33 = vector.shape_cast %32 : vector<1x128x128xbf16> to vector<128x128xbf16>
    %cst_24 = arith.constant dense<0.000000e+00> : vector<256x128xf32>
    %34 = tpu.matmul %31, %33, %cst_24 {dimension_numbers = #tpu.dot_dimension_numbers<[1], [0], [0], [1], [0, 0, 1, 1], [], []>} : vector<256x128xbf16>, vector<128x128xbf16>, vector<256x128xf32> -> vector<256x128xf32>
    %35 = arith.addf %26, %34 : vector<256x128xf32>
    %c1_i32_25 = arith.constant 1 : i32
    %36 = arith.addi %0, %c1_i32_25 : i32
    %c0_26 = arith.constant 0 : index
    %37 = arith.index_cast %36 : i32 to index
    %c1_27 = arith.constant 1 : index
    %c0_28 = arith.constant 0 : index
    %38 = vector.load %arg3[%c0_26, %37, %c1_27, %c0_28] : memref<1x18x18x128xbf16, #tpu.memory_space<vmem>>, vector<1x16x16x128xbf16>
    %39 = vector.shape_cast %38 : vector<1x16x16x128xbf16> to vector<16x16x128xbf16>
    %40 = vector.shape_cast %39 : vector<16x16x128xbf16> to vector<256x128xbf16>
    %c4 = arith.constant 4 : index
    %c0_29 = arith.constant 0 : index
    %c0_30 = arith.constant 0 : index
    %41 = vector.load %arg4[%c4, %c0_29, %c0_30] : memref<9x128x128xbf16, #tpu.memory_space<vmem>>, vector<1x128x128xbf16>
    %42 = vector.shape_cast %41 : vector<1x128x128xbf16> to vector<128x128xbf16>
    %cst_31 = arith.constant dense<0.000000e+00> : vector<256x128xf32>
    %43 = tpu.matmul %40, %42, %cst_31 {dimension_numbers = #tpu.dot_dimension_numbers<[1], [0], [0], [1], [0, 0, 1, 1], [], []>} : vector<256x128xbf16>, vector<128x128xbf16>, vector<256x128xf32> -> vector<256x128xf32>
    %44 = arith.addf %35, %43 : vector<256x128xf32>
    %c1_i32_32 = arith.constant 1 : i32
    %45 = arith.addi %0, %c1_i32_32 : i32
    %c0_33 = arith.constant 0 : index
    %46 = arith.index_cast %45 : i32 to index
    %c2_34 = arith.constant 2 : index
    %c0_35 = arith.constant 0 : index
    %47 = vector.load %arg3[%c0_33, %46, %c2_34, %c0_35] : memref<1x18x18x128xbf16, #tpu.memory_space<vmem>>, vector<1x16x16x128xbf16>
    %48 = vector.shape_cast %47 : vector<1x16x16x128xbf16> to vector<16x16x128xbf16>
    %49 = vector.shape_cast %48 : vector<16x16x128xbf16> to vector<256x128xbf16>
    %c5 = arith.constant 5 : index
    %c0_36 = arith.constant 0 : index
    %c0_37 = arith.constant 0 : index
    %50 = vector.load %arg4[%c5, %c0_36, %c0_37] : memref<9x128x128xbf16, #tpu.memory_space<vmem>>, vector<1x128x128xbf16>
    %51 = vector.shape_cast %50 : vector<1x128x128xbf16> to vector<128x128xbf16>
    %cst_38 = arith.constant dense<0.000000e+00> : vector<256x128xf32>
    %52 = tpu.matmul %49, %51, %cst_38 {dimension_numbers = #tpu.dot_dimension_numbers<[1], [0], [0], [1], [0, 0, 1, 1], [], []>} : vector<256x128xbf16>, vector<128x128xbf16>, vector<256x128xf32> -> vector<256x128xf32>
    %53 = arith.addf %44, %52 : vector<256x128xf32>
    %c2_i32 = arith.constant 2 : i32
    %54 = arith.addi %0, %c2_i32 : i32
    %c0_39 = arith.constant 0 : index
    %55 = arith.index_cast %54 : i32 to index
    %c0_40 = arith.constant 0 : index
    %c0_41 = arith.constant 0 : index
    %56 = vector.load %arg3[%c0_39, %55, %c0_40, %c0_41] : memref<1x18x18x128xbf16, #tpu.memory_space<vmem>>, vector<1x16x16x128xbf16>
    %57 = vector.shape_cast %56 : vector<1x16x16x128xbf16> to vector<16x16x128xbf16>
    %58 = vector.shape_cast %57 : vector<16x16x128xbf16> to vector<256x128xbf16>
    %c6 = arith.constant 6 : index
    %c0_42 = arith.constant 0 : index
    %c0_43 = arith.constant 0 : index
    %59 = vector.load %arg4[%c6, %c0_42, %c0_43] : memref<9x128x128xbf16, #tpu.memory_space<vmem>>, vector<1x128x128xbf16>
    %60 = vector.shape_cast %59 : vector<1x128x128xbf16> to vector<128x128xbf16>
    %cst_44 = arith.constant dense<0.000000e+00> : vector<256x128xf32>
    %61 = tpu.matmul %58, %60, %cst_44 {dimension_numbers = #tpu.dot_dimension_numbers<[1], [0], [0], [1], [0, 0, 1, 1], [], []>} : vector<256x128xbf16>, vector<128x128xbf16>, vector<256x128xf32> -> vector<256x128xf32>
    %62 = arith.addf %53, %61 : vector<256x128xf32>
    %c2_i32_45 = arith.constant 2 : i32
    %63 = arith.addi %0, %c2_i32_45 : i32
    %c0_46 = arith.constant 0 : index
    %64 = arith.index_cast %63 : i32 to index
    %c1_47 = arith.constant 1 : index
    %c0_48 = arith.constant 0 : index
    %65 = vector.load %arg3[%c0_46, %64, %c1_47, %c0_48] : memref<1x18x18x128xbf16, #tpu.memory_space<vmem>>, vector<1x16x16x128xbf16>
    %66 = vector.shape_cast %65 : vector<1x16x16x128xbf16> to vector<16x16x128xbf16>
    %67 = vector.shape_cast %66 : vector<16x16x128xbf16> to vector<256x128xbf16>
    %c7 = arith.constant 7 : index
    %c0_49 = arith.constant 0 : index
    %c0_50 = arith.constant 0 : index
    %68 = vector.load %arg4[%c7, %c0_49, %c0_50] : memref<9x128x128xbf16, #tpu.memory_space<vmem>>, vector<1x128x128xbf16>
    %69 = vector.shape_cast %68 : vector<1x128x128xbf16> to vector<128x128xbf16>
    %cst_51 = arith.constant dense<0.000000e+00> : vector<256x128xf32>
    %70 = tpu.matmul %67, %69, %cst_51 {dimension_numbers = #tpu.dot_dimension_numbers<[1], [0], [0], [1], [0, 0, 1, 1], [], []>} : vector<256x128xbf16>, vector<128x128xbf16>, vector<256x128xf32> -> vector<256x128xf32>
    %71 = arith.addf %62, %70 : vector<256x128xf32>
    %c2_i32_52 = arith.constant 2 : i32
    %72 = arith.addi %0, %c2_i32_52 : i32
    %c0_53 = arith.constant 0 : index
    %73 = arith.index_cast %72 : i32 to index
    %c2_54 = arith.constant 2 : index
    %c0_55 = arith.constant 0 : index
    %74 = vector.load %arg3[%c0_53, %73, %c2_54, %c0_55] : memref<1x18x18x128xbf16, #tpu.memory_space<vmem>>, vector<1x16x16x128xbf16>
    %75 = vector.shape_cast %74 : vector<1x16x16x128xbf16> to vector<16x16x128xbf16>
    %76 = vector.shape_cast %75 : vector<16x16x128xbf16> to vector<256x128xbf16>
    %c8 = arith.constant 8 : index
    %c0_56 = arith.constant 0 : index
    %c0_57 = arith.constant 0 : index
    %77 = vector.load %arg4[%c8, %c0_56, %c0_57] : memref<9x128x128xbf16, #tpu.memory_space<vmem>>, vector<1x128x128xbf16>
    %78 = vector.shape_cast %77 : vector<1x128x128xbf16> to vector<128x128xbf16>
    %cst_58 = arith.constant dense<0.000000e+00> : vector<256x128xf32>
    %79 = tpu.matmul %76, %78, %cst_58 {dimension_numbers = #tpu.dot_dimension_numbers<[1], [0], [0], [1], [0, 0, 1, 1], [], []>} : vector<256x128xbf16>, vector<128x128xbf16>, vector<256x128xf32> -> vector<256x128xf32>
    %80 = arith.addf %71, %79 : vector<256x128xf32>
    %c0_59 = arith.constant 0 : index
    %c0_60 = arith.constant 0 : index
    %81 = vector.load %arg5[%c0_59, %c0_60] : memref<1x128xf32, #tpu.memory_space<vmem>>, vector<1x128xf32>
    %82 = vector.broadcast %81 : vector<1x128xf32> to vector<256x128xf32>
    %83 = arith.mulf %80, %82 : vector<256x128xf32>
    %c0_61 = arith.constant 0 : index
    %c0_62 = arith.constant 0 : index
    %84 = vector.load %arg6[%c0_61, %c0_62] : memref<1x128xf32, #tpu.memory_space<vmem>>, vector<1x128xf32>
    %85 = vector.broadcast %84 : vector<1x128xf32> to vector<256x128xf32>
    %86 = arith.addf %83, %85 : vector<256x128xf32>
    %cst_63 = arith.constant 0.000000e+00 : f32
    %87 = vector.broadcast %cst_63 : f32 to vector<256x128xf32>
    %88 = arith.maximumf %86, %87 : vector<256x128xf32>
    %89 = vector.shape_cast %88 : vector<256x128xf32> to vector<1x16x16x128xf32>
    %90 = arith.truncf %89 : vector<1x16x16x128xf32> to vector<1x16x16x128xbf16>
    %c0_64 = arith.constant 0 : index
    %c0_65 = arith.constant 0 : index
    %c0_66 = arith.constant 0 : index
    %c0_67 = arith.constant 0 : index
    %91 = vector.load %arg7[%c0_64, %c0_65, %c0_66, %c0_67] : memref<1x16x16x128xbf16, #tpu.memory_space<vmem>>, vector<1x16x16x128xbf16>
    tpu.vector_store %arg7[%c0_64, %c0_65, %c0_66, %c0_67], %90 {strides = array<i32>} : memref<1x16x16x128xbf16, #tpu.memory_space<vmem>>, vector<1x16x16x128xbf16>,
    return
  }
  func.func @transform_0(%arg0: i32, %arg1: i32, %arg2: i32) -> (i32, i32, i32, i32) {
    %c0_i32 = arith.constant 0 : i32
    %c0_i32_0 = arith.constant 0 : i32
    %c0_i32_1 = arith.constant 0 : i32
    %c0_i32_2 = arith.constant 0 : i32
    return %arg1, %c0_i32, %c0_i32_0, %c0_i32_1 : i32, i32, i32, i32
  }
  func.func @transform_1(%arg0: i32, %arg1: i32, %arg2: i32) -> (i32, i32, i32) {
    %c0_i32 = arith.constant 0 : i32
    %c0_i32_0 = arith.constant 0 : i32
    %c0_i32_1 = arith.constant 0 : i32
    return %c0_i32, %c0_i32_0, %arg0 : i32, i32, i32
  }
  func.func @transform_2(%arg0: i32, %arg1: i32, %arg2: i32) -> (i32, i32) {
    %c0_i32 = arith.constant 0 : i32
    %c0_i32_0 = arith.constant 0 : i32
    return %c0_i32, %arg0 : i32, i32
  }
  func.func @transform_3(%arg0: i32, %arg1: i32, %arg2: i32) -> (i32, i32) {
    %c0_i32 = arith.constant 0 : i32
    %c0_i32_0 = arith.constant 0 : i32
    return %c0_i32, %arg0 : i32, i32
  }
  func.func @transform_4(%arg0: i32, %arg1: i32, %arg2: i32) -> (i32, i32, i32, i32) {
    %c0_i32 = arith.constant 0 : i32
    %c0_i32_0 = arith.constant 0 : i32
    return %arg1, %arg2, %c0_i32, %arg0 : i32, i32, i32, i32
  }
}

</mosaic_0001>

<llo_original>
// kernel: tpu_custom_call.1
$region0: #{tpu_custom_call.1}
  #allocation0 [shape = 'u32[]', space=smem, size = 0x4, offset = 0x4, fixed_abs, tag = 'smem constant byte address 0x4 - core index']
  #allocation1 [shape = 'u32[144,128]{1,0:T(1,128)}', space=vmem, size = 0x12000, scoped, tag = 'internal scratch']
  %s0 = inlined_call_operand.vmem [shape: bf16[2,18,18,128], index: 0, kind: input, shape index: {}]
  %s1 = inlined_call_operand.vmem [shape: bf16[9,128,128], index: 1, kind: input, shape index: {}]
  %s2 = inlined_call_operand.vmem [shape: f32[1,128], index: 2, kind: input, shape index: {}]
  %s3 = inlined_call_operand.vmem [shape: f32[1,128], index: 3, kind: input, shape index: {}]
  %s4 = inlined_call_operand.hbm [shape: bf16[2,16,16,128], index: 4, kind: output, shape index: {}]
  %s5 = sld [smem:[#allocation0]]
  $region49: #{tpu_custom_call.1} parent=0
    _
  %s7 = ssub.s32 1, %s5
  %s8 = scalar_select 0, %s7, %s5
  $region1: #{tpu_custom_call.1} parent=0
    #allocation2 [shape = 'u8[131072]{0}', space=vmem, size = 0x20000, scoped, tag = 'output window, operand 0']
    #allocation3 [shape = 's32[2]{0}', space=sflag, size = 0x8, scoped, tag = 'scoped memory for tpu_custom_call.1']
    %9 = vsyncpa [#allocation3], 0
    %s10 = scalar_lea.sflag [#allocation3], 1
    %11 = vsyncpa %s10, 0
    loop: start=0, step=1, limit=4
    $region2: #{tpu_custom_call.1} parent=1 // loop_pre_header
      _
    $region3: #{tpu_custom_call.1} parent=1 // loop_header
      %s13 = sphi 0, %s17
      %p14 = scmp.ge.s32.totalorder %s13, 4
      %s20 = sphi 0, %s39
      %s21 = sphi 0, %s35
      %s22 = sphi 0, %s31
      %s23 = sphi 0, %s20
      %s24 = sphi 0, %s21
      %s25 = sphi 0, %s22
      %s26 = sphi 0, %s23
      %s27 = sphi 0, %s24
      %s28 = sphi 0, %s25
      %s42 = sphi 0, %s44
      %s45 = sphi 0, %s42
      %s46 = sphi 0, %s45
      %s62 = sphi 0, %s46
      %s68 = sphi 0, %s70
      %s71 = sphi 0, %s68
      %s72 = sphi 0, %s71
      %s88 = sphi 0, %s72
      %s94 = sphi 0, %s96
      %s97 = sphi 0, %s94
      %s98 = sphi 0, %s97
      %s114 = sphi 0, %s98
      %s120 = sphi 0, %s122
      %s123 = sphi 0, %s120
      %s124 = sphi 0, %s123
      %s140 = sphi 0, %s124
      %s150 = sphi 0, %s152
      %s153 = sphi 0, %s150
      %s154 = sphi 0, %s153
      %s170 = sphi 0, %s154
    $region4: #{tpu_custom_call.1} parent=1 // loop_header_branch
      %16 = sbr.rel (%p14) target = $region8
    $region5: #{tpu_custom_call.1} parent=1 // loop_body
      %s18 = ssub.s32 %s13, 1
      %s19 = ssub.s32 %s13, 2
      %s29 = sadd.s32 1, %s22
      %p30 = scmp.ge.s32.totalorder %s29, 1
      %s31 = scalar_select %p30, 0, %s29
      %s32 = sadd.s32 1, %s21
      %s33 = scalar_select %p30, %s32, %s21
      %p34 = scmp.ge.s32.totalorder %s33, 2
      %s35 = scalar_select %p34, 0, %s33
      %s36 = sadd.s32 1, %s20
      %s37 = scalar_select %p34, %s36, %s20
      %p38 = scmp.ge.s32.totalorder %s37, 1
      %s39 = scalar_select %p38, 0, %s37
      %s40 = ssub.s32 %s21, %s35
      %p41 = scmp.eq.s32.totalorder %s40, 0
      %s43 = sadd.s32 %s42, 1
      %s44 = scalar_select %p41, %s42, %s43
      %p47 = pneg %p41
      %p48 = scmp.eq.s32.totalorder %s13, 1
      %p49 = por %p47, %p48
      %p50 = scmp.ne.s32.totalorder %s42, %s45
      %p51 = scmp.eq.s32.totalorder %s13, 0
      %p52 = por %p50, %p51
      %p53 = scmp.ne.s32.totalorder %s42, %s45
      %p54 = scmp.eq.s32.totalorder %s18, 1
      %p55 = por %p53, %p54
      %p56 = scmp.ne.s32.totalorder %s45, %s46
      %p57 = scmp.eq.s32.totalorder %s18, 0
      %p58 = por %p56, %p57
      %p59 = scmp.ne.s32.totalorder %s45, %s46
      %p60 = scmp.eq.s32.totalorder %s19, 1
      %p61 = por %p59, %p60
      %p63 = scmp.ne.s32.totalorder %s46, %s62
      %p64 = scmp.eq.s32.totalorder %s19, 0
      %p65 = por %p63, %p64
      %s66 = ssub.s32 %s20, %s39
      %p67 = scmp.eq.s32.totalorder %s66, 0
      %s69 = sadd.s32 %s68, 1
      %s70 = scalar_select %p67, %s68, %s69
      %p73 = pneg %p67
      %p74 = scmp.eq.s32.totalorder %s13, 1
      %p75 = por %p73, %p74
      %p76 = scmp.ne.s32.totalorder %s68, %s71
      %p77 = scmp.eq.s32.totalorder %s13, 0
      %p78 = por %p76, %p77
      %p79 = scmp.ne.s32.totalorder %s68, %s71
      %p80 = scmp.eq.s32.totalorder %s18, 1
      %p81 = por %p79, %p80
      %p82 = scmp.ne.s32.totalorder %s71, %s72
      %p83 = scmp.eq.s32.totalorder %s18, 0
      %p84 = por %p82, %p83
      %p85 = scmp.ne.s32.totalorder %s71, %s72
      %p86 = scmp.eq.s32.totalorder %s19, 1
      %p87 = por %p85, %p86
      %p89 = scmp.ne.s32.totalorder %s72, %s88
      %p90 = scmp.eq.s32.totalorder %s19, 0
      %p91 = por %p89, %p90
      %s92 = ssub.s32 %s20, %s39
      %p93 = scmp.eq.s32.totalorder %s92, 0
      %s95 = sadd.s32 %s94, 1
      %s96 = scalar_select %p93, %s94, %s95
      %p99 = pneg %p93
      %p100 = scmp.eq.s32.totalorder %s13, 1
      %p101 = por %p99, %p100
      %p102 = scmp.ne.s32.totalorder %s94, %s97
      %p103 = scmp.eq.s32.totalorder %s13, 0
      %p104 = por %p102, %p103
      %p105 = scmp.ne.s32.totalorder %s94, %s97
      %p106 = scmp.eq.s32.totalorder %s18, 1
      %p107 = por %p105, %p106
      %p108 = scmp.ne.s32.totalorder %s97, %s98
      %p109 = scmp.eq.s32.totalorder %s18, 0
      %p110 = por %p108, %p109
      %p111 = scmp.ne.s32.totalorder %s97, %s98
      %p112 = scmp.eq.s32.totalorder %s19, 1
      %p113 = por %p111, %p112
      %p115 = scmp.ne.s32.totalorder %s98, %s114
      %p116 = scmp.eq.s32.totalorder %s19, 0
      %p117 = por %p115, %p116
      %s118 = ssub.s32 %s20, %s39
      %p119 = scmp.eq.s32.totalorder %s118, 0
      %s121 = sadd.s32 %s120, 1
      %s122 = scalar_select %p119, %s120, %s121
      %p125 = pneg %p119
      %p126 = scmp.eq.s32.totalorder %s13, 1
      %p127 = por %p125, %p126
      %p128 = scmp.ne.s32.totalorder %s120, %s123
      %p129 = scmp.eq.s32.totalorder %s13, 0
      %p130 = por %p128, %p129
      %p131 = scmp.ne.s32.totalorder %s120, %s123
      %p132 = scmp.eq.s32.totalorder %s18, 1
      %p133 = por %p131, %p132
      %p134 = scmp.ne.s32.totalorder %s123, %s124
      %p135 = scmp.eq.s32.totalorder %s18, 0
      %p136 = por %p134, %p135
      %p137 = scmp.ne.s32.totalorder %s123, %s124
      %p138 = scmp.eq.s32.totalorder %s19, 1
      %p139 = por %p137, %p138
      %p141 = scmp.ne.s32.totalorder %s124, %s140
      %p142 = scmp.eq.s32.totalorder %s19, 0
      %p143 = por %p141, %p142
      %s144 = ssub.s32 %s21, %s35
      %s145 = ssub.s32 %s22, %s31
      %s146 = sor.u32 %s144, %s145
      %s147 = ssub.s32 %s20, %s39
      %s148 = sor.u32 %s146, %s147
      %p149 = scmp.eq.s32.totalorder %s148, 0
      %s151 = sadd.s32 %s150, 1
      %s152 = scalar_select %p149, %s150, %s151
      %p155 = pneg %p149
      %p156 = scmp.eq.s32.totalorder %s13, 1
      %p157 = por %p155, %p156
      %p158 = scmp.ne.s32.totalorder %s150, %s153
      %p159 = scmp.eq.s32.totalorder %s13, 0
      %p160 = por %p158, %p159
      %p161 = scmp.ne.s32.totalorder %s150, %s153
      %p162 = scmp.eq.s32.totalorder %s18, 1
      %p163 = por %p161, %p162
      %p164 = scmp.ne.s32.totalorder %s153, %s154
      %p165 = scmp.eq.s32.totalorder %s18, 0
      %p166 = por %p164, %p165
      %p167 = scmp.ne.s32.totalorder %s153, %s154
      %p168 = scmp.eq.s32.totalorder %s19, 1
      %p169 = por %p167, %p168
      %p171 = scmp.ne.s32.totalorder %s154, %s170
      %p172 = scmp.eq.s32.totalorder %s19, 0
      %p173 = por %p171, %p172
      %p174 = scmp.le.s32.totalorder 1, %s13
      %p175 = scmp.lt.s32.totalorder %s13, 3
      %p176 = pnand %p174, %p175
      %p177 = pneg %p176
      // Predicated region
      $region9: #{tpu_custom_call.1} parent=5 // pred_check
        _
      $region10: #{tpu_custom_call.1} parent=5 // pred_check_branch
        %179 = sbr.rel (%p176) target = $region12
      $region11: #{tpu_custom_call.1} parent=5 // pred_region
        %s180 = ssub.s32 %s13, 1
        // Predicated region
        $region13: #{tpu_custom_call.1} parent=11 // pred_check
          %p181 = pneg %p84
        $region14: #{tpu_custom_call.1} parent=11 // pred_check_branch
          %183 = sbr.rel (%p181) target = $region16
        $region15: #{tpu_custom_call.1} parent=11 // pred_region
          %p184 = scmp.lt.s32.totalorder %s23, 0
          %s185 = scalar_select %p184, %s23, 0
          %s186 = smul.addr %s185, 4
          %s187 = scalar_lea.vmem %s1, %s186
        $region16: #{tpu_custom_call.1} parent=11 // pred_fallthru
          _
        // Predicated region
        $region17: #{tpu_custom_call.1} parent=11 // pred_check
          %p188 = pneg %p110
        $region18: #{tpu_custom_call.1} parent=11 // pred_check_branch
          %190 = sbr.rel (%p188) target = $region20
        $region19: #{tpu_custom_call.1} parent=11 // pred_region
          %p191 = scmp.lt.s32.totalorder %s23, 0
          %s192 = scalar_select %p191, %s23, 0
          %s193 = scalar_lea.vmem %s2, %s192
        $region20: #{tpu_custom_call.1} parent=11 // pred_fallthru
          _
        // Predicated region
        $region21: #{tpu_custom_call.1} parent=11 // pred_check
          %p194 = pneg %p136
        $region22: #{tpu_custom_call.1} parent=11 // pred_check_branch
          %196 = sbr.rel (%p194) target = $region24
        $region23: #{tpu_custom_call.1} parent=11 // pred_region
          %p197 = scmp.lt.s32.totalorder %s23, 0
          %s198 = scalar_select %p197, %s23, 0
          %s199 = scalar_lea.vmem %s3, %s198
        $region24: #{tpu_custom_call.1} parent=11 // pred_fallthru
          _
      $region12: #{tpu_custom_call.1} parent=5 // pred_fallthru
        _
      %p200 = scmp.lt.s32.totalorder %s13, 2
      // Predicated region
      $region25: #{tpu_custom_call.1} parent=5 // pred_check
        %p201 = pneg %p200
      $region26: #{tpu_custom_call.1} parent=5 // pred_check_branch
        %203 = sbr.rel (%p201) target = $region28
      $region27: #{tpu_custom_call.1} parent=5 // pred_region
        // Predicated region
        $region29: #{tpu_custom_call.1} parent=27 // pred_check
          %p204 = pneg %p52
        $region30: #{tpu_custom_call.1} parent=27 // pred_check_branch
          %206 = sbr.rel (%p204) target = $region32
        $region31: #{tpu_custom_call.1} parent=27 // pred_region
          %p207 = scmp.lt.s32.totalorder %s21, 1
          %s208 = scalar_select %p207, %s21, 1
          %s209 = smul.addr %s208, 54
          %s210 = smul.addr %s209, 4
          %s211 = scalar_lea.vmem %s0, %s210
        $region32: #{tpu_custom_call.1} parent=27 // pred_fallthru
          _
      $region28: #{tpu_custom_call.1} parent=5 // pred_fallthru
        _
      %p212 = scmp.le.s32.totalorder 1, %s13
      %p213 = scmp.lt.s32.totalorder %s13, 3
      %p214 = pnand %p212, %p213
      %p215 = pneg %p214
      // Predicated region
      $region33: #{tpu_custom_call.1} parent=5 // pred_check
        _
      $region34: #{tpu_custom_call.1} parent=5 // pred_check_branch
        %217 = sbr.rel (%p214) target = $region36
      $region35: #{tpu_custom_call.1} parent=5 // pred_region
        %s218 = ssub.s32 %s13, 1
        %p219 = scmp.lt.s32.totalorder %s24, 1
        %s220 = scalar_select %p219, %s24, 1
        %s221 = smul.addr %s220, 54
        %s222 = smul.addr %s221, 4
        %s223 = scalar_lea.vmem %s0, %s222
        %p224 = pneg %p58
        %p225 = pneg %p55
        %p226 = scmp.lt.s32.totalorder %s23, 0
        %s227 = scalar_select %p226, %s23, 0
        %s228 = smul.addr %s227, 4
        %s229 = scalar_lea.vmem %s1, %s228
        %p230 = pneg %p84
        %p231 = pneg %p81
        %p232 = scmp.lt.s32.totalorder %s23, 0
        %s233 = scalar_select %p232, %s23, 0
        %s234 = scalar_lea.vmem %s2, %s233
        %p235 = pneg %p110
        %p236 = pneg %p107
        %p237 = scmp.lt.s32.totalorder %s23, 0
        %s238 = scalar_select %p237, %s23, 0
        %s239 = scalar_lea.vmem %s3, %s238
        %p240 = pneg %p136
        %p241 = pneg %p133
        %p242 = pneg %p166
        %p243 = pneg %p163
        %s244 = sand.u32 %s153, 1
        %s245 = scalar_lea.sflag [#allocation3], %s244
        %s246 = sand.u32 %s153, 1
        %s247 = smul.addr %s246, 128
        %s248 = scalar_lea.vmem [#allocation2], %s247
        %p249 = scmp.lt.s32.totalorder %s24, 1
        %s250 = scalar_select %p249, %s24, 1
        %s251 = smul.addr %s250, 54
        %s252 = smul.addr %s251, 4
        %s253 = scalar_lea.vmem %s0, %s252
        %p254 = scmp.lt.s32.totalorder %s23, 0
        %s255 = scalar_select %p254, %s23, 0
        %s256 = smul.addr %s255, 4
        %s257 = scalar_lea.vmem %s1, %s256
        %p258 = scmp.lt.s32.totalorder %s23, 0
        %s259 = scalar_select %p258, %s23, 0
        %s260 = scalar_lea.vmem %s2, %s259
        %p261 = scmp.lt.s32.totalorder %s23, 0
        %s262 = scalar_select %p261, %s23, 0
        %s263 = scalar_lea.vmem %s3, %s262
        %s264 = smul.u32 16, %s25
        %s266 = smul.u32 %s25, 16
        %s267 = smul.u32 %s266, 3
        %s268 = smul.addr %s267, 4
        %s269 = scalar_lea.vmem %s253, %s268
        %v270 = vld [vmem:[%s269] sm:$0xf]
        %v271 = vld [vmem:[%s269 + $0x4] sm:$0xf]
        %v272 = vld [vmem:[%s269 + $0xc] sm:$0xf]
        %v273 = vld [vmem:[%s269 + $0x10] sm:$0xf]
        %v274 = vld [vmem:[%s269 + $0x18] sm:$0xf]
        %v275 = vld [vmem:[%s269 + $0x1c] sm:$0xf]
        %v276 = vld [vmem:[%s269 + $0x24] sm:$0xf]
        %v277 = vld [vmem:[%s269 + $0x28] sm:$0xf]
        %v278 = vld [vmem:[%s269 + $0x30] sm:$0xf]
        %v279 = vld [vmem:[%s269 + $0x34] sm:$0xf]
        %v280 = vld [vmem:[%s269 + $0x3c] sm:$0xf]
        %v281 = vld [vmem:[%s269 + $0x40] sm:$0xf]
        %v282 = vld [vmem:[%s269 + $0x48] sm:$0xf]
        %v283 = vld [vmem:[%s269 + $0x4c] sm:$0xf]
        %v284 = vld [vmem:[%s269 + $0x54] sm:$0xf]
        %v285 = vld [vmem:[%s269 + $0x58] sm:$0xf]
        %v286 = vld [vmem:[%s269 + $0x60] sm:$0xf]
        %v287 = vld [vmem:[%s269 + $0x64] sm:$0xf]
        %v288 = vld [vmem:[%s269 + $0x6c] sm:$0xf]
        %v289 = vld [vmem:[%s269 + $0x70] sm:$0xf]
        %v290 = vld [vmem:[%s269 + $0x78] sm:$0xf]
        %v291 = vld [vmem:[%s269 + $0x7c] sm:$0xf]
        %v292 = vld [vmem:[%s269 + $0x84] sm:$0xf]
        %v293 = vld [vmem:[%s269 + $0x88] sm:$0xf]
        %v294 = vld [vmem:[%s269 + $0x90] sm:$0xf]
        %v295 = vld [vmem:[%s269 + $0x94] sm:$0xf]
        %v296 = vld [vmem:[%s269 + $0x9c] sm:$0xf]
        %v297 = vld [vmem:[%s269 + $0xa0] sm:$0xf]
        %v298 = vld [vmem:[%s269 + $0xa8] sm:$0xf]
        %v299 = vld [vmem:[%s269 + $0xac] sm:$0xf]
        %v300 = vld [vmem:[%s269 + $0xb4] sm:$0xf]
        %v301 = vld [vmem:[%s269 + $0xb8] sm:$0xf]
        %v302 = vld [vmem:[%s257] sm:$0xf]
        %v303 = vld [vmem:[%s257 + $0x4] sm:$0xf]
        %v304 = vld [vmem:[%s257 + $0x8] sm:$0xf]
        %v305 = vld [vmem:[%s257 + $0xc] sm:$0xf]
        %v306 = vld [vmem:[%s257 + $0x10] sm:$0xf]
        %v307 = vld [vmem:[%s257 + $0x14] sm:$0xf]
        %v308 = vld [vmem:[%s257 + $0x18] sm:$0xf]
        %v309 = vld [vmem:[%s257 + $0x1c] sm:$0xf]
        %v310 = vld [vmem:[%s257 + $0x20] sm:$0xf]
        %v311 = vld [vmem:[%s257 + $0x24] sm:$0xf]
        %v312 = vld [vmem:[%s257 + $0x28] sm:$0xf]
        %v313 = vld [vmem:[%s257 + $0x2c] sm:$0xf]
        %v314 = vld [vmem:[%s257 + $0x30] sm:$0xf]
        %v315 = vld [vmem:[%s257 + $0x34] sm:$0xf]
        %v316 = vld [vmem:[%s257 + $0x38] sm:$0xf]
        %v317 = vld [vmem:[%s257 + $0x3c] sm:$0xf]
        %v318 = vld [vmem:[%s269 + $0x8] sm:$0x1]
        %v319 = vld [vmem:[%s269 + $0x14] sm:$0x1]
        %v320 = vld [vmem:[%s269 + $0x20] sm:$0x1]
        %v321 = vld [vmem:[%s269 + $0x2c] sm:$0x1]
        %v322 = vld [vmem:[%s269 + $0x38] sm:$0x1]
        %v323 = vld [vmem:[%s269 + $0x44] sm:$0x1]
        %v324 = vld [vmem:[%s269 + $0x50] sm:$0x1]
        %v325 = vld [vmem:[%s269 + $0x5c] sm:$0x1]
        %v326 = vld [vmem:[%s269 + $0x68] sm:$0x1]
        %v327 = vld [vmem:[%s269 + $0x74] sm:$0x1]
        %v328 = vld [vmem:[%s269 + $0x80] sm:$0x1]
        %v329 = vld [vmem:[%s269 + $0x8c] sm:$0x1]
        %v330 = vld [vmem:[%s269 + $0x98] sm:$0x1]
        %v331 = vld [vmem:[%s269 + $0xa4] sm:$0x1]
        %v332 = vld [vmem:[%s269 + $0xb0] sm:$0x1]
        %v333 = vld [vmem:[%s269 + $0xbc] sm:$0x1]
        %vm334 = vsmask.f32 3328
        %vm335 = vsmask.f32 7440
        %vm336 = vmor %vm334, %vm335
        %v338 = vshrl.u32 %v270, 16
        %v340 = vrot.slane %v338, 4
        %v341 = vshll.u32 %v270, 16
        %v343 = vrot.slane %v341, 5
        %v344 = vor.u32 %v340, %v343
        %v345 = vrot.slane %v344, 4
        %v347 = vshll.u32 %v271, 16
        %v349 = vrot.slane %v347, 5
        %v350 = vsel %vm336, %v345, %v349
        %v351 = vshrl.u32 %v271, 16
        %v353 = vrot.slane %v351, 4
        %v354 = vor.u32 %v353, %v349
        %v355 = vrot.slane %v354, 4
        %v357 = vshll.u32 %v318, 16
        %v359 = vrot.slane %v357, 5
        %v360 = vsel %vm336, %v355, %v359
        %v362 = vshrl.u32 %v272, 16
        %v364 = vrot.slane %v362, 4
        %v365 = vshll.u32 %v272, 16
        %v367 = vrot.slane %v365, 5
        %v368 = vor.u32 %v364, %v367
        %v369 = vrot.slane %v368, 4
        %v371 = vshll.u32 %v273, 16
        %v373 = vrot.slane %v371, 5
        %v374 = vsel %vm336, %v369, %v373
        %v375 = vshrl.u32 %v273, 16
        %v377 = vrot.slane %v375, 4
        %v378 = vor.u32 %v377, %v373
        %v379 = vrot.slane %v378, 4
        %v381 = vshll.u32 %v319, 16
        %v383 = vrot.slane %v381, 5
        %v384 = vsel %vm336, %v379, %v383
        %v386 = vshrl.u32 %v274, 16
        %v388 = vrot.slane %v386, 4
        %v389 = vshll.u32 %v274, 16
        %v391 = vrot.slane %v389, 5
        %v392 = vor.u32 %v388, %v391
        %v393 = vrot.slane %v392, 4
        %v395 = vshll.u32 %v275, 16
        %v397 = vrot.slane %v395, 5
        %v398 = vsel %vm336, %v393, %v397
        %v399 = vshrl.u32 %v275, 16
        %v401 = vrot.slane %v399, 4
        %v402 = vor.u32 %v401, %v397
        %v403 = vrot.slane %v402, 4
        %v405 = vshll.u32 %v320, 16
        %v407 = vrot.slane %v405, 5
        %v408 = vsel %vm336, %v403, %v407
        %v410 = vshrl.u32 %v276, 16
        %v412 = vrot.slane %v410, 4
        %v413 = vshll.u32 %v276, 16
        %v415 = vrot.slane %v413, 5
        %v416 = vor.u32 %v412, %v415
        %v417 = vrot.slane %v416, 4
        %v419 = vshll.u32 %v277, 16
        %v421 = vrot.slane %v419, 5
        %v422 = vsel %vm336, %v417, %v421
        %v423 = vshrl.u32 %v277, 16
        %v425 = vrot.slane %v423, 4
        %v426 = vor.u32 %v425, %v421
        %v427 = vrot.slane %v426, 4
        %v429 = vshll.u32 %v321, 16
        %v431 = vrot.slane %v429, 5
        %v432 = vsel %vm336, %v427, %v431
        %v434 = vshrl.u32 %v278, 16
        %v436 = vrot.slane %v434, 4
        %v437 = vshll.u32 %v278, 16
        %v439 = vrot.slane %v437, 5
        %v440 = vor.u32 %v436, %v439
        %v441 = vrot.slane %v440, 4
        %v443 = vshll.u32 %v279, 16
        %v445 = vrot.slane %v443, 5
        %v446 = vsel %vm336, %v441, %v445
        %v447 = vshrl.u32 %v279, 16
        %v449 = vrot.slane %v447, 4
        %v450 = vor.u32 %v449, %v445
        %v451 = vrot.slane %v450, 4
        %v453 = vshll.u32 %v322, 16
        %v455 = vrot.slane %v453, 5
        %v456 = vsel %vm336, %v451, %v455
        %v458 = vshrl.u32 %v280, 16
        %v460 = vrot.slane %v458, 4
        %v461 = vshll.u32 %v280, 16
        %v463 = vrot.slane %v461, 5
        %v464 = vor.u32 %v460, %v463
        %v465 = vrot.slane %v464, 4
        %v467 = vshll.u32 %v281, 16
        %v469 = vrot.slane %v467, 5
        %v470 = vsel %vm336, %v465, %v469
        %v471 = vshrl.u32 %v281, 16
        %v473 = vrot.slane %v471, 4
        %v474 = vor.u32 %v473, %v469
        %v475 = vrot.slane %v474, 4
        %v477 = vshll.u32 %v323, 16
        %v479 = vrot.slane %v477, 5
        %v480 = vsel %vm336, %v475, %v479
        %v482 = vshrl.u32 %v282, 16
        %v484 = vrot.slane %v482, 4
        %v485 = vshll.u32 %v282, 16
        %v487 = vrot.slane %v485, 5
        %v488 = vor.u32 %v484, %v487
        %v489 = vrot.slane %v488, 4
        %v491 = vshll.u32 %v283, 16
        %v493 = vrot.slane %v491, 5
        %v494 = vsel %vm336, %v489, %v493
        %v495 = vshrl.u32 %v283, 16
        %v497 = vrot.slane %v495, 4
        %v498 = vor.u32 %v497, %v493
        %v499 = vrot.slane %v498, 4
        %v501 = vshll.u32 %v324, 16
        %v503 = vrot.slane %v501, 5
        %v504 = vsel %vm336, %v499, %v503
        %v506 = vshrl.u32 %v284, 16
        %v508 = vrot.slane %v506, 4
        %v509 = vshll.u32 %v284, 16
        %v511 = vrot.slane %v509, 5
        %v512 = vor.u32 %v508, %v511
        %v513 = vrot.slane %v512, 4
        %v515 = vshll.u32 %v285, 16
        %v517 = vrot.slane %v515, 5
        %v518 = vsel %vm336, %v513, %v517
        %v519 = vshrl.u32 %v285, 16
        %v521 = vrot.slane %v519, 4
        %v522 = vor.u32 %v521, %v517
        %v523 = vrot.slane %v522, 4
        %v525 = vshll.u32 %v325, 16
        %v527 = vrot.slane %v525, 5
        %v528 = vsel %vm336, %v523, %v527
        %v530 = vshrl.u32 %v286, 16
        %v532 = vrot.slane %v530, 4
        %v533 = vshll.u32 %v286, 16
        %v535 = vrot.slane %v533, 5
        %v536 = vor.u32 %v532, %v535
        %v537 = vrot.slane %v536, 4
        %v539 = vshll.u32 %v287, 16
        %v541 = vrot.slane %v539, 5
        %v542 = vsel %vm336, %v537, %v541
        %v543 = vshrl.u32 %v287, 16
        %v545 = vrot.slane %v543, 4
        %v546 = vor.u32 %v545, %v541
        %v547 = vrot.slane %v546, 4
        %v549 = vshll.u32 %v326, 16
        %v551 = vrot.slane %v549, 5
        %v552 = vsel %vm336, %v547, %v551
        %v554 = vshrl.u32 %v288, 16
        %v556 = vrot.slane %v554, 4
        %v557 = vshll.u32 %v288, 16
        %v559 = vrot.slane %v557, 5
        %v560 = vor.u32 %v556, %v559
        %v561 = vrot.slane %v560, 4
        %v563 = vshll.u32 %v289, 16
        %v565 = vrot.slane %v563, 5
        %v566 = vsel %vm336, %v561, %v565
        %v567 = vshrl.u32 %v289, 16
        %v569 = vrot.slane %v567, 4
        %v570 = vor.u32 %v569, %v565
        %v571 = vrot.slane %v570, 4
        %v573 = vshll.u32 %v327, 16
        %v575 = vrot.slane %v573, 5
        %v576 = vsel %vm336, %v571, %v575
        %v578 = vshrl.u32 %v290, 16
        %v580 = vrot.slane %v578, 4
        %v581 = vshll.u32 %v290, 16
        %v583 = vrot.slane %v581, 5
        %v584 = vor.u32 %v580, %v583
        %v585 = vrot.slane %v584, 4
        %v587 = vshll.u32 %v291, 16
        %v589 = vrot.slane %v587, 5
        %v590 = vsel %vm336, %v585, %v589
        %v591 = vshrl.u32 %v291, 16
        %v593 = vrot.slane %v591, 4
        %v594 = vor.u32 %v593, %v589
        %v595 = vrot.slane %v594, 4
        %v597 = vshll.u32 %v328, 16
        %v599 = vrot.slane %v597, 5
        %v600 = vsel %vm336, %v595, %v599
        %v602 = vshrl.u32 %v292, 16
        %v604 = vrot.slane %v602, 4
        %v605 = vshll.u32 %v292, 16
        %v607 = vrot.slane %v605, 5
        %v608 = vor.u32 %v604, %v607
        %v609 = vrot.slane %v608, 4
        %v611 = vshll.u32 %v293, 16
        %v613 = vrot.slane %v611, 5
        %v614 = vsel %vm336, %v609, %v613
        %v615 = vshrl.u32 %v293, 16
        %v617 = vrot.slane %v615, 4
        %v618 = vor.u32 %v617, %v613
        %v619 = vrot.slane %v618, 4
        %v621 = vshll.u32 %v329, 16
        %v623 = vrot.slane %v621, 5
        %v624 = vsel %vm336, %v619, %v623
        %v626 = vshrl.u32 %v294, 16
        %v628 = vrot.slane %v626, 4
        %v629 = vshll.u32 %v294, 16
        %v631 = vrot.slane %v629, 5
        %v632 = vor.u32 %v628, %v631
        %v633 = vrot.slane %v632, 4
        %v635 = vshll.u32 %v295, 16
        %v637 = vrot.slane %v635, 5
        %v638 = vsel %vm336, %v633, %v637
        %v639 = vshrl.u32 %v295, 16
        %v641 = vrot.slane %v639, 4
        %v642 = vor.u32 %v641, %v637
        %v643 = vrot.slane %v642, 4
        %v645 = vshll.u32 %v330, 16
        %v647 = vrot.slane %v645, 5
        %v648 = vsel %vm336, %v643, %v647
        %v650 = vshrl.u32 %v296, 16
        %v652 = vrot.slane %v650, 4
        %v653 = vshll.u32 %v296, 16
        %v655 = vrot.slane %v653, 5
        %v656 = vor.u32 %v652, %v655
        %v657 = vrot.slane %v656, 4
        %v659 = vshll.u32 %v297, 16
        %v661 = vrot.slane %v659, 5
        %v662 = vsel %vm336, %v657, %v661
        %v663 = vshrl.u32 %v297, 16
        %v665 = vrot.slane %v663, 4
        %v666 = vor.u32 %v665, %v661
        %v667 = vrot.slane %v666, 4
        %v669 = vshll.u32 %v331, 16
        %v671 = vrot.slane %v669, 5
        %v672 = vsel %vm336, %v667, %v671
        %v674 = vshrl.u32 %v298, 16
        %v676 = vrot.slane %v674, 4
        %v677 = vshll.u32 %v298, 16
        %v679 = vrot.slane %v677, 5
        %v680 = vor.u32 %v676, %v679
        %v681 = vrot.slane %v680, 4
        %v683 = vshll.u32 %v299, 16
        %v685 = vrot.slane %v683, 5
        %v686 = vsel %vm336, %v681, %v685
        %v687 = vshrl.u32 %v299, 16
        %v689 = vrot.slane %v687, 4
        %v690 = vor.u32 %v689, %v685
        %v691 = vrot.slane %v690, 4
        %v693 = vshll.u32 %v332, 16
        %v695 = vrot.slane %v693, 5
        %v696 = vsel %vm336, %v691, %v695
        %v698 = vshrl.u32 %v300, 16
        %v700 = vrot.slane %v698, 4
        %v701 = vshll.u32 %v300, 16
        %v703 = vrot.slane %v701, 5
        %v704 = vor.u32 %v700, %v703
        %v705 = vrot.slane %v704, 4
        %v707 = vshll.u32 %v301, 16
        %v709 = vrot.slane %v707, 5
        %v710 = vsel %vm336, %v705, %v709
        %v711 = vshrl.u32 %v301, 16
        %v713 = vrot.slane %v711, 4
        %v714 = vor.u32 %v713, %v709
        %v715 = vrot.slane %v714, 4
        %v717 = vshll.u32 %v333, 16
        %v719 = vrot.slane %v717, 5
        %v720 = vsel %vm336, %v715, %v719
        %s721 = scalar_lea.vmem %s257, 64
        %v722 = vld [vmem:[%s721] sm:$0xf]
        %v723 = vld [vmem:[%s721 + $0x4] sm:$0xf]
        %v724 = vld [vmem:[%s721 + $0x8] sm:$0xf]
        %v725 = vld [vmem:[%s721 + $0xc] sm:$0xf]
        %v726 = vld [vmem:[%s721 + $0x10] sm:$0xf]
        %v727 = vld [vmem:[%s721 + $0x14] sm:$0xf]
        %v728 = vld [vmem:[%s721 + $0x18] sm:$0xf]
        %v729 = vld [vmem:[%s721 + $0x1c] sm:$0xf]
        %v730 = vld [vmem:[%s721 + $0x20] sm:$0xf]
        %v731 = vld [vmem:[%s721 + $0x24] sm:$0xf]
        %v732 = vld [vmem:[%s721 + $0x28] sm:$0xf]
        %v733 = vld [vmem:[%s721 + $0x2c] sm:$0xf]
        %v734 = vld [vmem:[%s721 + $0x30] sm:$0xf]
        %v735 = vld [vmem:[%s721 + $0x34] sm:$0xf]
        %v736 = vld [vmem:[%s721 + $0x38] sm:$0xf]
        %v737 = vld [vmem:[%s721 + $0x3c] sm:$0xf]
        %v738 = vunpack.c.l.b16 %v350
        %v739 = vunpack.c.l.b16 %v360
        %v740 = vunpack.c.l.b16 %v374
        %v741 = vunpack.c.l.b16 %v384
        %v742 = vunpack.c.l.b16 %v398
        %v743 = vunpack.c.l.b16 %v408
        %v744 = vunpack.c.l.b16 %v422
        %v745 = vunpack.c.l.b16 %v432
        %v746 = vunpack.c.l.b16 %v446
        %v747 = vunpack.c.l.b16 %v456
        %v748 = vunpack.c.l.b16 %v470
        %v749 = vunpack.c.l.b16 %v480
        %v750 = vunpack.c.l.b16 %v494
        %v751 = vunpack.c.l.b16 %v504
        %v752 = vunpack.c.l.b16 %v518
        %v753 = vunpack.c.l.b16 %v528
        %v754 = vunpack.c.l.b16 %v542
        %v755 = vunpack.c.l.b16 %v552
        %v756 = vunpack.c.l.b16 %v566
        %v757 = vunpack.c.l.b16 %v576
        %v758 = vunpack.c.l.b16 %v590
        %v759 = vunpack.c.l.b16 %v600
        %v760 = vunpack.c.l.b16 %v614
        %v761 = vunpack.c.l.b16 %v624
        %v762 = vunpack.c.l.b16 %v638
        %v763 = vunpack.c.l.b16 %v648
        %v764 = vunpack.c.l.b16 %v662
        %v765 = vunpack.c.l.b16 %v672
        %v766 = vunpack.c.l.b16 %v686
        %v767 = vunpack.c.l.b16 %v696
        %v768 = vunpack.c.l.b16 %v710
        %v769 = vunpack.c.l.b16 %v720
        %v770 = vpack.c.b16 %v739, %v738
        %v771 = vpack.c.b16 %v741, %v740
        %v772 = vpack.c.b16 %v743, %v742
        %v773 = vpack.c.b16 %v745, %v744
        %v774 = vpack.c.b16 %v747, %v746
        %v775 = vpack.c.b16 %v749, %v748
        %v776 = vpack.c.b16 %v751, %v750
        %v777 = vpack.c.b16 %v753, %v752
        %v778 = vpack.c.b16 %v755, %v754
        %v779 = vpack.c.b16 %v757, %v756
        %v780 = vpack.c.b16 %v759, %v758
        %v781 = vpack.c.b16 %v761, %v760
        %v782 = vpack.c.b16 %v763, %v762
        %v783 = vpack.c.b16 %v765, %v764
        %v784 = vpack.c.b16 %v767, %v766
        %v785 = vpack.c.b16 %v769, %v768
        %v818 = vunpack.c.l.b16 %v722
        %v819 = vunpack.c.l.b16 %v723
        %v820 = vunpack.c.l.b16 %v724
        %v821 = vunpack.c.l.b16 %v725
        %v822 = vunpack.c.l.b16 %v726
        %v823 = vunpack.c.l.b16 %v727
        %v824 = vunpack.c.l.b16 %v728
        %v825 = vunpack.c.l.b16 %v729
        %v826 = vunpack.c.l.b16 %v730
        %v827 = vunpack.c.l.b16 %v731
        %v828 = vunpack.c.l.b16 %v732
        %v829 = vunpack.c.l.b16 %v733
        %v830 = vunpack.c.l.b16 %v734
        %v831 = vunpack.c.l.b16 %v735
        %v832 = vunpack.c.l.b16 %v736
        %v833 = vunpack.c.l.b16 %v737
        %v834 = vpack.c.b16 %v819, %v818
        %v835 = vpack.c.b16 %v821, %v820
        %v836 = vpack.c.b16 %v823, %v822
        %v837 = vpack.c.b16 %v825, %v824
        %v838 = vpack.c.b16 %v827, %v826
        %v839 = vpack.c.b16 %v829, %v828
        %v840 = vpack.c.b16 %v831, %v830
        %v841 = vpack.c.b16 %v833, %v832
        %850 = vmatprep.subr.bf16.mxu0 0
        %851 = vmatpush1.bf16.msra.mxu0 %v834
        %852 = vmatprep.subr.bf16.mxu0 0
        %853 = vmatpush1.bf16.msra.mxu0 %v835
        %854 = vmatprep.subr.bf16.mxu0 0
        %855 = vmatpush1.bf16.msra.mxu0 %v836
        %856 = vmatprep.subr.bf16.mxu0 0
        %857 = vmatpush1.bf16.msra.mxu0 %v837
        %858 = vmatprep.subr.bf16.mxu0 0
        %859 = vmatpush1.bf16.msra.mxu0 %v838
        %860 = vmatprep.subr.bf16.mxu0 0
        %861 = vmatpush1.bf16.msra.mxu0 %v839
        %862 = vmatprep.subr.bf16.mxu0 0
        %863 = vmatpush1.bf16.msra.mxu0 %v840
        %864 = vmatprep.subr.bf16.mxu0 0
        %865 = vmatpush1.bf16.msra.mxu0 %v841
        %866 = vmatprep.subr.bf16.mxu0 0
        %867 = vmatpush1.bf16.msra.mxu0 0
        %868 = vmatprep.subr.bf16.mxu0 0
        %869 = vmatpush1.bf16.msra.mxu0 0
        %870 = vmatprep.subr.bf16.mxu0 0
        %871 = vmatpush1.bf16.msra.mxu0 0
        %872 = vmatprep.subr.bf16.mxu0 0
        %873 = vmatpush1.bf16.msra.mxu0 0
        %874 = vmatprep.subr.bf16.mxu0 0
        %875 = vmatpush1.bf16.msra.mxu0 0
        %876 = vmatprep.subr.bf16.mxu0 0
        %877 = vmatpush1.bf16.msra.mxu0 0
        %878 = vmatprep.subr.bf16.mxu0 0
        %879 = vmatpush1.bf16.msra.mxu0 0
        %880 = vmatprep.subr.bf16.mxu0 0
        %881 = vmatpush1.bf16.msra.mxu0 0
        %882 = vmatprep.mubr.bf16.mxu0 0
        %883 = vmatmul.mubr.bf16.gmra.mrb[0].mxu0 %v770
        %v884 = vpop.f32.mrb[0].mxu0
        %v885 = vadd.f32 0.0, %v884
        %v886 = vpop.f32.mrb[0].mxu0
        %v887 = vpop.f32.mrb[0].mxu0
        %v888 = vadd.f32 0.0, %v887
        %v889 = vpop.f32.mrb[0].mxu0
        %890 = vmatprep.mubr.bf16.mxu0 0
        %891 = vmatmul.mubr.bf16.gmra.mrb[0].mxu0 %v771
        %v892 = vpop.f32.mrb[0].mxu0
        %v893 = vadd.f32 0.0, %v892
        %v894 = vpop.f32.mrb[0].mxu0
        %v895 = vpop.f32.mrb[0].mxu0
        %v896 = vadd.f32 0.0, %v895
        %v897 = vpop.f32.mrb[0].mxu0
        %898 = vmatprep.mubr.bf16.mxu0 0
        %899 = vmatmul.mubr.bf16.gmra.mrb[0].mxu0 %v772
        %v900 = vpop.f32.mrb[0].mxu0
        %v901 = vadd.f32 0.0, %v900
        %v902 = vpop.f32.mrb[0].mxu0
        %v903 = vpop.f32.mrb[0].mxu0
        %v904 = vadd.f32 0.0, %v903
        %v905 = vpop.f32.mrb[0].mxu0
        %906 = vmatprep.mubr.bf16.mxu0 0
        %907 = vmatmul.mubr.bf16.gmra.mrb[0].mxu0 %v773
        %v908 = vpop.f32.mrb[0].mxu0
        %v909 = vadd.f32 0.0, %v908
        %v910 = vpop.f32.mrb[0].mxu0
        %v911 = vpop.f32.mrb[0].mxu0
        %v912 = vadd.f32 0.0, %v911
        %v913 = vpop.f32.mrb[0].mxu0
        %914 = vmatprep.mubr.bf16.mxu0 0
        %915 = vmatmul.mubr.bf16.gmra.mrb[0].mxu0 %v774
        %v916 = vpop.f32.mrb[0].mxu0
        %v917 = vadd.f32 0.0, %v916
        %v918 = vpop.f32.mrb[0].mxu0
        %v919 = vpop.f32.mrb[0].mxu0
        %v920 = vadd.f32 0.0, %v919
        %v921 = vpop.f32.mrb[0].mxu0
        %922 = vmatprep.mubr.bf16.mxu0 0
        %923 = vmatmul.mubr.bf16.gmra.mrb[0].mxu0 %v775
        %v924 = vpop.f32.mrb[0].mxu0
        %v925 = vadd.f32 0.0, %v924
        %v926 = vpop.f32.mrb[0].mxu0
        %v927 = vpop.f32.mrb[0].mxu0
        %v928 = vadd.f32 0.0, %v927
        %v929 = vpop.f32.mrb[0].mxu0
        %930 = vmatprep.mubr.bf16.mxu0 0
        %931 = vmatmul.mubr.bf16.gmra.mrb[0].mxu0 %v776
        %v932 = vpop.f32.mrb[0].mxu0
        %v933 = vadd.f32 0.0, %v932
        %v934 = vpop.f32.mrb[0].mxu0
        %v935 = vpop.f32.mrb[0].mxu0
        %v936 = vadd.f32 0.0, %v935
        %v937 = vpop.f32.mrb[0].mxu0
        %938 = vmatprep.mubr.bf16.mxu0 0
        %939 = vmatmul.mubr.bf16.gmra.mrb[0].mxu0 %v777
        %v940 = vpop.f32.mrb[0].mxu0
        %v941 = vadd.f32 0.0, %v940
        %v942 = vpop.f32.mrb[0].mxu0
        %v943 = vpop.f32.mrb[0].mxu0
        %v944 = vadd.f32 0.0, %v943
        %v945 = vpop.f32.mrb[0].mxu0
        %946 = vmatprep.mubr.bf16.mxu0 0
        %947 = vmatmul.mubr.bf16.gmra.mrb[0].mxu0 %v778
        %v948 = vpop.f32.mrb[0].mxu0
        %v949 = vadd.f32 0.0, %v948
        %v950 = vpop.f32.mrb[0].mxu0
        %v951 = vpop.f32.mrb[0].mxu0
        %v952 = vadd.f32 0.0, %v951
        %v953 = vpop.f32.mrb[0].mxu0
        %954 = vmatprep.mubr.bf16.mxu0 0
        %955 = vmatmul.mubr.bf16.gmra.mrb[0].mxu0 %v779
        %v956 = vpop.f32.mrb[0].mxu0
        %v957 = vadd.f32 0.0, %v956
        %v958 = vpop.f32.mrb[0].mxu0
        %v959 = vpop.f32.mrb[0].mxu0
        %v960 = vadd.f32 0.0, %v959
        %v961 = vpop.f32.mrb[0].mxu0
        %962 = vmatprep.mubr.bf16.mxu0 0
        %963 = vmatmul.mubr.bf16.gmra.mrb[0].mxu0 %v780
        %v964 = vpop.f32.mrb[0].mxu0
        %v965 = vadd.f32 0.0, %v964
        %v966 = vpop.f32.mrb[0].mxu0
        %v967 = vpop.f32.mrb[0].mxu0
        %v968 = vadd.f32 0.0, %v967
        %v969 = vpop.f32.mrb[0].mxu0
        %970 = vmatprep.mubr.bf16.mxu0 0
        %971 = vmatmul.mubr.bf16.gmra.mrb[0].mxu0 %v781
        %v972 = vpop.f32.mrb[0].mxu0
        %v973 = vadd.f32 0.0, %v972
        %v974 = vpop.f32.mrb[0].mxu0
        %v975 = vpop.f32.mrb[0].mxu0
        %v976 = vadd.f32 0.0, %v975
        %v977 = vpop.f32.mrb[0].mxu0
        %978 = vmatprep.mubr.bf16.mxu0 0
        %979 = vmatmul.mubr.bf16.gmra.mrb[0].mxu0 %v782
        %v980 = vpop.f32.mrb[0].mxu0
        %v981 = vadd.f32 0.0, %v980
        %v982 = vpop.f32.mrb[0].mxu0
        %v983 = vpop.f32.mrb[0].mxu0
        %v984 = vadd.f32 0.0, %v983
        %v985 = vpop.f32.mrb[0].mxu0
        %986 = vmatprep.mubr.bf16.mxu0 0
        %987 = vmatmul.mubr.bf16.gmra.mrb[0].mxu0 %v783
        %v988 = vpop.f32.mrb[0].mxu0
        %v989 = vadd.f32 0.0, %v988
        %v990 = vpop.f32.mrb[0].mxu0
        %v991 = vpop.f32.mrb[0].mxu0
        %v992 = vadd.f32 0.0, %v991
        %v993 = vpop.f32.mrb[0].mxu0
        %994 = vmatprep.mubr.bf16.mxu0 0
        %995 = vmatmul.mubr.bf16.gmra.mrb[0].mxu0 %v784
        %v996 = vpop.f32.mrb[0].mxu0
        %v997 = vadd.f32 0.0, %v996
        %v998 = vpop.f32.mrb[0].mxu0
        %v999 = vpop.f32.mrb[0].mxu0
        %v1000 = vadd.f32 0.0, %v999
        %v1001 = vpop.f32.mrb[0].mxu0
        %1002 = vmatprep.mubr.bf16.mxu0 0
        %1003 = vmatmul.mubr.bf16.gmra.mrb[0].mxu0 %v785
        %v1004 = vpop.f32.mrb[0].mxu0
        %v1005 = vadd.f32 0.0, %v1004
        %v1006 = vpop.f32.mrb[0].mxu0
        %v1007 = vpop.f32.mrb[0].mxu0
        %v1008 = vadd.f32 0.0, %v1007
        %v1009 = vpop.f32.mrb[0].mxu0
        %1010 = vdwg.mxu0
        %v1043 = vunpack.c.l.b16 %v270
        %v1044 = vunpack.c.l.b16 %v271
        %v1045 = vunpack.c.l.b16 %v272
        %v1046 = vunpack.c.l.b16 %v273
        %v1047 = vunpack.c.l.b16 %v274
        %v1048 = vunpack.c.l.b16 %v275
        %v1049 = vunpack.c.l.b16 %v276
        %v1050 = vunpack.c.l.b16 %v277
        %v1051 = vunpack.c.l.b16 %v278
        %v1052 = vunpack.c.l.b16 %v279
        %v1053 = vunpack.c.l.b16 %v280
        %v1054 = vunpack.c.l.b16 %v281
        %v1055 = vunpack.c.l.b16 %v282
        %v1056 = vunpack.c.l.b16 %v283
        %v1057 = vunpack.c.l.b16 %v284
        %v1058 = vunpack.c.l.b16 %v285
        %v1059 = vunpack.c.l.b16 %v286
        %v1060 = vunpack.c.l.b16 %v287
        %v1061 = vunpack.c.l.b16 %v288
        %v1062 = vunpack.c.l.b16 %v289
        %v1063 = vunpack.c.l.b16 %v290
        %v1064 = vunpack.c.l.b16 %v291
        %v1065 = vunpack.c.l.b16 %v292
        %v1066 = vunpack.c.l.b16 %v293
        %v1067 = vunpack.c.l.b16 %v294
        %v1068 = vunpack.c.l.b16 %v295
        %v1069 = vunpack.c.l.b16 %v296
        %v1070 = vunpack.c.l.b16 %v297
        %v1071 = vunpack.c.l.b16 %v298
        %v1072 = vunpack.c.l.b16 %v299
        %v1073 = vunpack.c.l.b16 %v300
        %v1074 = vunpack.c.l.b16 %v301
        %v1075 = vpack.c.b16 %v1044, %v1043
        %v1076 = vpack.c.b16 %v1046, %v1045
        %v1077 = vpack.c.b16 %v1048, %v1047
        %v1078 = vpack.c.b16 %v1050, %v1049
        %v1079 = vpack.c.b16 %v1052, %v1051
        %v1080 = vpack.c.b16 %v1054, %v1053
        %v1081 = vpack.c.b16 %v1056, %v1055
        %v1082 = vpack.c.b16 %v1058, %v1057
        %v1083 = vpack.c.b16 %v1060, %v1059
        %v1084 = vpack.c.b16 %v1062, %v1061
        %v1085 = vpack.c.b16 %v1064, %v1063
        %v1086 = vpack.c.b16 %v1066, %v1065
        %v1087 = vpack.c.b16 %v1068, %v1067
        %v1088 = vpack.c.b16 %v1070, %v1069
        %v1089 = vpack.c.b16 %v1072, %v1071
        %v1090 = vpack.c.b16 %v1074, %v1073
        %v1123 = vunpack.c.l.b16 %v302
        %v1124 = vunpack.c.l.b16 %v303
        %v1125 = vunpack.c.l.b16 %v304
        %v1126 = vunpack.c.l.b16 %v305
        %v1127 = vunpack.c.l.b16 %v306
        %v1128 = vunpack.c.l.b16 %v307
        %v1129 = vunpack.c.l.b16 %v308
        %v1130 = vunpack.c.l.b16 %v309
        %v1131 = vunpack.c.l.b16 %v310
        %v1132 = vunpack.c.l.b16 %v311
        %v1133 = vunpack.c.l.b16 %v312
        %v1134 = vunpack.c.l.b16 %v313
        %v1135 = vunpack.c.l.b16 %v314
        %v1136 = vunpack.c.l.b16 %v315
        %v1137 = vunpack.c.l.b16 %v316
        %v1138 = vunpack.c.l.b16 %v317
        %v1139 = vpack.c.b16 %v1124, %v1123
        %v1140 = vpack.c.b16 %v1126, %v1125
        %v1141 = vpack.c.b16 %v1128, %v1127
        %v1142 = vpack.c.b16 %v1130, %v1129
        %v1143 = vpack.c.b16 %v1132, %v1131
        %v1144 = vpack.c.b16 %v1134, %v1133
        %v1145 = vpack.c.b16 %v1136, %v1135
        %v1146 = vpack.c.b16 %v1138, %v1137
        %1155 = vmatprep.subr.bf16.mxu0 0
        %1156 = vmatpush1.bf16.msra.mxu0 %v1139
        %1157 = vmatprep.subr.bf16.mxu0 0
        %1158 = vmatpush1.bf16.msra.mxu0 %v1140
        %1159 = vmatprep.subr.bf16.mxu0 0
        %1160 = vmatpush1.bf16.msra.mxu0 %v1141
        %1161 = vmatprep.subr.bf16.mxu0 0
        %1162 = vmatpush1.bf16.msra.mxu0 %v1142
        %1163 = vmatprep.subr.bf16.mxu0 0
        %1164 = vmatpush1.bf16.msra.mxu0 %v1143
        %1165 = vmatprep.subr.bf16.mxu0 0
        %1166 = vmatpush1.bf16.msra.mxu0 %v1144
        %1167 = vmatprep.subr.bf16.mxu0 0
        %1168 = vmatpush1.bf16.msra.mxu0 %v1145
        %1169 = vmatprep.subr.bf16.mxu0 0
        %1170 = vmatpush1.bf16.msra.mxu0 %v1146
        %1171 = vmatprep.subr.bf16.mxu0 0
        %1172 = vmatpush1.bf16.msra.mxu0 0
        %1173 = vmatprep.subr.bf16.mxu0 0
        %1174 = vmatpush1.bf16.msra.mxu0 0
        %1175 = vmatprep.subr.bf16.mxu0 0
        %1176 = vmatpush1.bf16.msra.mxu0 0
        %1177 = vmatprep.subr.bf16.mxu0 0
        %1178 = vmatpush1.bf16.msra.mxu0 0
        %1179 = vmatprep.subr.bf16.mxu0 0
        %1180 = vmatpush1.bf16.msra.mxu0 0
        %1181 = vmatprep.subr.bf16.mxu0 0
        %1182 = vmatpush1.bf16.msra.mxu0 0
        %1183 = vmatprep.subr.bf16.mxu0 0
        %1184 = vmatpush1.bf16.msra.mxu0 0
        %1185 = vmatprep.subr.bf16.mxu0 0
        %1186 = vmatpush1.bf16.msra.mxu0 0
        %1187 = vmatprep.mubr.bf16.mxu0 0
        %1188 = vmatmul.mubr.bf16.gmra.mrb[0].mxu0 %v1075
        %v1189 = vpop.f32.mrb[0].mxu0
        %v1190 = vadd.f32 %v885, %v1189
        %v1191 = vpop.f32.mrb[0].mxu0
        %v1192 = vpop.f32.mrb[0].mxu0
        %v1193 = vadd.f32 %v888, %v1192
        %v1194 = vpop.f32.mrb[0].mxu0
        %1195 = vmatprep.mubr.bf16.mxu0 0
        %1196 = vmatmul.mubr.bf16.gmra.mrb[0].mxu0 %v1076
        %v1197 = vpop.f32.mrb[0].mxu0
        %v1198 = vadd.f32 %v893, %v1197
        %v1199 = vpop.f32.mrb[0].mxu0
        %v1200 = vpop.f32.mrb[0].mxu0
        %v1201 = vadd.f32 %v896, %v1200
        %v1202 = vpop.f32.mrb[0].mxu0
        %1203 = vmatprep.mubr.bf16.mxu0 0
        %1204 = vmatmul.mubr.bf16.gmra.mrb[0].mxu0 %v1077
        %v1205 = vpop.f32.mrb[0].mxu0
        %v1206 = vadd.f32 %v901, %v1205
        %v1207 = vpop.f32.mrb[0].mxu0
        %v1208 = vpop.f32.mrb[0].mxu0
        %v1209 = vadd.f32 %v904, %v1208
        %v1210 = vpop.f32.mrb[0].mxu0
        %1211 = vmatprep.mubr.bf16.mxu0 0
        %1212 = vmatmul.mubr.bf16.gmra.mrb[0].mxu0 %v1078
        %v1213 = vpop.f32.mrb[0].mxu0
        %v1214 = vadd.f32 %v909, %v1213
        %v1215 = vpop.f32.mrb[0].mxu0
        %v1216 = vpop.f32.mrb[0].mxu0
        %v1217 = vadd.f32 %v912, %v1216
        %v1218 = vpop.f32.mrb[0].mxu0
        %1219 = vmatprep.mubr.bf16.mxu0 0
        %1220 = vmatmul.mubr.bf16.gmra.mrb[0].mxu0 %v1079
        %v1221 = vpop.f32.mrb[0].mxu0
        %v1222 = vadd.f32 %v917, %v1221
        %v1223 = vpop.f32.mrb[0].mxu0
        %v1224 = vpop.f32.mrb[0].mxu0
        %v1225 = vadd.f32 %v920, %v1224
        %v1226 = vpop.f32.mrb[0].mxu0
        %1227 = vmatprep.mubr.bf16.mxu0 0
        %1228 = vmatmul.mubr.bf16.gmra.mrb[0].mxu0 %v1080
        %v1229 = vpop.f32.mrb[0].mxu0
        %v1230 = vadd.f32 %v925, %v1229
        %v1231 = vpop.f32.mrb[0].mxu0
        %v1232 = vpop.f32.mrb[0].mxu0
        %v1233 = vadd.f32 %v928, %v1232
        %v1234 = vpop.f32.mrb[0].mxu0
        %1235 = vmatprep.mubr.bf16.mxu0 0
        %1236 = vmatmul.mubr.bf16.gmra.mrb[0].mxu0 %v1081
        %v1237 = vpop.f32.mrb[0].mxu0
        %v1238 = vadd.f32 %v933, %v1237
        %v1239 = vpop.f32.mrb[0].mxu0
        %v1240 = vpop.f32.mrb[0].mxu0
        %v1241 = vadd.f32 %v936, %v1240
        %v1242 = vpop.f32.mrb[0].mxu0
        %1243 = vmatprep.mubr.bf16.mxu0 0
        %1244 = vmatmul.mubr.bf16.gmra.mrb[0].mxu0 %v1082
        %v1245 = vpop.f32.mrb[0].mxu0
        %v1246 = vadd.f32 %v941, %v1245
        %v1247 = vpop.f32.mrb[0].mxu0
        %v1248 = vpop.f32.mrb[0].mxu0
        %v1249 = vadd.f32 %v944, %v1248
        %v1250 = vpop.f32.mrb[0].mxu0
        %1251 = vmatprep.mubr.bf16.mxu0 0
        %1252 = vmatmul.mubr.bf16.gmra.mrb[0].mxu0 %v1083
        %v1253 = vpop.f32.mrb[0].mxu0
        %v1254 = vadd.f32 %v949, %v1253
        %v1255 = vpop.f32.mrb[0].mxu0
        %v1256 = vpop.f32.mrb[0].mxu0
        %v1257 = vadd.f32 %v952, %v1256
        %v1258 = vpop.f32.mrb[0].mxu0
        %1259 = vmatprep.mubr.bf16.mxu0 0
        %1260 = vmatmul.mubr.bf16.gmra.mrb[0].mxu0 %v1084
        %v1261 = vpop.f32.mrb[0].mxu0
        %v1262 = vadd.f32 %v957, %v1261
        %v1263 = vpop.f32.mrb[0].mxu0
        %v1264 = vpop.f32.mrb[0].mxu0
        %v1265 = vadd.f32 %v960, %v1264
        %v1266 = vpop.f32.mrb[0].mxu0
        %1267 = vmatprep.mubr.bf16.mxu0 0
        %1268 = vmatmul.mubr.bf16.gmra.mrb[0].mxu0 %v1085
        %v1269 = vpop.f32.mrb[0].mxu0
        %v1270 = vadd.f32 %v965, %v1269
        %v1271 = vpop.f32.mrb[0].mxu0
        %v1272 = vpop.f32.mrb[0].mxu0
        %v1273 = vadd.f32 %v968, %v1272
        %v1274 = vpop.f32.mrb[0].mxu0
        %1275 = vmatprep.mubr.bf16.mxu0 0
        %1276 = vmatmul.mubr.bf16.gmra.mrb[0].mxu0 %v1086
        %v1277 = vpop.f32.mrb[0].mxu0
        %v1278 = vadd.f32 %v973, %v1277
        %v1279 = vpop.f32.mrb[0].mxu0
        %v1280 = vpop.f32.mrb[0].mxu0
        %v1281 = vadd.f32 %v976, %v1280
        %v1282 = vpop.f32.mrb[0].mxu0
        %1283 = vmatprep.mubr.bf16.mxu0 0
        %1284 = vmatmul.mubr.bf16.gmra.mrb[0].mxu0 %v1087
        %v1285 = vpop.f32.mrb[0].mxu0
        %v1286 = vadd.f32 %v981, %v1285
        %v1287 = vpop.f32.mrb[0].mxu0
        %v1288 = vpop.f32.mrb[0].mxu0
        %v1289 = vadd.f32 %v984, %v1288
        %v1290 = vpop.f32.mrb[0].mxu0
        %1291 = vmatprep.mubr.bf16.mxu0 0
        %1292 = vmatmul.mubr.bf16.gmra.mrb[0].mxu0 %v1088
        %v1293 = vpop.f32.mrb[0].mxu0
        %v1294 = vadd.f32 %v989, %v1293
        %v1295 = vpop.f32.mrb[0].mxu0
        %v1296 = vpop.f32.mrb[0].mxu0
        %v1297 = vadd.f32 %v992, %v1296
        %v1298 = vpop.f32.mrb[0].mxu0
        %1299 = vmatprep.mubr.bf16.mxu0 0
        %1300 = vmatmul.mubr.bf16.gmra.mrb[0].mxu0 %v1089
        %v1301 = vpop.f32.mrb[0].mxu0
        %v1302 = vadd.f32 %v997, %v1301
        %v1303 = vpop.f32.mrb[0].mxu0
        %v1304 = vpop.f32.mrb[0].mxu0
        %v1305 = vadd.f32 %v1000, %v1304
        %v1306 = vpop.f32.mrb[0].mxu0
        %1307 = vmatprep.mubr.bf16.mxu0 0
        %1308 = vmatmul.mubr.bf16.gmra.mrb[0].mxu0 %v1090
        %v1309 = vpop.f32.mrb[0].mxu0
        %v1310 = vadd.f32 %v1005, %v1309
        %v1311 = vpop.f32.mrb[0].mxu0
        %v1312 = vpop.f32.mrb[0].mxu0
        %v1313 = vadd.f32 %v1008, %v1312
        %v1314 = vpop.f32.mrb[0].mxu0
        %1315 = vdwg.mxu0
        %v1316 = vld [vmem:[%s269] sm:$0xe]
        %v1317 = vld [vmem:[%s269 + $0xc] sm:$0xe]
        %v1318 = vld [vmem:[%s269 + $0x18] sm:$0xe]
        %v1319 = vld [vmem:[%s269 + $0x24] sm:$0xe]
        %v1320 = vld [vmem:[%s269 + $0x30] sm:$0xe]
        %v1321 = vld [vmem:[%s269 + $0x3c] sm:$0xe]
        %v1322 = vld [vmem:[%s269 + $0x48] sm:$0xe]
        %v1323 = vld [vmem:[%s269 + $0x54] sm:$0xe]
        %v1324 = vld [vmem:[%s269 + $0x60] sm:$0xe]
        %v1325 = vld [vmem:[%s269 + $0x6c] sm:$0xe]
        %v1326 = vld [vmem:[%s269 + $0x78] sm:$0xe]
        %v1327 = vld [vmem:[%s269 + $0x84] sm:$0xe]
        %v1328 = vld [vmem:[%s269 + $0x90] sm:$0xe]
        %v1329 = vld [vmem:[%s269 + $0x9c] sm:$0xe]
        %v1330 = vld [vmem:[%s269 + $0xa8] sm:$0xe]
        %v1331 = vld [vmem:[%s269 + $0xb4] sm:$0xe]
        %vm1364 = vcmask 1042432
        %vm1365 = vcmask 1046532
        %vm1366 = vmor %vm1364, %vm1365
        %v1367 = vrot.slane %v1316, 5
        %v1368 = vrot.slane %v1367, 4
        %v1369 = vrot.slane %v271, 5
        %v1370 = vsel %vm1366, %v1368, %v1369
        %v1371 = vrot.slane %v1369, 4
        %v1372 = vrot.slane %v318, 5
        %v1373 = vsel %vm1366, %v1371, %v1372
        %v1374 = vrot.slane %v1317, 5
        %v1375 = vrot.slane %v1374, 4
        %v1376 = vrot.slane %v273, 5
        %v1377 = vsel %vm1366, %v1375, %v1376
        %v1378 = vrot.slane %v1376, 4
        %v1379 = vrot.slane %v319, 5
        %v1380 = vsel %vm1366, %v1378, %v1379
        %v1381 = vrot.slane %v1318, 5
        %v1382 = vrot.slane %v1381, 4
        %v1383 = vrot.slane %v275, 5
        %v1384 = vsel %vm1366, %v1382, %v1383
        %v1385 = vrot.slane %v1383, 4
        %v1386 = vrot.slane %v320, 5
        %v1387 = vsel %vm1366, %v1385, %v1386
        %v1388 = vrot.slane %v1319, 5
        %v1389 = vrot.slane %v1388, 4
        %v1390 = vrot.slane %v277, 5
        %v1391 = vsel %vm1366, %v1389, %v1390
        %v1392 = vrot.slane %v1390, 4
        %v1393 = vrot.slane %v321, 5
        %v1394 = vsel %vm1366, %v1392, %v1393
        %v1395 = vrot.slane %v1320, 5
        %v1396 = vrot.slane %v1395, 4
        %v1397 = vrot.slane %v279, 5
        %v1398 = vsel %vm1366, %v1396, %v1397
        %v1399 = vrot.slane %v1397, 4
        %v1400 = vrot.slane %v322, 5
        %v1401 = vsel %vm1366, %v1399, %v1400
        %v1402 = vrot.slane %v1321, 5
        %v1403 = vrot.slane %v1402, 4
        %v1404 = vrot.slane %v281, 5
        %v1405 = vsel %vm1366, %v1403, %v1404
        %v1406 = vrot.slane %v1404, 4
        %v1407 = vrot.slane %v323, 5
        %v1408 = vsel %vm1366, %v1406, %v1407
        %v1409 = vrot.slane %v1322, 5
        %v1410 = vrot.slane %v1409, 4
        %v1411 = vrot.slane %v283, 5
        %v1412 = vsel %vm1366, %v1410, %v1411
        %v1413 = vrot.slane %v1411, 4
        %v1414 = vrot.slane %v324, 5
        %v1415 = vsel %vm1366, %v1413, %v1414
        %v1416 = vrot.slane %v1323, 5
        %v1417 = vrot.slane %v1416, 4
        %v1418 = vrot.slane %v285, 5
        %v1419 = vsel %vm1366, %v1417, %v1418
        %v1420 = vrot.slane %v1418, 4
        %v1421 = vrot.slane %v325, 5
        %v1422 = vsel %vm1366, %v1420, %v1421
        %v1423 = vrot.slane %v1324, 5
        %v1424 = vrot.slane %v1423, 4
        %v1425 = vrot.slane %v287, 5
        %v1426 = vsel %vm1366, %v1424, %v1425
        %v1427 = vrot.slane %v1425, 4
        %v1428 = vrot.slane %v326, 5
        %v1429 = vsel %vm1366, %v1427, %v1428
        %v1430 = vrot.slane %v1325, 5
        %v1431 = vrot.slane %v1430, 4
        %v1432 = vrot.slane %v289, 5
        %v1433 = vsel %vm1366, %v1431, %v1432
        %v1434 = vrot.slane %v1432, 4
        %v1435 = vrot.slane %v327, 5
        %v1436 = vsel %vm1366, %v1434, %v1435
        %v1437 = vrot.slane %v1326, 5
        %v1438 = vrot.slane %v1437, 4
        %v1439 = vrot.slane %v291, 5
        %v1440 = vsel %vm1366, %v1438, %v1439
        %v1441 = vrot.slane %v1439, 4
        %v1442 = vrot.slane %v328, 5
        %v1443 = vsel %vm1366, %v1441, %v1442
        %v1444 = vrot.slane %v1327, 5
        %v1445 = vrot.slane %v1444, 4
        %v1446 = vrot.slane %v293, 5
        %v1447 = vsel %vm1366, %v1445, %v1446
        %v1448 = vrot.slane %v1446, 4
        %v1449 = vrot.slane %v329, 5
        %v1450 = vsel %vm1366, %v1448, %v1449
        %v1451 = vrot.slane %v1328, 5
        %v1452 = vrot.slane %v1451, 4
        %v1453 = vrot.slane %v295, 5
        %v1454 = vsel %vm1366, %v1452, %v1453
        %v1455 = vrot.slane %v1453, 4
        %v1456 = vrot.slane %v330, 5
        %v1457 = vsel %vm1366, %v1455, %v1456
        %v1458 = vrot.slane %v1329, 5
        %v1459 = vrot.slane %v1458, 4
        %v1460 = vrot.slane %v297, 5
        %v1461 = vsel %vm1366, %v1459, %v1460
        %v1462 = vrot.slane %v1460, 4
        %v1463 = vrot.slane %v331, 5
        %v1464 = vsel %vm1366, %v1462, %v1463
        %v1465 = vrot.slane %v1330, 5
        %v1466 = vrot.slane %v1465, 4
        %v1467 = vrot.slane %v299, 5
        %v1468 = vsel %vm1366, %v1466, %v1467
        %v1469 = vrot.slane %v1467, 4
        %v1470 = vrot.slane %v332, 5
        %v1471 = vsel %vm1366, %v1469, %v1470
        %v1472 = vrot.slane %v1331, 5
        %v1473 = vrot.slane %v1472, 4
        %v1474 = vrot.slane %v301, 5
        %v1475 = vsel %vm1366, %v1473, %v1474
        %v1476 = vrot.slane %v1474, 4
        %v1477 = vrot.slane %v333, 5
        %v1478 = vsel %vm1366, %v1476, %v1477
        %s1479 = scalar_lea.vmem %s257, 128
        %v1480 = vld [vmem:[%s1479] sm:$0xf]
        %v1481 = vld [vmem:[%s1479 + $0x4] sm:$0xf]
        %v1482 = vld [vmem:[%s1479 + $0x8] sm:$0xf]
        %v1483 = vld [vmem:[%s1479 + $0xc] sm:$0xf]
        %v1484 = vld [vmem:[%s1479 + $0x10] sm:$0xf]
        %v1485 = vld [vmem:[%s1479 + $0x14] sm:$0xf]
        %v1486 = vld [vmem:[%s1479 + $0x18] sm:$0xf]
        %v1487 = vld [vmem:[%s1479 + $0x1c] sm:$0xf]
        %v1488 = vld [vmem:[%s1479 + $0x20] sm:$0xf]
        %v1489 = vld [vmem:[%s1479 + $0x24] sm:$0xf]
        %v1490 = vld [vmem:[%s1479 + $0x28] sm:$0xf]
        %v1491 = vld [vmem:[%s1479 + $0x2c] sm:$0xf]
        %v1492 = vld [vmem:[%s1479 + $0x30] sm:$0xf]
        %v1493 = vld [vmem:[%s1479 + $0x34] sm:$0xf]
        %v1494 = vld [vmem:[%s1479 + $0x38] sm:$0xf]
        %v1495 = vld [vmem:[%s1479 + $0x3c] sm:$0xf]
        %v1496 = vunpack.c.l.b16 %v1370
        %v1497 = vunpack.c.l.b16 %v1373
        %v1498 = vunpack.c.l.b16 %v1377
        %v1499 = vunpack.c.l.b16 %v1380
        %v1500 = vunpack.c.l.b16 %v1384
        %v1501 = vunpack.c.l.b16 %v1387
        %v1502 = vunpack.c.l.b16 %v1391
        %v1503 = vunpack.c.l.b16 %v1394
        %v1504 = vunpack.c.l.b16 %v1398
        %v1505 = vunpack.c.l.b16 %v1401
        %v1506 = vunpack.c.l.b16 %v1405
        %v1507 = vunpack.c.l.b16 %v1408
        %v1508 = vunpack.c.l.b16 %v1412
        %v1509 = vunpack.c.l.b16 %v1415
        %v1510 = vunpack.c.l.b16 %v1419
        %v1511 = vunpack.c.l.b16 %v1422
        %v1512 = vunpack.c.l.b16 %v1426
        %v1513 = vunpack.c.l.b16 %v1429
        %v1514 = vunpack.c.l.b16 %v1433
        %v1515 = vunpack.c.l.b16 %v1436
        %v1516 = vunpack.c.l.b16 %v1440
        %v1517 = vunpack.c.l.b16 %v1443
        %v1518 = vunpack.c.l.b16 %v1447
        %v1519 = vunpack.c.l.b16 %v1450
        %v1520 = vunpack.c.l.b16 %v1454
        %v1521 = vunpack.c.l.b16 %v1457
        %v1522 = vunpack.c.l.b16 %v1461
        %v1523 = vunpack.c.l.b16 %v1464
        %v1524 = vunpack.c.l.b16 %v1468
        %v1525 = vunpack.c.l.b16 %v1471
        %v1526 = vunpack.c.l.b16 %v1475
        %v1527 = vunpack.c.l.b16 %v1478
        %v1528 = vpack.c.b16 %v1497, %v1496
        %v1529 = vpack.c.b16 %v1499, %v1498
        %v1530 = vpack.c.b16 %v1501, %v1500
        %v1531 = vpack.c.b16 %v1503, %v1502
        %v1532 = vpack.c.b16 %v1505, %v1504
        %v1533 = vpack.c.b16 %v1507, %v1506
        %v1534 = vpack.c.b16 %v1509, %v1508
        %v1535 = vpack.c.b16 %v1511, %v1510
        %v1536 = vpack.c.b16 %v1513, %v1512
        %v1537 = vpack.c.b16 %v1515, %v1514
        %v1538 = vpack.c.b16 %v1517, %v1516
        %v1539 = vpack.c.b16 %v1519, %v1518
        %v1540 = vpack.c.b16 %v1521, %v1520
        %v1541 = vpack.c.b16 %v1523, %v1522
        %v1542 = vpack.c.b16 %v1525, %v1524
        %v1543 = vpack.c.b16 %v1527, %v1526
        %v1576 = vunpack.c.l.b16 %v1480
        %v1577 = vunpack.c.l.b16 %v1481
        %v1578 = vunpack.c.l.b16 %v1482
        %v1579 = vunpack.c.l.b16 %v1483
        %v1580 = vunpack.c.l.b16 %v1484
        %v1581 = vunpack.c.l.b16 %v1485
        %v1582 = vunpack.c.l.b16 %v1486
        %v1583 = vunpack.c.l.b16 %v1487
        %v1584 = vunpack.c.l.b16 %v1488
        %v1585 = vunpack.c.l.b16 %v1489
        %v1586 = vunpack.c.l.b16 %v1490
        %v1587 = vunpack.c.l.b16 %v1491
        %v1588 = vunpack.c.l.b16 %v1492
        %v1589 = vunpack.c.l.b16 %v1493
        %v1590 = vunpack.c.l.b16 %v1494
        %v1591 = vunpack.c.l.b16 %v1495
        %v1592 = vpack.c.b16 %v1577, %v1576
        %v1593 = vpack.c.b16 %v1579, %v1578
        %v1594 = vpack.c.b16 %v1581, %v1580
        %v1595 = vpack.c.b16 %v1583, %v1582
        %v1596 = vpack.c.b16 %v1585, %v1584
        %v1597 = vpack.c.b16 %v1587, %v1586
        %v1598 = vpack.c.b16 %v1589, %v1588
        %v1599 = vpack.c.b16 %v1591, %v1590
        %1608 = vmatprep.subr.bf16.mxu0 0
        %1609 = vmatpush1.bf16.msra.mxu0 %v1592
        %1610 = vmatprep.subr.bf16.mxu0 0
        %1611 = vmatpush1.bf16.msra.mxu0 %v1593
        %1612 = vmatprep.subr.bf16.mxu0 0
        %1613 = vmatpush1.bf16.msra.mxu0 %v1594
        %1614 = vmatprep.subr.bf16.mxu0 0
        %1615 = vmatpush1.bf16.msra.mxu0 %v1595
        %1616 = vmatprep.subr.bf16.mxu0 0
        %1617 = vmatpush1.bf16.msra.mxu0 %v1596
        %1618 = vmatprep.subr.bf16.mxu0 0
        %1619 = vmatpush1.bf16.msra.mxu0 %v1597
        %1620 = vmatprep.subr.bf16.mxu0 0
        %1621 = vmatpush1.bf16.msra.mxu0 %v1598
        %1622 = vmatprep.subr.bf16.mxu0 0
        %1623 = vmatpush1.bf16.msra.mxu0 %v1599
        %1624 = vmatprep.subr.bf16.mxu0 0
        %1625 = vmatpush1.bf16.msra.mxu0 0
        %1626 = vmatprep.subr.bf16.mxu0 0
        %1627 = vmatpush1.bf16.msra.mxu0 0
        %1628 = vmatprep.subr.bf16.mxu0 0
        %1629 = vmatpush1.bf16.msra.mxu0 0
        %1630 = vmatprep.subr.bf16.mxu0 0
        %1631 = vmatpush1.bf16.msra.mxu0 0
        %1632 = vmatprep.subr.bf16.mxu0 0
        %1633 = vmatpush1.bf16.msra.mxu0 0
        %1634 = vmatprep.subr.bf16.mxu0 0
        %1635 = vmatpush1.bf16.msra.mxu0 0
        %1636 = vmatprep.subr.bf16.mxu0 0
        %1637 = vmatpush1.bf16.msra.mxu0 0
        %1638 = vmatprep.subr.bf16.mxu0 0
        %1639 = vmatpush1.bf16.msra.mxu0 0
        %1640 = vmatprep.mubr.bf16.mxu0 0
        %1641 = vmatmul.mubr.bf16.gmra.mrb[0].mxu0 %v1528
        %v1642 = vpop.f32.mrb[0].mxu0
        %v1643 = vadd.f32 0.0, %v1642
        %v1644 = vpop.f32.mrb[0].mxu0
        %v1645 = vpop.f32.mrb[0].mxu0
        %v1646 = vadd.f32 0.0, %v1645
        %v1647 = vpop.f32.mrb[0].mxu0
        %1648 = vmatprep.mubr.bf16.mxu0 0
        %1649 = vmatmul.mubr.bf16.gmra.mrb[0].mxu0 %v1529
        %v1650 = vpop.f32.mrb[0].mxu0
        %v1651 = vadd.f32 0.0, %v1650
        %v1652 = vpop.f32.mrb[0].mxu0
        %v1653 = vpop.f32.mrb[0].mxu0
        %v1654 = vadd.f32 0.0, %v1653
        %v1655 = vpop.f32.mrb[0].mxu0
        %1656 = vmatprep.mubr.bf16.mxu0 0
        %1657 = vmatmul.mubr.bf16.gmra.mrb[0].mxu0 %v1530
        %v1658 = vpop.f32.mrb[0].mxu0
        %v1659 = vadd.f32 0.0, %v1658
        %v1660 = vpop.f32.mrb[0].mxu0
        %v1661 = vpop.f32.mrb[0].mxu0
        %v1662 = vadd.f32 0.0, %v1661
        %v1663 = vpop.f32.mrb[0].mxu0
        %1664 = vmatprep.mubr.bf16.mxu0 0
        %1665 = vmatmul.mubr.bf16.gmra.mrb[0].mxu0 %v1531
        %v1666 = vpop.f32.mrb[0].mxu0
        %v1667 = vadd.f32 0.0, %v1666
        %v1668 = vpop.f32.mrb[0].mxu0
        %v1669 = vpop.f32.mrb[0].mxu0
        %v1670 = vadd.f32 0.0, %v1669
        %v1671 = vpop.f32.mrb[0].mxu0
        %1672 = vmatprep.mubr.bf16.mxu0 0
        %1673 = vmatmul.mubr.bf16.gmra.mrb[0].mxu0 %v1532
        %v1674 = vpop.f32.mrb[0].mxu0
        %v1675 = vadd.f32 0.0, %v1674
        %v1676 = vpop.f32.mrb[0].mxu0
        %v1677 = vpop.f32.mrb[0].mxu0
        %v1678 = vadd.f32 0.0, %v1677
        %v1679 = vpop.f32.mrb[0].mxu0
        %1680 = vmatprep.mubr.bf16.mxu0 0
        %1681 = vmatmul.mubr.bf16.gmra.mrb[0].mxu0 %v1533
        %v1682 = vpop.f32.mrb[0].mxu0
        %v1683 = vadd.f32 0.0, %v1682
        %v1684 = vpop.f32.mrb[0].mxu0
        %v1685 = vpop.f32.mrb[0].mxu0
        %v1686 = vadd.f32 0.0, %v1685
        %v1687 = vpop.f32.mrb[0].mxu0
        %1688 = vmatprep.mubr.bf16.mxu0 0
        %1689 = vmatmul.mubr.bf16.gmra.mrb[0].mxu0 %v1534
        %v1690 = vpop.f32.mrb[0].mxu0
        %v1691 = vadd.f32 0.0, %v1690
        %v1692 = vpop.f32.mrb[0].mxu0
        %v1693 = vpop.f32.mrb[0].mxu0
        %v1694 = vadd.f32 0.0, %v1693
        %v1695 = vpop.f32.mrb[0].mxu0
        %1696 = vmatprep.mubr.bf16.mxu0 0
        %1697 = vmatmul.mubr.bf16.gmra.mrb[0].mxu0 %v1535
        %v1698 = vpop.f32.mrb[0].mxu0
        %v1699 = vadd.f32 0.0, %v1698
        %v1700 = vpop.f32.mrb[0].mxu0
        %v1701 = vpop.f32.mrb[0].mxu0
        %v1702 = vadd.f32 0.0, %v1701
        %v1703 = vpop.f32.mrb[0].mxu0
        %1704 = vmatprep.mubr.bf16.mxu0 0
        %1705 = vmatmul.mubr.bf16.gmra.mrb[0].mxu0 %v1536
        %v1706 = vpop.f32.mrb[0].mxu0
        %v1707 = vadd.f32 0.0, %v1706
        %v1708 = vpop.f32.mrb[0].mxu0
        %v1709 = vpop.f32.mrb[0].mxu0
        %v1710 = vadd.f32 0.0, %v1709
        %v1711 = vpop.f32.mrb[0].mxu0
        %1712 = vmatprep.mubr.bf16.mxu0 0
        %1713 = vmatmul.mubr.bf16.gmra.mrb[0].mxu0 %v1537
        %v1714 = vpop.f32.mrb[0].mxu0
        %v1715 = vadd.f32 0.0, %v1714
        %v1716 = vpop.f32.mrb[0].mxu0
        %v1717 = vpop.f32.mrb[0].mxu0
        %v1718 = vadd.f32 0.0, %v1717
        %v1719 = vpop.f32.mrb[0].mxu0
        %1720 = vmatprep.mubr.bf16.mxu0 0
        %1721 = vmatmul.mubr.bf16.gmra.mrb[0].mxu0 %v1538
        %v1722 = vpop.f32.mrb[0].mxu0
        %v1723 = vadd.f32 0.0, %v1722
        %v1724 = vpop.f32.mrb[0].mxu0
        %v1725 = vpop.f32.mrb[0].mxu0
        %v1726 = vadd.f32 0.0, %v1725
        %v1727 = vpop.f32.mrb[0].mxu0
        %1728 = vmatprep.mubr.bf16.mxu0 0
        %1729 = vmatmul.mubr.bf16.gmra.mrb[0].mxu0 %v1539
        %v1730 = vpop.f32.mrb[0].mxu0
        %v1731 = vadd.f32 0.0, %v1730
        %v1732 = vpop.f32.mrb[0].mxu0
        %v1733 = vpop.f32.mrb[0].mxu0
        %v1734 = vadd.f32 0.0, %v1733
        %v1735 = vpop.f32.mrb[0].mxu0
        %1736 = vmatprep.mubr.bf16.mxu0 0
        %1737 = vmatmul.mubr.bf16.gmra.mrb[0].mxu0 %v1540
        %v1738 = vpop.f32.mrb[0].mxu0
        %v1739 = vadd.f32 0.0, %v1738
        %v1740 = vpop.f32.mrb[0].mxu0
        %v1741 = vpop.f32.mrb[0].mxu0
        %v1742 = vadd.f32 0.0, %v1741
        %v1743 = vpop.f32.mrb[0].mxu0
        %1744 = vmatprep.mubr.bf16.mxu0 0
        %1745 = vmatmul.mubr.bf16.gmra.mrb[0].mxu0 %v1541
        %v1746 = vpop.f32.mrb[0].mxu0
        %v1747 = vadd.f32 0.0, %v1746
        %v1748 = vpop.f32.mrb[0].mxu0
        %v1749 = vpop.f32.mrb[0].mxu0
        %v1750 = vadd.f32 0.0, %v1749
        %v1751 = vpop.f32.mrb[0].mxu0
        %1752 = vmatprep.mubr.bf16.mxu0 0
        %1753 = vmatmul.mubr.bf16.gmra.mrb[0].mxu0 %v1542
        %v1754 = vpop.f32.mrb[0].mxu0
        %v1755 = vadd.f32 0.0, %v1754
        %v1756 = vpop.f32.mrb[0].mxu0
        %v1757 = vpop.f32.mrb[0].mxu0
        %v1758 = vadd.f32 0.0, %v1757
        %v1759 = vpop.f32.mrb[0].mxu0
        %1760 = vmatprep.mubr.bf16.mxu0 0
        %1761 = vmatmul.mubr.bf16.gmra.mrb[0].mxu0 %v1543
        %v1762 = vpop.f32.mrb[0].mxu0
        %v1763 = vadd.f32 0.0, %v1762
        %v1764 = vpop.f32.mrb[0].mxu0
        %v1765 = vpop.f32.mrb[0].mxu0
        %v1766 = vadd.f32 0.0, %v1765
        %v1767 = vpop.f32.mrb[0].mxu0
        %1768 = vdwg.mxu0
        %v1769 = vadd.f32 %v1190, %v1643
        %v1770 = vadd.f32 %v1193, %v1646
        %v1771 = vadd.f32 %v1198, %v1651
        %v1772 = vadd.f32 %v1201, %v1654
        %v1773 = vadd.f32 %v1206, %v1659
        %v1774 = vadd.f32 %v1209, %v1662
        %v1775 = vadd.f32 %v1214, %v1667
        %v1776 = vadd.f32 %v1217, %v1670
        %v1777 = vadd.f32 %v1222, %v1675
        %v1778 = vadd.f32 %v1225, %v1678
        %v1779 = vadd.f32 %v1230, %v1683
        %v1780 = vadd.f32 %v1233, %v1686
        %v1781 = vadd.f32 %v1238, %v1691
        %v1782 = vadd.f32 %v1241, %v1694
        %v1783 = vadd.f32 %v1246, %v1699
        %v1784 = vadd.f32 %v1249, %v1702
        %v1785 = vadd.f32 %v1254, %v1707
        %v1786 = vadd.f32 %v1257, %v1710
        %v1787 = vadd.f32 %v1262, %v1715
        %v1788 = vadd.f32 %v1265, %v1718
        %v1789 = vadd.f32 %v1270, %v1723
        %v1790 = vadd.f32 %v1273, %v1726
        %v1791 = vadd.f32 %v1278, %v1731
        %v1792 = vadd.f32 %v1281, %v1734
        %v1793 = vadd.f32 %v1286, %v1739
        %v1794 = vadd.f32 %v1289, %v1742
        %v1795 = vadd.f32 %v1294, %v1747
        %v1796 = vadd.f32 %v1297, %v1750
        %v1797 = vadd.f32 %v1302, %v1755
        %v1798 = vadd.f32 %v1305, %v1758
        %v1799 = vadd.f32 %v1310, %v1763
        %v1800 = vadd.f32 %v1313, %v1766
        %s1801 = sadd.s32 %s266, 1
        %s1802 = smul.u32 %s1801, 3
        %s1803 = smul.addr %s1802, 4
        %s1804 = scalar_lea.vmem %s253, %s1803
        %v1805 = vld [vmem:[%s1804] sm:$0xf]
        %v1806 = vld [vmem:[%s1804 + $0x4] sm:$0xf]
        %v1807 = vld [vmem:[%s1804 + $0xc] sm:$0xf]
        %v1808 = vld [vmem:[%s1804 + $0x10] sm:$0xf]
        %v1809 = vld [vmem:[%s1804 + $0x18] sm:$0xf]
        %v1810 = vld [vmem:[%s1804 + $0x1c] sm:$0xf]
        %v1811 = vld [vmem:[%s1804 + $0x24] sm:$0xf]
        %v1812 = vld [vmem:[%s1804 + $0x28] sm:$0xf]
        %v1813 = vld [vmem:[%s1804 + $0x30] sm:$0xf]
        %v1814 = vld [vmem:[%s1804 + $0x34] sm:$0xf]
        %v1815 = vld [vmem:[%s1804 + $0x3c] sm:$0xf]
        %v1816 = vld [vmem:[%s1804 + $0x40] sm:$0xf]
        %v1817 = vld [vmem:[%s1804 + $0x48] sm:$0xf]
        %v1818 = vld [vmem:[%s1804 + $0x4c] sm:$0xf]
        %v1819 = vld [vmem:[%s1804 + $0x54] sm:$0xf]
        %v1820 = vld [vmem:[%s1804 + $0x58] sm:$0xf]
        %v1821 = vld [vmem:[%s1804 + $0x60] sm:$0xf]
        %v1822 = vld [vmem:[%s1804 + $0x64] sm:$0xf]
        %v1823 = vld [vmem:[%s1804 + $0x6c] sm:$0xf]
        %v1824 = vld [vmem:[%s1804 + $0x70] sm:$0xf]
        %v1825 = vld [vmem:[%s1804 + $0x78] sm:$0xf]
        %v1826 = vld [vmem:[%s1804 + $0x7c] sm:$0xf]
        %v1827 = vld [vmem:[%s1804 + $0x84] sm:$0xf]
        %v1828 = vld [vmem:[%s1804 + $0x88] sm:$0xf]
        %v1829 = vld [vmem:[%s1804 + $0x90] sm:$0xf]
        %v1830 = vld [vmem:[%s1804 + $0x94] sm:$0xf]
        %v1831 = vld [vmem:[%s1804 + $0x9c] sm:$0xf]
        %v1832 = vld [vmem:[%s1804 + $0xa0] sm:$0xf]
        %v1833 = vld [vmem:[%s1804 + $0xa8] sm:$0xf]
        %v1834 = vld [vmem:[%s1804 + $0xac] sm:$0xf]
        %v1835 = vld [vmem:[%s1804 + $0xb4] sm:$0xf]
        %v1836 = vld [vmem:[%s1804 + $0xb8] sm:$0xf]
        %s1837 = scalar_lea.vmem %s257, 192
        %v1838 = vld [vmem:[%s1837] sm:$0xf]
        %v1839 = vld [vmem:[%s1837 + $0x4] sm:$0xf]
        %v1840 = vld [vmem:[%s1837 + $0x8] sm:$0xf]
        %v1841 = vld [vmem:[%s1837 + $0xc] sm:$0xf]
        %v1842 = vld [vmem:[%s1837 + $0x10] sm:$0xf]
        %v1843 = vld [vmem:[%s1837 + $0x14] sm:$0xf]
        %v1844 = vld [vmem:[%s1837 + $0x18] sm:$0xf]
        %v1845 = vld [vmem:[%s1837 + $0x1c] sm:$0xf]
        %v1846 = vld [vmem:[%s1837 + $0x20] sm:$0xf]
        %v1847 = vld [vmem:[%s1837 + $0x24] sm:$0xf]
        %v1848 = vld [vmem:[%s1837 + $0x28] sm:$0xf]
        %v1849 = vld [vmem:[%s1837 + $0x2c] sm:$0xf]
        %v1850 = vld [vmem:[%s1837 + $0x30] sm:$0xf]
        %v1851 = vld [vmem:[%s1837 + $0x34] sm:$0xf]
        %v1852 = vld [vmem:[%s1837 + $0x38] sm:$0xf]
        %v1853 = vld [vmem:[%s1837 + $0x3c] sm:$0xf]
        %v1886 = vunpack.c.l.b16 %v1805
        %v1887 = vunpack.c.l.b16 %v1806
        %v1888 = vunpack.c.l.b16 %v1807
        %v1889 = vunpack.c.l.b16 %v1808
        %v1890 = vunpack.c.l.b16 %v1809
        %v1891 = vunpack.c.l.b16 %v1810
        %v1892 = vunpack.c.l.b16 %v1811
        %v1893 = vunpack.c.l.b16 %v1812
        %v1894 = vunpack.c.l.b16 %v1813
        %v1895 = vunpack.c.l.b16 %v1814
        %v1896 = vunpack.c.l.b16 %v1815
        %v1897 = vunpack.c.l.b16 %v1816
        %v1898 = vunpack.c.l.b16 %v1817
        %v1899 = vunpack.c.l.b16 %v1818
        %v1900 = vunpack.c.l.b16 %v1819
        %v1901 = vunpack.c.l.b16 %v1820
        %v1902 = vunpack.c.l.b16 %v1821
        %v1903 = vunpack.c.l.b16 %v1822
        %v1904 = vunpack.c.l.b16 %v1823
        %v1905 = vunpack.c.l.b16 %v1824
        %v1906 = vunpack.c.l.b16 %v1825
        %v1907 = vunpack.c.l.b16 %v1826
        %v1908 = vunpack.c.l.b16 %v1827
        %v1909 = vunpack.c.l.b16 %v1828
        %v1910 = vunpack.c.l.b16 %v1829
        %v1911 = vunpack.c.l.b16 %v1830
        %v1912 = vunpack.c.l.b16 %v1831
        %v1913 = vunpack.c.l.b16 %v1832
        %v1914 = vunpack.c.l.b16 %v1833
        %v1915 = vunpack.c.l.b16 %v1834
        %v1916 = vunpack.c.l.b16 %v1835
        %v1917 = vunpack.c.l.b16 %v1836
        %v1918 = vpack.c.b16 %v1887, %v1886
        %v1919 = vpack.c.b16 %v1889, %v1888
        %v1920 = vpack.c.b16 %v1891, %v1890
        %v1921 = vpack.c.b16 %v1893, %v1892
        %v1922 = vpack.c.b16 %v1895, %v1894
        %v1923 = vpack.c.b16 %v1897, %v1896
        %v1924 = vpack.c.b16 %v1899, %v1898
        %v1925 = vpack.c.b16 %v1901, %v1900
        %v1926 = vpack.c.b16 %v1903, %v1902
        %v1927 = vpack.c.b16 %v1905, %v1904
        %v1928 = vpack.c.b16 %v1907, %v1906
        %v1929 = vpack.c.b16 %v1909, %v1908
        %v1930 = vpack.c.b16 %v1911, %v1910
        %v1931 = vpack.c.b16 %v1913, %v1912
        %v1932 = vpack.c.b16 %v1915, %v1914
        %v1933 = vpack.c.b16 %v1917, %v1916
        %v1966 = vunpack.c.l.b16 %v1838
        %v1967 = vunpack.c.l.b16 %v1839
        %v1968 = vunpack.c.l.b16 %v1840
        %v1969 = vunpack.c.l.b16 %v1841
        %v1970 = vunpack.c.l.b16 %v1842
        %v1971 = vunpack.c.l.b16 %v1843
        %v1972 = vunpack.c.l.b16 %v1844
        %v1973 = vunpack.c.l.b16 %v1845
        %v1974 = vunpack.c.l.b16 %v1846
        %v1975 = vunpack.c.l.b16 %v1847
        %v1976 = vunpack.c.l.b16 %v1848
        %v1977 = vunpack.c.l.b16 %v1849
        %v1978 = vunpack.c.l.b16 %v1850
        %v1979 = vunpack.c.l.b16 %v1851
        %v1980 = vunpack.c.l.b16 %v1852
        %v1981 = vunpack.c.l.b16 %v1853
        %v1982 = vpack.c.b16 %v1967, %v1966
        %v1983 = vpack.c.b16 %v1969, %v1968
        %v1984 = vpack.c.b16 %v1971, %v1970
        %v1985 = vpack.c.b16 %v1973, %v1972
        %v1986 = vpack.c.b16 %v1975, %v1974
        %v1987 = vpack.c.b16 %v1977, %v1976
        %v1988 = vpack.c.b16 %v1979, %v1978
        %v1989 = vpack.c.b16 %v1981, %v1980
        %1998 = vmatprep.subr.bf16.mxu0 0
        %1999 = vmatpush1.bf16.msra.mxu0 %v1982
        %2000 = vmatprep.subr.bf16.mxu0 0
        %2001 = vmatpush1.bf16.msra.mxu0 %v1983
        %2002 = vmatprep.subr.bf16.mxu0 0
        %2003 = vmatpush1.bf16.msra.mxu0 %v1984
        %2004 = vmatprep.subr.bf16.mxu0 0
        %2005 = vmatpush1.bf16.msra.mxu0 %v1985
        %2006 = vmatprep.subr.bf16.mxu0 0
        %2007 = vmatpush1.bf16.msra.mxu0 %v1986
        %2008 = vmatprep.subr.bf16.mxu0 0
        %2009 = vmatpush1.bf16.msra.mxu0 %v1987
        %2010 = vmatprep.subr.bf16.mxu0 0
        %2011 = vmatpush1.bf16.msra.mxu0 %v1988
        %2012 = vmatprep.subr.bf16.mxu0 0
        %2013 = vmatpush1.bf16.msra.mxu0 %v1989
        %2014 = vmatprep.subr.bf16.mxu0 0
        %2015 = vmatpush1.bf16.msra.mxu0 0
        %2016 = vmatprep.subr.bf16.mxu0 0
        %2017 = vmatpush1.bf16.msra.mxu0 0
        %2018 = vmatprep.subr.bf16.mxu0 0
        %2019 = vmatpush1.bf16.msra.mxu0 0
        %2020 = vmatprep.subr.bf16.mxu0 0
        %2021 = vmatpush1.bf16.msra.mxu0 0
        %2022 = vmatprep.subr.bf16.mxu0 0
        %2023 = vmatpush1.bf16.msra.mxu0 0
        %2024 = vmatprep.subr.bf16.mxu0 0
        %2025 = vmatpush1.bf16.msra.mxu0 0
        %2026 = vmatprep.subr.bf16.mxu0 0
        %2027 = vmatpush1.bf16.msra.mxu0 0
        %2028 = vmatprep.subr.bf16.mxu0 0
        %2029 = vmatpush1.bf16.msra.mxu0 0
        %2030 = vmatprep.mubr.bf16.mxu0 0
        %2031 = vmatmul.mubr.bf16.gmra.mrb[0].mxu0 %v1918
        %v2032 = vpop.f32.mrb[0].mxu0
        %v2033 = vadd.f32 0.0, %v2032
        %v2034 = vpop.f32.mrb[0].mxu0
        %v2035 = vpop.f32.mrb[0].mxu0
        %v2036 = vadd.f32 0.0, %v2035
        %v2037 = vpop.f32.mrb[0].mxu0
        %2038 = vmatprep.mubr.bf16.mxu0 0
        %2039 = vmatmul.mubr.bf16.gmra.mrb[0].mxu0 %v1919
        %v2040 = vpop.f32.mrb[0].mxu0
        %v2041 = vadd.f32 0.0, %v2040
        %v2042 = vpop.f32.mrb[0].mxu0
        %v2043 = vpop.f32.mrb[0].mxu0
        %v2044 = vadd.f32 0.0, %v2043
        %v2045 = vpop.f32.mrb[0].mxu0
        %2046 = vmatprep.mubr.bf16.mxu0 0
        %2047 = vmatmul.mubr.bf16.gmra.mrb[0].mxu0 %v1920
        %v2048 = vpop.f32.mrb[0].mxu0
        %v2049 = vadd.f32 0.0, %v2048
        %v2050 = vpop.f32.mrb[0].mxu0
        %v2051 = vpop.f32.mrb[0].mxu0
        %v2052 = vadd.f32 0.0, %v2051
        %v2053 = vpop.f32.mrb[0].mxu0
        %2054 = vmatprep.mubr.bf16.mxu0 0
        %2055 = vmatmul.mubr.bf16.gmra.mrb[0].mxu0 %v1921
        %v2056 = vpop.f32.mrb[0].mxu0
        %v2057 = vadd.f32 0.0, %v2056
        %v2058 = vpop.f32.mrb[0].mxu0
        %v2059 = vpop.f32.mrb[0].mxu0
        %v2060 = vadd.f32 0.0, %v2059
        %v2061 = vpop.f32.mrb[0].mxu0
        %2062 = vmatprep.mubr.bf16.mxu0 0
        %2063 = vmatmul.mubr.bf16.gmra.mrb[0].mxu0 %v1922
        %v2064 = vpop.f32.mrb[0].mxu0
        %v2065 = vadd.f32 0.0, %v2064
        %v2066 = vpop.f32.mrb[0].mxu0
        %v2067 = vpop.f32.mrb[0].mxu0
        %v2068 = vadd.f32 0.0, %v2067
        %v2069 = vpop.f32.mrb[0].mxu0
        %2070 = vmatprep.mubr.bf16.mxu0 0
        %2071 = vmatmul.mubr.bf16.gmra.mrb[0].mxu0 %v1923
        %v2072 = vpop.f32.mrb[0].mxu0
        %v2073 = vadd.f32 0.0, %v2072
        %v2074 = vpop.f32.mrb[0].mxu0
        %v2075 = vpop.f32.mrb[0].mxu0
        %v2076 = vadd.f32 0.0, %v2075
        %v2077 = vpop.f32.mrb[0].mxu0
        %2078 = vmatprep.mubr.bf16.mxu0 0
        %2079 = vmatmul.mubr.bf16.gmra.mrb[0].mxu0 %v1924
        %v2080 = vpop.f32.mrb[0].mxu0
        %v2081 = vadd.f32 0.0, %v2080
        %v2082 = vpop.f32.mrb[0].mxu0
        %v2083 = vpop.f32.mrb[0].mxu0
        %v2084 = vadd.f32 0.0, %v2083
        %v2085 = vpop.f32.mrb[0].mxu0
        %2086 = vmatprep.mubr.bf16.mxu0 0
        %2087 = vmatmul.mubr.bf16.gmra.mrb[0].mxu0 %v1925
        %v2088 = vpop.f32.mrb[0].mxu0
        %v2089 = vadd.f32 0.0, %v2088
        %v2090 = vpop.f32.mrb[0].mxu0
        %v2091 = vpop.f32.mrb[0].mxu0
        %v2092 = vadd.f32 0.0, %v2091
        %v2093 = vpop.f32.mrb[0].mxu0
        %2094 = vmatprep.mubr.bf16.mxu0 0
        %2095 = vmatmul.mubr.bf16.gmra.mrb[0].mxu0 %v1926
        %v2096 = vpop.f32.mrb[0].mxu0
        %v2097 = vadd.f32 0.0, %v2096
        %v2098 = vpop.f32.mrb[0].mxu0
        %v2099 = vpop.f32.mrb[0].mxu0
        %v2100 = vadd.f32 0.0, %v2099
        %v2101 = vpop.f32.mrb[0].mxu0
        %2102 = vmatprep.mubr.bf16.mxu0 0
        %2103 = vmatmul.mubr.bf16.gmra.mrb[0].mxu0 %v1927
        %v2104 = vpop.f32.mrb[0].mxu0
        %v2105 = vadd.f32 0.0, %v2104
        %v2106 = vpop.f32.mrb[0].mxu0
        %v2107 = vpop.f32.mrb[0].mxu0
        %v2108 = vadd.f32 0.0, %v2107
        %v2109 = vpop.f32.mrb[0].mxu0
        %2110 = vmatprep.mubr.bf16.mxu0 0
        %2111 = vmatmul.mubr.bf16.gmra.mrb[0].mxu0 %v1928
        %v2112 = vpop.f32.mrb[0].mxu0
        %v2113 = vadd.f32 0.0, %v2112
        %v2114 = vpop.f32.mrb[0].mxu0
        %v2115 = vpop.f32.mrb[0].mxu0
        %v2116 = vadd.f32 0.0, %v2115
        %v2117 = vpop.f32.mrb[0].mxu0
        %2118 = vmatprep.mubr.bf16.mxu0 0
        %2119 = vmatmul.mubr.bf16.gmra.mrb[0].mxu0 %v1929
        %v2120 = vpop.f32.mrb[0].mxu0
        %v2121 = vadd.f32 0.0, %v2120
        %v2122 = vpop.f32.mrb[0].mxu0
        %v2123 = vpop.f32.mrb[0].mxu0
        %v2124 = vadd.f32 0.0, %v2123
        %v2125 = vpop.f32.mrb[0].mxu0
        %2126 = vmatprep.mubr.bf16.mxu0 0
        %2127 = vmatmul.mubr.bf16.gmra.mrb[0].mxu0 %v1930
        %v2128 = vpop.f32.mrb[0].mxu0
        %v2129 = vadd.f32 0.0, %v2128
        %v2130 = vpop.f32.mrb[0].mxu0
        %v2131 = vpop.f32.mrb[0].mxu0
        %v2132 = vadd.f32 0.0, %v2131
        %v2133 = vpop.f32.mrb[0].mxu0
        %2134 = vmatprep.mubr.bf16.mxu0 0
        %2135 = vmatmul.mubr.bf16.gmra.mrb[0].mxu0 %v1931
        %v2136 = vpop.f32.mrb[0].mxu0
        %v2137 = vadd.f32 0.0, %v2136
        %v2138 = vpop.f32.mrb[0].mxu0
        %v2139 = vpop.f32.mrb[0].mxu0
        %v2140 = vadd.f32 0.0, %v2139
        %v2141 = vpop.f32.mrb[0].mxu0
        %2142 = vmatprep.mubr.bf16.mxu0 0
        %2143 = vmatmul.mubr.bf16.gmra.mrb[0].mxu0 %v1932
        %v2144 = vpop.f32.mrb[0].mxu0
        %v2145 = vadd.f32 0.0, %v2144
        %v2146 = vpop.f32.mrb[0].mxu0
        %v2147 = vpop.f32.mrb[0].mxu0
        %v2148 = vadd.f32 0.0, %v2147
        %v2149 = vpop.f32.mrb[0].mxu0
        %2150 = vmatprep.mubr.bf16.mxu0 0
        %2151 = vmatmul.mubr.bf16.gmra.mrb[0].mxu0 %v1933
        %v2152 = vpop.f32.mrb[0].mxu0
        %v2153 = vadd.f32 0.0, %v2152
        %v2154 = vpop.f32.mrb[0].mxu0
        %v2155 = vpop.f32.mrb[0].mxu0
        %v2156 = vadd.f32 0.0, %v2155
        %v2157 = vpop.f32.mrb[0].mxu0
        %2158 = vdwg.mxu0
        %v2159 = vadd.f32 %v1769, %v2033
        %v2160 = vadd.f32 %v1770, %v2036
        %v2161 = vadd.f32 %v1771, %v2041
        %v2162 = vadd.f32 %v1772, %v2044
        %v2163 = vadd.f32 %v1773, %v2049
        %v2164 = vadd.f32 %v1774, %v2052
        %v2165 = vadd.f32 %v1775, %v2057
        %v2166 = vadd.f32 %v1776, %v2060
        %v2167 = vadd.f32 %v1777, %v2065
        %v2168 = vadd.f32 %v1778, %v2068
        %v2169 = vadd.f32 %v1779, %v2073
        %v2170 = vadd.f32 %v1780, %v2076
        %v2171 = vadd.f32 %v1781, %v2081
        %v2172 = vadd.f32 %v1782, %v2084
        %v2173 = vadd.f32 %v1783, %v2089
        %v2174 = vadd.f32 %v1784, %v2092
        %v2175 = vadd.f32 %v1785, %v2097
        %v2176 = vadd.f32 %v1786, %v2100
        %v2177 = vadd.f32 %v1787, %v2105
        %v2178 = vadd.f32 %v1788, %v2108
        %v2179 = vadd.f32 %v1789, %v2113
        %v2180 = vadd.f32 %v1790, %v2116
        %v2181 = vadd.f32 %v1791, %v2121
        %v2182 = vadd.f32 %v1792, %v2124
        %v2183 = vadd.f32 %v1793, %v2129
        %v2184 = vadd.f32 %v1794, %v2132
        %v2185 = vadd.f32 %v1795, %v2137
        %v2186 = vadd.f32 %v1796, %v2140
        %v2187 = vadd.f32 %v1797, %v2145
        %v2188 = vadd.f32 %v1798, %v2148
        %v2189 = vadd.f32 %v1799, %v2153
        %v2190 = vadd.f32 %v1800, %v2156
        %v2191 = vld [vmem:[%s1804] sm:$0xf]
        %v2192 = vld [vmem:[%s1804 + $0x4] sm:$0xf]
        %v2193 = vld [vmem:[%s1804 + $0x8] sm:$0x1]
        %v2194 = vld [vmem:[%s1804 + $0xc] sm:$0xf]
        %v2195 = vld [vmem:[%s1804 + $0x10] sm:$0xf]
        %v2196 = vld [vmem:[%s1804 + $0x14] sm:$0x1]
        %v2197 = vld [vmem:[%s1804 + $0x18] sm:$0xf]
        %v2198 = vld [vmem:[%s1804 + $0x1c] sm:$0xf]
        %v2199 = vld [vmem:[%s1804 + $0x20] sm:$0x1]
        %v2200 = vld [vmem:[%s1804 + $0x24] sm:$0xf]
        %v2201 = vld [vmem:[%s1804 + $0x28] sm:$0xf]
        %v2202 = vld [vmem:[%s1804 + $0x2c] sm:$0x1]
        %v2203 = vld [vmem:[%s1804 + $0x30] sm:$0xf]
        %v2204 = vld [vmem:[%s1804 + $0x34] sm:$0xf]
        %v2205 = vld [vmem:[%s1804 + $0x38] sm:$0x1]
        %v2206 = vld [vmem:[%s1804 + $0x3c] sm:$0xf]
        %v2207 = vld [vmem:[%s1804 + $0x40] sm:$0xf]
        %v2208 = vld [vmem:[%s1804 + $0x44] sm:$0x1]
        %v2209 = vld [vmem:[%s1804 + $0x48] sm:$0xf]
        %v2210 = vld [vmem:[%s1804 + $0x4c] sm:$0xf]
        %v2211 = vld [vmem:[%s1804 + $0x50] sm:$0x1]
        %v2212 = vld [vmem:[%s1804 + $0x54] sm:$0xf]
        %v2213 = vld [vmem:[%s1804 + $0x58] sm:$0xf]
        %v2214 = vld [vmem:[%s1804 + $0x5c] sm:$0x1]
        %v2215 = vld [vmem:[%s1804 + $0x60] sm:$0xf]
        %v2216 = vld [vmem:[%s1804 + $0x64] sm:$0xf]
        %v2217 = vld [vmem:[%s1804 + $0x68] sm:$0x1]
        %v2218 = vld [vmem:[%s1804 + $0x6c] sm:$0xf]
        %v2219 = vld [vmem:[%s1804 + $0x70] sm:$0xf]
        %v2220 = vld [vmem:[%s1804 + $0x74] sm:$0x1]
        %v2221 = vld [vmem:[%s1804 + $0x78] sm:$0xf]
        %v2222 = vld [vmem:[%s1804 + $0x7c] sm:$0xf]
        %v2223 = vld [vmem:[%s1804 + $0x80] sm:$0x1]
        %v2224 = vld [vmem:[%s1804 + $0x84] sm:$0xf]
        %v2225 = vld [vmem:[%s1804 + $0x88] sm:$0xf]
        %v2226 = vld [vmem:[%s1804 + $0x8c] sm:$0x1]
        %v2227 = vld [vmem:[%s1804 + $0x90] sm:$0xf]
        %v2228 = vld [vmem:[%s1804 + $0x94] sm:$0xf]
        %v2229 = vld [vmem:[%s1804 + $0x98] sm:$0x1]
        %v2230 = vld [vmem:[%s1804 + $0x9c] sm:$0xf]
        %v2231 = vld [vmem:[%s1804 + $0xa0] sm:$0xf]
        %v2232 = vld [vmem:[%s1804 + $0xa4] sm:$0x1]
        %v2233 = vld [vmem:[%s1804 + $0xa8] sm:$0xf]
        %v2234 = vld [vmem:[%s1804 + $0xac] sm:$0xf]
        %v2235 = vld [vmem:[%s1804 + $0xb0] sm:$0x1]
        %v2236 = vld [vmem:[%s1804 + $0xb4] sm:$0xf]
        %v2237 = vld [vmem:[%s1804 + $0xb8] sm:$0xf]
        %v2238 = vld [vmem:[%s1804 + $0xbc] sm:$0x1]
        %v2240 = vshrl.u32 %v2191, 16
        %v2242 = vrot.slane %v2240, 4
        %v2243 = vshll.u32 %v2191, 16
        %v2245 = vrot.slane %v2243, 5
        %v2246 = vor.u32 %v2242, %v2245
        %v2247 = vrot.slane %v2246, 4
        %v2249 = vshll.u32 %v2192, 16
        %v2251 = vrot.slane %v2249, 5
        %v2252 = vsel %vm336, %v2247, %v2251
        %v2253 = vshrl.u32 %v2192, 16
        %v2255 = vrot.slane %v2253, 4
        %v2256 = vor.u32 %v2255, %v2251
        %v2257 = vrot.slane %v2256, 4
        %v2259 = vshll.u32 %v2193, 16
        %v2261 = vrot.slane %v2259, 5
        %v2262 = vsel %vm336, %v2257, %v2261
        %v2264 = vshrl.u32 %v2194, 16
        %v2266 = vrot.slane %v2264, 4
        %v2267 = vshll.u32 %v2194, 16
        %v2269 = vrot.slane %v2267, 5
        %v2270 = vor.u32 %v2266, %v2269
        %v2271 = vrot.slane %v2270, 4
        %v2273 = vshll.u32 %v2195, 16
        %v2275 = vrot.slane %v2273, 5
        %v2276 = vsel %vm336, %v2271, %v2275
        %v2277 = vshrl.u32 %v2195, 16
        %v2279 = vrot.slane %v2277, 4
        %v2280 = vor.u32 %v2279, %v2275
        %v2281 = vrot.slane %v2280, 4
        %v2283 = vshll.u32 %v2196, 16
        %v2285 = vrot.slane %v2283, 5
        %v2286 = vsel %vm336, %v2281, %v2285
        %v2288 = vshrl.u32 %v2197, 16
        %v2290 = vrot.slane %v2288, 4
        %v2291 = vshll.u32 %v2197, 16
        %v2293 = vrot.slane %v2291, 5
        %v2294 = vor.u32 %v2290, %v2293
        %v2295 = vrot.slane %v2294, 4
        %v2297 = vshll.u32 %v2198, 16
        %v2299 = vrot.slane %v2297, 5
        %v2300 = vsel %vm336, %v2295, %v2299
        %v2301 = vshrl.u32 %v2198, 16
        %v2303 = vrot.slane %v2301, 4
        %v2304 = vor.u32 %v2303, %v2299
        %v2305 = vrot.slane %v2304, 4
        %v2307 = vshll.u32 %v2199, 16
        %v2309 = vrot.slane %v2307, 5
        %v2310 = vsel %vm336, %v2305, %v2309
        %v2312 = vshrl.u32 %v2200, 16
        %v2314 = vrot.slane %v2312, 4
        %v2315 = vshll.u32 %v2200, 16
        %v2317 = vrot.slane %v2315, 5
        %v2318 = vor.u32 %v2314, %v2317
        %v2319 = vrot.slane %v2318, 4
        %v2321 = vshll.u32 %v2201, 16
        %v2323 = vrot.slane %v2321, 5
        %v2324 = vsel %vm336, %v2319, %v2323
        %v2325 = vshrl.u32 %v2201, 16
        %v2327 = vrot.slane %v2325, 4
        %v2328 = vor.u32 %v2327, %v2323
        %v2329 = vrot.slane %v2328, 4
        %v2331 = vshll.u32 %v2202, 16
        %v2333 = vrot.slane %v2331, 5
        %v2334 = vsel %vm336, %v2329, %v2333
        %v2336 = vshrl.u32 %v2203, 16
        %v2338 = vrot.slane %v2336, 4
        %v2339 = vshll.u32 %v2203, 16
        %v2341 = vrot.slane %v2339, 5
        %v2342 = vor.u32 %v2338, %v2341
        %v2343 = vrot.slane %v2342, 4
        %v2345 = vshll.u32 %v2204, 16
        %v2347 = vrot.slane %v2345, 5
        %v2348 = vsel %vm336, %v2343, %v2347
        %v2349 = vshrl.u32 %v2204, 16
        %v2351 = vrot.slane %v2349, 4
        %v2352 = vor.u32 %v2351, %v2347
        %v2353 = vrot.slane %v2352, 4
        %v2355 = vshll.u32 %v2205, 16
        %v2357 = vrot.slane %v2355, 5
        %v2358 = vsel %vm336, %v2353, %v2357
        %v2360 = vshrl.u32 %v2206, 16
        %v2362 = vrot.slane %v2360, 4
        %v2363 = vshll.u32 %v2206, 16
        %v2365 = vrot.slane %v2363, 5
        %v2366 = vor.u32 %v2362, %v2365
        %v2367 = vrot.slane %v2366, 4
        %v2369 = vshll.u32 %v2207, 16
        %v2371 = vrot.slane %v2369, 5
        %v2372 = vsel %vm336, %v2367, %v2371
        %v2373 = vshrl.u32 %v2207, 16
        %v2375 = vrot.slane %v2373, 4
        %v2376 = vor.u32 %v2375, %v2371
        %v2377 = vrot.slane %v2376, 4
        %v2379 = vshll.u32 %v2208, 16
        %v2381 = vrot.slane %v2379, 5
        %v2382 = vsel %vm336, %v2377, %v2381
        %v2384 = vshrl.u32 %v2209, 16
        %v2386 = vrot.slane %v2384, 4
        %v2387 = vshll.u32 %v2209, 16
        %v2389 = vrot.slane %v2387, 5
        %v2390 = vor.u32 %v2386, %v2389
        %v2391 = vrot.slane %v2390, 4
        %v2393 = vshll.u32 %v2210, 16
        %v2395 = vrot.slane %v2393, 5
        %v2396 = vsel %vm336, %v2391, %v2395
        %v2397 = vshrl.u32 %v2210, 16
        %v2399 = vrot.slane %v2397, 4
        %v2400 = vor.u32 %v2399, %v2395
        %v2401 = vrot.slane %v2400, 4
        %v2403 = vshll.u32 %v2211, 16
        %v2405 = vrot.slane %v2403, 5
        %v2406 = vsel %vm336, %v2401, %v2405
        %v2408 = vshrl.u32 %v2212, 16
        %v2410 = vrot.slane %v2408, 4
        %v2411 = vshll.u32 %v2212, 16
        %v2413 = vrot.slane %v2411, 5
        %v2414 = vor.u32 %v2410, %v2413
        %v2415 = vrot.slane %v2414, 4
        %v2417 = vshll.u32 %v2213, 16
        %v2419 = vrot.slane %v2417, 5
        %v2420 = vsel %vm336, %v2415, %v2419
        %v2421 = vshrl.u32 %v2213, 16
        %v2423 = vrot.slane %v2421, 4
        %v2424 = vor.u32 %v2423, %v2419
        %v2425 = vrot.slane %v2424, 4
        %v2427 = vshll.u32 %v2214, 16
        %v2429 = vrot.slane %v2427, 5
        %v2430 = vsel %vm336, %v2425, %v2429
        %v2432 = vshrl.u32 %v2215, 16
        %v2434 = vrot.slane %v2432, 4
        %v2435 = vshll.u32 %v2215, 16
        %v2437 = vrot.slane %v2435, 5
        %v2438 = vor.u32 %v2434, %v2437
        %v2439 = vrot.slane %v2438, 4
        %v2441 = vshll.u32 %v2216, 16
        %v2443 = vrot.slane %v2441, 5
        %v2444 = vsel %vm336, %v2439, %v2443
        %v2445 = vshrl.u32 %v2216, 16
        %v2447 = vrot.slane %v2445, 4
        %v2448 = vor.u32 %v2447, %v2443
        %v2449 = vrot.slane %v2448, 4
        %v2451 = vshll.u32 %v2217, 16
        %v2453 = vrot.slane %v2451, 5
        %v2454 = vsel %vm336, %v2449, %v2453
        %v2456 = vshrl.u32 %v2218, 16
        %v2458 = vrot.slane %v2456, 4
        %v2459 = vshll.u32 %v2218, 16
        %v2461 = vrot.slane %v2459, 5
        %v2462 = vor.u32 %v2458, %v2461
        %v2463 = vrot.slane %v2462, 4
        %v2465 = vshll.u32 %v2219, 16
        %v2467 = vrot.slane %v2465, 5
        %v2468 = vsel %vm336, %v2463, %v2467
        %v2469 = vshrl.u32 %v2219, 16
        %v2471 = vrot.slane %v2469, 4
        %v2472 = vor.u32 %v2471, %v2467
        %v2473 = vrot.slane %v2472, 4
        %v2475 = vshll.u32 %v2220, 16
        %v2477 = vrot.slane %v2475, 5
        %v2478 = vsel %vm336, %v2473, %v2477
        %v2480 = vshrl.u32 %v2221, 16
        %v2482 = vrot.slane %v2480, 4
        %v2483 = vshll.u32 %v2221, 16
        %v2485 = vrot.slane %v2483, 5
        %v2486 = vor.u32 %v2482, %v2485
        %v2487 = vrot.slane %v2486, 4
        %v2489 = vshll.u32 %v2222, 16
        %v2491 = vrot.slane %v2489, 5
        %v2492 = vsel %vm336, %v2487, %v2491
        %v2493 = vshrl.u32 %v2222, 16
        %v2495 = vrot.slane %v2493, 4
        %v2496 = vor.u32 %v2495, %v2491
        %v2497 = vrot.slane %v2496, 4
        %v2499 = vshll.u32 %v2223, 16
        %v2501 = vrot.slane %v2499, 5
        %v2502 = vsel %vm336, %v2497, %v2501
        %v2504 = vshrl.u32 %v2224, 16
        %v2506 = vrot.slane %v2504, 4
        %v2507 = vshll.u32 %v2224, 16
        %v2509 = vrot.slane %v2507, 5
        %v2510 = vor.u32 %v2506, %v2509
        %v2511 = vrot.slane %v2510, 4
        %v2513 = vshll.u32 %v2225, 16
        %v2515 = vrot.slane %v2513, 5
        %v2516 = vsel %vm336, %v2511, %v2515
        %v2517 = vshrl.u32 %v2225, 16
        %v2519 = vrot.slane %v2517, 4
        %v2520 = vor.u32 %v2519, %v2515
        %v2521 = vrot.slane %v2520, 4
        %v2523 = vshll.u32 %v2226, 16
        %v2525 = vrot.slane %v2523, 5
        %v2526 = vsel %vm336, %v2521, %v2525
        %v2528 = vshrl.u32 %v2227, 16
        %v2530 = vrot.slane %v2528, 4
        %v2531 = vshll.u32 %v2227, 16
        %v2533 = vrot.slane %v2531, 5
        %v2534 = vor.u32 %v2530, %v2533
        %v2535 = vrot.slane %v2534, 4
        %v2537 = vshll.u32 %v2228, 16
        %v2539 = vrot.slane %v2537, 5
        %v2540 = vsel %vm336, %v2535, %v2539
        %v2541 = vshrl.u32 %v2228, 16
        %v2543 = vrot.slane %v2541, 4
        %v2544 = vor.u32 %v2543, %v2539
        %v2545 = vrot.slane %v2544, 4
        %v2547 = vshll.u32 %v2229, 16
        %v2549 = vrot.slane %v2547, 5
        %v2550 = vsel %vm336, %v2545, %v2549
        %v2552 = vshrl.u32 %v2230, 16
        %v2554 = vrot.slane %v2552, 4
        %v2555 = vshll.u32 %v2230, 16
        %v2557 = vrot.slane %v2555, 5
        %v2558 = vor.u32 %v2554, %v2557
        %v2559 = vrot.slane %v2558, 4
        %v2561 = vshll.u32 %v2231, 16
        %v2563 = vrot.slane %v2561, 5
        %v2564 = vsel %vm336, %v2559, %v2563
        %v2565 = vshrl.u32 %v2231, 16
        %v2567 = vrot.slane %v2565, 4
        %v2568 = vor.u32 %v2567, %v2563
        %v2569 = vrot.slane %v2568, 4
        %v2571 = vshll.u32 %v2232, 16
        %v2573 = vrot.slane %v2571, 5
        %v2574 = vsel %vm336, %v2569, %v2573
        %v2576 = vshrl.u32 %v2233, 16
        %v2578 = vrot.slane %v2576, 4
        %v2579 = vshll.u32 %v2233, 16
        %v2581 = vrot.slane %v2579, 5
        %v2582 = vor.u32 %v2578, %v2581
        %v2583 = vrot.slane %v2582, 4
        %v2585 = vshll.u32 %v2234, 16
        %v2587 = vrot.slane %v2585, 5
        %v2588 = vsel %vm336, %v2583, %v2587
        %v2589 = vshrl.u32 %v2234, 16
        %v2591 = vrot.slane %v2589, 4
        %v2592 = vor.u32 %v2591, %v2587
        %v2593 = vrot.slane %v2592, 4
        %v2595 = vshll.u32 %v2235, 16
        %v2597 = vrot.slane %v2595, 5
        %v2598 = vsel %vm336, %v2593, %v2597
        %v2600 = vshrl.u32 %v2236, 16
        %v2602 = vrot.slane %v2600, 4
        %v2603 = vshll.u32 %v2236, 16
        %v2605 = vrot.slane %v2603, 5
        %v2606 = vor.u32 %v2602, %v2605
        %v2607 = vrot.slane %v2606, 4
        %v2609 = vshll.u32 %v2237, 16
        %v2611 = vrot.slane %v2609, 5
        %v2612 = vsel %vm336, %v2607, %v2611
        %v2613 = vshrl.u32 %v2237, 16
        %v2615 = vrot.slane %v2613, 4
        %v2616 = vor.u32 %v2615, %v2611
        %v2617 = vrot.slane %v2616, 4
        %v2619 = vshll.u32 %v2238, 16
        %v2621 = vrot.slane %v2619, 5
        %v2622 = vsel %vm336, %v2617, %v2621
        %s2623 = scalar_lea.vmem %s257, 256
        %v2624 = vld [vmem:[%s2623] sm:$0xf]
        %v2625 = vld [vmem:[%s2623 + $0x4] sm:$0xf]
        %v2626 = vld [vmem:[%s2623 + $0x8] sm:$0xf]
        %v2627 = vld [vmem:[%s2623 + $0xc] sm:$0xf]
        %v2628 = vld [vmem:[%s2623 + $0x10] sm:$0xf]
        %v2629 = vld [vmem:[%s2623 + $0x14] sm:$0xf]
        %v2630 = vld [vmem:[%s2623 + $0x18] sm:$0xf]
        %v2631 = vld [vmem:[%s2623 + $0x1c] sm:$0xf]
        %v2632 = vld [vmem:[%s2623 + $0x20] sm:$0xf]
        %v2633 = vld [vmem:[%s2623 + $0x24] sm:$0xf]
        %v2634 = vld [vmem:[%s2623 + $0x28] sm:$0xf]
        %v2635 = vld [vmem:[%s2623 + $0x2c] sm:$0xf]
        %v2636 = vld [vmem:[%s2623 + $0x30] sm:$0xf]
        %v2637 = vld [vmem:[%s2623 + $0x34] sm:$0xf]
        %v2638 = vld [vmem:[%s2623 + $0x38] sm:$0xf]
        %v2639 = vld [vmem:[%s2623 + $0x3c] sm:$0xf]
        %v2640 = vunpack.c.l.b16 %v2252
        %v2641 = vunpack.c.l.b16 %v2262
        %v2642 = vunpack.c.l.b16 %v2276
        %v2643 = vunpack.c.l.b16 %v2286
        %v2644 = vunpack.c.l.b16 %v2300
        %v2645 = vunpack.c.l.b16 %v2310
        %v2646 = vunpack.c.l.b16 %v2324
        %v2647 = vunpack.c.l.b16 %v2334
        %v2648 = vunpack.c.l.b16 %v2348
        %v2649 = vunpack.c.l.b16 %v2358
        %v2650 = vunpack.c.l.b16 %v2372
        %v2651 = vunpack.c.l.b16 %v2382
        %v2652 = vunpack.c.l.b16 %v2396
        %v2653 = vunpack.c.l.b16 %v2406
        %v2654 = vunpack.c.l.b16 %v2420
        %v2655 = vunpack.c.l.b16 %v2430
        %v2656 = vunpack.c.l.b16 %v2444
        %v2657 = vunpack.c.l.b16 %v2454
        %v2658 = vunpack.c.l.b16 %v2468
        %v2659 = vunpack.c.l.b16 %v2478
        %v2660 = vunpack.c.l.b16 %v2492
        %v2661 = vunpack.c.l.b16 %v2502
        %v2662 = vunpack.c.l.b16 %v2516
        %v2663 = vunpack.c.l.b16 %v2526
        %v2664 = vunpack.c.l.b16 %v2540
        %v2665 = vunpack.c.l.b16 %v2550
        %v2666 = vunpack.c.l.b16 %v2564
        %v2667 = vunpack.c.l.b16 %v2574
        %v2668 = vunpack.c.l.b16 %v2588
        %v2669 = vunpack.c.l.b16 %v2598
        %v2670 = vunpack.c.l.b16 %v2612
        %v2671 = vunpack.c.l.b16 %v2622
        %v2672 = vpack.c.b16 %v2641, %v2640
        %v2673 = vpack.c.b16 %v2643, %v2642
        %v2674 = vpack.c.b16 %v2645, %v2644
        %v2675 = vpack.c.b16 %v2647, %v2646
        %v2676 = vpack.c.b16 %v2649, %v2648
        %v2677 = vpack.c.b16 %v2651, %v2650
        %v2678 = vpack.c.b16 %v2653, %v2652
        %v2679 = vpack.c.b16 %v2655, %v2654
        %v2680 = vpack.c.b16 %v2657, %v2656
        %v2681 = vpack.c.b16 %v2659, %v2658
        %v2682 = vpack.c.b16 %v2661, %v2660
        %v2683 = vpack.c.b16 %v2663, %v2662
        %v2684 = vpack.c.b16 %v2665, %v2664
        %v2685 = vpack.c.b16 %v2667, %v2666
        %v2686 = vpack.c.b16 %v2669, %v2668
        %v2687 = vpack.c.b16 %v2671, %v2670
        %v2720 = vunpack.c.l.b16 %v2624
        %v2721 = vunpack.c.l.b16 %v2625
        %v2722 = vunpack.c.l.b16 %v2626
        %v2723 = vunpack.c.l.b16 %v2627
        %v2724 = vunpack.c.l.b16 %v2628
        %v2725 = vunpack.c.l.b16 %v2629
        %v2726 = vunpack.c.l.b16 %v2630
        %v2727 = vunpack.c.l.b16 %v2631
        %v2728 = vunpack.c.l.b16 %v2632
        %v2729 = vunpack.c.l.b16 %v2633
        %v2730 = vunpack.c.l.b16 %v2634
        %v2731 = vunpack.c.l.b16 %v2635
        %v2732 = vunpack.c.l.b16 %v2636
        %v2733 = vunpack.c.l.b16 %v2637
        %v2734 = vunpack.c.l.b16 %v2638
        %v2735 = vunpack.c.l.b16 %v2639
        %v2736 = vpack.c.b16 %v2721, %v2720
        %v2737 = vpack.c.b16 %v2723, %v2722
        %v2738 = vpack.c.b16 %v2725, %v2724
        %v2739 = vpack.c.b16 %v2727, %v2726
        %v2740 = vpack.c.b16 %v2729, %v2728
        %v2741 = vpack.c.b16 %v2731, %v2730
        %v2742 = vpack.c.b16 %v2733, %v2732
        %v2743 = vpack.c.b16 %v2735, %v2734
        %2752 = vmatprep.subr.bf16.mxu0 0
        %2753 = vmatpush1.bf16.msra.mxu0 %v2736
        %2754 = vmatprep.subr.bf16.mxu0 0
        %2755 = vmatpush1.bf16.msra.mxu0 %v2737
        %2756 = vmatprep.subr.bf16.mxu0 0
        %2757 = vmatpush1.bf16.msra.mxu0 %v2738
        %2758 = vmatprep.subr.bf16.mxu0 0
        %2759 = vmatpush1.bf16.msra.mxu0 %v2739
        %2760 = vmatprep.subr.bf16.mxu0 0
        %2761 = vmatpush1.bf16.msra.mxu0 %v2740
        %2762 = vmatprep.subr.bf16.mxu0 0
        %2763 = vmatpush1.bf16.msra.mxu0 %v2741
        %2764 = vmatprep.subr.bf16.mxu0 0
        %2765 = vmatpush1.bf16.msra.mxu0 %v2742
        %2766 = vmatprep.subr.bf16.mxu0 0
        %2767 = vmatpush1.bf16.msra.mxu0 %v2743
        %2768 = vmatprep.subr.bf16.mxu0 0
        %2769 = vmatpush1.bf16.msra.mxu0 0
        %2770 = vmatprep.subr.bf16.mxu0 0
        %2771 = vmatpush1.bf16.msra.mxu0 0
        %2772 = vmatprep.subr.bf16.mxu0 0
        %2773 = vmatpush1.bf16.msra.mxu0 0
        %2774 = vmatprep.subr.bf16.mxu0 0
        %2775 = vmatpush1.bf16.msra.mxu0 0
        %2776 = vmatprep.subr.bf16.mxu0 0
        %2777 = vmatpush1.bf16.msra.mxu0 0
        %2778 = vmatprep.subr.bf16.mxu0 0
        %2779 = vmatpush1.bf16.msra.mxu0 0
        %2780 = vmatprep.subr.bf16.mxu0 0
        %2781 = vmatpush1.bf16.msra.mxu0 0
        %2782 = vmatprep.subr.bf16.mxu0 0
        %2783 = vmatpush1.bf16.msra.mxu0 0
        %2784 = vmatprep.mubr.bf16.mxu0 0
        %2785 = vmatmul.mubr.bf16.gmra.mrb[0].mxu0 %v2672
        %v2786 = vpop.f32.mrb[0].mxu0
        %v2787 = vadd.f32 0.0, %v2786
        %v2788 = vpop.f32.mrb[0].mxu0
        %v2789 = vpop.f32.mrb[0].mxu0
        %v2790 = vadd.f32 0.0, %v2789
        %v2791 = vpop.f32.mrb[0].mxu0
        %2792 = vmatprep.mubr.bf16.mxu0 0
        %2793 = vmatmul.mubr.bf16.gmra.mrb[0].mxu0 %v2673
        %v2794 = vpop.f32.mrb[0].mxu0
        %v2795 = vadd.f32 0.0, %v2794
        %v2796 = vpop.f32.mrb[0].mxu0
        %v2797 = vpop.f32.mrb[0].mxu0
        %v2798 = vadd.f32 0.0, %v2797
        %v2799 = vpop.f32.mrb[0].mxu0
        %2800 = vmatprep.mubr.bf16.mxu0 0
        %2801 = vmatmul.mubr.bf16.gmra.mrb[0].mxu0 %v2674
        %v2802 = vpop.f32.mrb[0].mxu0
        %v2803 = vadd.f32 0.0, %v2802
        %v2804 = vpop.f32.mrb[0].mxu0
        %v2805 = vpop.f32.mrb[0].mxu0
        %v2806 = vadd.f32 0.0, %v2805
        %v2807 = vpop.f32.mrb[0].mxu0
        %2808 = vmatprep.mubr.bf16.mxu0 0
        %2809 = vmatmul.mubr.bf16.gmra.mrb[0].mxu0 %v2675
        %v2810 = vpop.f32.mrb[0].mxu0
        %v2811 = vadd.f32 0.0, %v2810
        %v2812 = vpop.f32.mrb[0].mxu0
        %v2813 = vpop.f32.mrb[0].mxu0
        %v2814 = vadd.f32 0.0, %v2813
        %v2815 = vpop.f32.mrb[0].mxu0
        %2816 = vmatprep.mubr.bf16.mxu0 0
        %2817 = vmatmul.mubr.bf16.gmra.mrb[0].mxu0 %v2676
        %v2818 = vpop.f32.mrb[0].mxu0
        %v2819 = vadd.f32 0.0, %v2818
        %v2820 = vpop.f32.mrb[0].mxu0
        %v2821 = vpop.f32.mrb[0].mxu0
        %v2822 = vadd.f32 0.0, %v2821
        %v2823 = vpop.f32.mrb[0].mxu0
        %2824 = vmatprep.mubr.bf16.mxu0 0
        %2825 = vmatmul.mubr.bf16.gmra.mrb[0].mxu0 %v2677
        %v2826 = vpop.f32.mrb[0].mxu0
        %v2827 = vadd.f32 0.0, %v2826
        %v2828 = vpop.f32.mrb[0].mxu0
        %v2829 = vpop.f32.mrb[0].mxu0
        %v2830 = vadd.f32 0.0, %v2829
        %v2831 = vpop.f32.mrb[0].mxu0
        %2832 = vmatprep.mubr.bf16.mxu0 0
        %2833 = vmatmul.mubr.bf16.gmra.mrb[0].mxu0 %v2678
        %v2834 = vpop.f32.mrb[0].mxu0
        %v2835 = vadd.f32 0.0, %v2834
        %v2836 = vpop.f32.mrb[0].mxu0
        %v2837 = vpop.f32.mrb[0].mxu0
        %v2838 = vadd.f32 0.0, %v2837
        %v2839 = vpop.f32.mrb[0].mxu0
        %2840 = vmatprep.mubr.bf16.mxu0 0
        %2841 = vmatmul.mubr.bf16.gmra.mrb[0].mxu0 %v2679
        %v2842 = vpop.f32.mrb[0].mxu0
        %v2843 = vadd.f32 0.0, %v2842
        %v2844 = vpop.f32.mrb[0].mxu0
        %v2845 = vpop.f32.mrb[0].mxu0
        %v2846 = vadd.f32 0.0, %v2845
        %v2847 = vpop.f32.mrb[0].mxu0
        %2848 = vmatprep.mubr.bf16.mxu0 0
        %2849 = vmatmul.mubr.bf16.gmra.mrb[0].mxu0 %v2680
        %v2850 = vpop.f32.mrb[0].mxu0
        %v2851 = vadd.f32 0.0, %v2850
        %v2852 = vpop.f32.mrb[0].mxu0
        %v2853 = vpop.f32.mrb[0].mxu0
        %v2854 = vadd.f32 0.0, %v2853
        %v2855 = vpop.f32.mrb[0].mxu0
        %2856 = vmatprep.mubr.bf16.mxu0 0
        %2857 = vmatmul.mubr.bf16.gmra.mrb[0].mxu0 %v2681
        %v2858 = vpop.f32.mrb[0].mxu0
        %v2859 = vadd.f32 0.0, %v2858
        %v2860 = vpop.f32.mrb[0].mxu0
        %v2861 = vpop.f32.mrb[0].mxu0
        %v2862 = vadd.f32 0.0, %v2861
        %v2863 = vpop.f32.mrb[0].mxu0
        %2864 = vmatprep.mubr.bf16.mxu0 0
        %2865 = vmatmul.mubr.bf16.gmra.mrb[0].mxu0 %v2682
        %v2866 = vpop.f32.mrb[0].mxu0
        %v2867 = vadd.f32 0.0, %v2866
        %v2868 = vpop.f32.mrb[0].mxu0
        %v2869 = vpop.f32.mrb[0].mxu0
        %v2870 = vadd.f32 0.0, %v2869
        %v2871 = vpop.f32.mrb[0].mxu0
        %2872 = vmatprep.mubr.bf16.mxu0 0
        %2873 = vmatmul.mubr.bf16.gmra.mrb[0].mxu0 %v2683
        %v2874 = vpop.f32.mrb[0].mxu0
        %v2875 = vadd.f32 0.0, %v2874
        %v2876 = vpop.f32.mrb[0].mxu0
        %v2877 = vpop.f32.mrb[0].mxu0
        %v2878 = vadd.f32 0.0, %v2877
        %v2879 = vpop.f32.mrb[0].mxu0
        %2880 = vmatprep.mubr.bf16.mxu0 0
        %2881 = vmatmul.mubr.bf16.gmra.mrb[0].mxu0 %v2684
        %v2882 = vpop.f32.mrb[0].mxu0
        %v2883 = vadd.f32 0.0, %v2882
        %v2884 = vpop.f32.mrb[0].mxu0
        %v2885 = vpop.f32.mrb[0].mxu0
        %v2886 = vadd.f32 0.0, %v2885
        %v2887 = vpop.f32.mrb[0].mxu0
        %2888 = vmatprep.mubr.bf16.mxu0 0
        %2889 = vmatmul.mubr.bf16.gmra.mrb[0].mxu0 %v2685
        %v2890 = vpop.f32.mrb[0].mxu0
        %v2891 = vadd.f32 0.0, %v2890
        %v2892 = vpop.f32.mrb[0].mxu0
        %v2893 = vpop.f32.mrb[0].mxu0
        %v2894 = vadd.f32 0.0, %v2893
        %v2895 = vpop.f32.mrb[0].mxu0
        %2896 = vmatprep.mubr.bf16.mxu0 0
        %2897 = vmatmul.mubr.bf16.gmra.mrb[0].mxu0 %v2686
        %v2898 = vpop.f32.mrb[0].mxu0
        %v2899 = vadd.f32 0.0, %v2898
        %v2900 = vpop.f32.mrb[0].mxu0
        %v2901 = vpop.f32.mrb[0].mxu0
        %v2902 = vadd.f32 0.0, %v2901
        %v2903 = vpop.f32.mrb[0].mxu0
        %2904 = vmatprep.mubr.bf16.mxu0 0
        %2905 = vmatmul.mubr.bf16.gmra.mrb[0].mxu0 %v2687
        %v2906 = vpop.f32.mrb[0].mxu0
        %v2907 = vadd.f32 0.0, %v2906
        %v2908 = vpop.f32.mrb[0].mxu0
        %v2909 = vpop.f32.mrb[0].mxu0
        %v2910 = vadd.f32 0.0, %v2909
        %v2911 = vpop.f32.mrb[0].mxu0
        %2912 = vdwg.mxu0
        %v2913 = vadd.f32 %v2159, %v2787
        %v2914 = vadd.f32 %v2160, %v2790
        %v2915 = vadd.f32 %v2161, %v2795
        %v2916 = vadd.f32 %v2162, %v2798
        %v2917 = vadd.f32 %v2163, %v2803
        %v2918 = vadd.f32 %v2164, %v2806
        %v2919 = vadd.f32 %v2165, %v2811
        %v2920 = vadd.f32 %v2166, %v2814
        %v2921 = vadd.f32 %v2167, %v2819
        %v2922 = vadd.f32 %v2168, %v2822
        %v2923 = vadd.f32 %v2169, %v2827
        %v2924 = vadd.f32 %v2170, %v2830
        %v2925 = vadd.f32 %v2171, %v2835
        %v2926 = vadd.f32 %v2172, %v2838
        %v2927 = vadd.f32 %v2173, %v2843
        %v2928 = vadd.f32 %v2174, %v2846
        %v2929 = vadd.f32 %v2175, %v2851
        %v2930 = vadd.f32 %v2176, %v2854
        %v2931 = vadd.f32 %v2177, %v2859
        %v2932 = vadd.f32 %v2178, %v2862
        %v2933 = vadd.f32 %v2179, %v2867
        %v2934 = vadd.f32 %v2180, %v2870
        %v2935 = vadd.f32 %v2181, %v2875
        %v2936 = vadd.f32 %v2182, %v2878
        %v2937 = vadd.f32 %v2183, %v2883
        %v2938 = vadd.f32 %v2184, %v2886
        %v2939 = vadd.f32 %v2185, %v2891
        %v2940 = vadd.f32 %v2186, %v2894
        %v2941 = vadd.f32 %v2187, %v2899
        %v2942 = vadd.f32 %v2188, %v2902
        %v2943 = vadd.f32 %v2189, %v2907
        %v2944 = vadd.f32 %v2190, %v2910
        %v2945 = vld [vmem:[%s1804] sm:$0xe]
        %v2946 = vld [vmem:[%s1804 + $0xc] sm:$0xe]
        %v2947 = vld [vmem:[%s1804 + $0x18] sm:$0xe]
        %v2948 = vld [vmem:[%s1804 + $0x24] sm:$0xe]
        %v2949 = vld [vmem:[%s1804 + $0x30] sm:$0xe]
        %v2950 = vld [vmem:[%s1804 + $0x3c] sm:$0xe]
        %v2951 = vld [vmem:[%s1804 + $0x48] sm:$0xe]
        %v2952 = vld [vmem:[%s1804 + $0x54] sm:$0xe]
        %v2953 = vld [vmem:[%s1804 + $0x60] sm:$0xe]
        %v2954 = vld [vmem:[%s1804 + $0x6c] sm:$0xe]
        %v2955 = vld [vmem:[%s1804 + $0x78] sm:$0xe]
        %v2956 = vld [vmem:[%s1804 + $0x84] sm:$0xe]
        %v2957 = vld [vmem:[%s1804 + $0x90] sm:$0xe]
        %v2958 = vld [vmem:[%s1804 + $0x9c] sm:$0xe]
        %v2959 = vld [vmem:[%s1804 + $0xa8] sm:$0xe]
        %v2960 = vld [vmem:[%s1804 + $0xb4] sm:$0xe]
        %v3009 = vrot.slane %v2945, 5
        %v3010 = vrot.slane %v3009, 4
        %v3011 = vrot.slane %v2192, 5
        %v3012 = vsel %vm1366, %v3010, %v3011
        %v3013 = vrot.slane %v3011, 4
        %v3014 = vrot.slane %v2193, 5
        %v3015 = vsel %vm1366, %v3013, %v3014
        %v3016 = vrot.slane %v2946, 5
        %v3017 = vrot.slane %v3016, 4
        %v3018 = vrot.slane %v2195, 5
        %v3019 = vsel %vm1366, %v3017, %v3018
        %v3020 = vrot.slane %v3018, 4
        %v3021 = vrot.slane %v2196, 5
        %v3022 = vsel %vm1366, %v3020, %v3021
        %v3023 = vrot.slane %v2947, 5
        %v3024 = vrot.slane %v3023, 4
        %v3025 = vrot.slane %v2198, 5
        %v3026 = vsel %vm1366, %v3024, %v3025
        %v3027 = vrot.slane %v3025, 4
        %v3028 = vrot.slane %v2199, 5
        %v3029 = vsel %vm1366, %v3027, %v3028
        %v3030 = vrot.slane %v2948, 5
        %v3031 = vrot.slane %v3030, 4
        %v3032 = vrot.slane %v2201, 5
        %v3033 = vsel %vm1366, %v3031, %v3032
        %v3034 = vrot.slane %v3032, 4
        %v3035 = vrot.slane %v2202, 5
        %v3036 = vsel %vm1366, %v3034, %v3035
        %v3037 = vrot.slane %v2949, 5
        %v3038 = vrot.slane %v3037, 4
        %v3039 = vrot.slane %v2204, 5
        %v3040 = vsel %vm1366, %v3038, %v3039
        %v3041 = vrot.slane %v3039, 4
        %v3042 = vrot.slane %v2205, 5
        %v3043 = vsel %vm1366, %v3041, %v3042
        %v3044 = vrot.slane %v2950, 5
        %v3045 = vrot.slane %v3044, 4
        %v3046 = vrot.slane %v2207, 5
        %v3047 = vsel %vm1366, %v3045, %v3046
        %v3048 = vrot.slane %v3046, 4
        %v3049 = vrot.slane %v2208, 5
        %v3050 = vsel %vm1366, %v3048, %v3049
        %v3051 = vrot.slane %v2951, 5
        %v3052 = vrot.slane %v3051, 4
        %v3053 = vrot.slane %v2210, 5
        %v3054 = vsel %vm1366, %v3052, %v3053
        %v3055 = vrot.slane %v3053, 4
        %v3056 = vrot.slane %v2211, 5
        %v3057 = vsel %vm1366, %v3055, %v3056
        %v3058 = vrot.slane %v2952, 5
        %v3059 = vrot.slane %v3058, 4
        %v3060 = vrot.slane %v2213, 5
        %v3061 = vsel %vm1366, %v3059, %v3060
        %v3062 = vrot.slane %v3060, 4
        %v3063 = vrot.slane %v2214, 5
        %v3064 = vsel %vm1366, %v3062, %v3063
        %v3065 = vrot.slane %v2953, 5
        %v3066 = vrot.slane %v3065, 4
        %v3067 = vrot.slane %v2216, 5
        %v3068 = vsel %vm1366, %v3066, %v3067
        %v3069 = vrot.slane %v3067, 4
        %v3070 = vrot.slane %v2217, 5
        %v3071 = vsel %vm1366, %v3069, %v3070
        %v3072 = vrot.slane %v2954, 5
        %v3073 = vrot.slane %v3072, 4
        %v3074 = vrot.slane %v2219, 5
        %v3075 = vsel %vm1366, %v3073, %v3074
        %v3076 = vrot.slane %v3074, 4
        %v3077 = vrot.slane %v2220, 5
        %v3078 = vsel %vm1366, %v3076, %v3077
        %v3079 = vrot.slane %v2955, 5
        %v3080 = vrot.slane %v3079, 4
        %v3081 = vrot.slane %v2222, 5
        %v3082 = vsel %vm1366, %v3080, %v3081
        %v3083 = vrot.slane %v3081, 4
        %v3084 = vrot.slane %v2223, 5
        %v3085 = vsel %vm1366, %v3083, %v3084
        %v3086 = vrot.slane %v2956, 5
        %v3087 = vrot.slane %v3086, 4
        %v3088 = vrot.slane %v2225, 5
        %v3089 = vsel %vm1366, %v3087, %v3088
        %v3090 = vrot.slane %v3088, 4
        %v3091 = vrot.slane %v2226, 5
        %v3092 = vsel %vm1366, %v3090, %v3091
        %v3093 = vrot.slane %v2957, 5
        %v3094 = vrot.slane %v3093, 4
        %v3095 = vrot.slane %v2228, 5
        %v3096 = vsel %vm1366, %v3094, %v3095
        %v3097 = vrot.slane %v3095, 4
        %v3098 = vrot.slane %v2229, 5
        %v3099 = vsel %vm1366, %v3097, %v3098
        %v3100 = vrot.slane %v2958, 5
        %v3101 = vrot.slane %v3100, 4
        %v3102 = vrot.slane %v2231, 5
        %v3103 = vsel %vm1366, %v3101, %v3102
        %v3104 = vrot.slane %v3102, 4
        %v3105 = vrot.slane %v2232, 5
        %v3106 = vsel %vm1366, %v3104, %v3105
        %v3107 = vrot.slane %v2959, 5
        %v3108 = vrot.slane %v3107, 4
        %v3109 = vrot.slane %v2234, 5
        %v3110 = vsel %vm1366, %v3108, %v3109
        %v3111 = vrot.slane %v3109, 4
        %v3112 = vrot.slane %v2235, 5
        %v3113 = vsel %vm1366, %v3111, %v3112
        %v3114 = vrot.slane %v2960, 5
        %v3115 = vrot.slane %v3114, 4
        %v3116 = vrot.slane %v2237, 5
        %v3117 = vsel %vm1366, %v3115, %v3116
        %v3118 = vrot.slane %v3116, 4
        %v3119 = vrot.slane %v2238, 5
        %v3120 = vsel %vm1366, %v3118, %v3119
        %s3121 = scalar_lea.vmem %s257, 320
        %v3122 = vld [vmem:[%s3121] sm:$0xf]
        %v3123 = vld [vmem:[%s3121 + $0x4] sm:$0xf]
        %v3124 = vld [vmem:[%s3121 + $0x8] sm:$0xf]
        %v3125 = vld [vmem:[%s3121 + $0xc] sm:$0xf]
        %v3126 = vld [vmem:[%s3121 + $0x10] sm:$0xf]
        %v3127 = vld [vmem:[%s3121 + $0x14] sm:$0xf]
        %v3128 = vld [vmem:[%s3121 + $0x18] sm:$0xf]
        %v3129 = vld [vmem:[%s3121 + $0x1c] sm:$0xf]
        %v3130 = vld [vmem:[%s3121 + $0x20] sm:$0xf]
        %v3131 = vld [vmem:[%s3121 + $0x24] sm:$0xf]
        %v3132 = vld [vmem:[%s3121 + $0x28] sm:$0xf]
        %v3133 = vld [vmem:[%s3121 + $0x2c] sm:$0xf]
        %v3134 = vld [vmem:[%s3121 + $0x30] sm:$0xf]
        %v3135 = vld [vmem:[%s3121 + $0x34] sm:$0xf]
        %v3136 = vld [vmem:[%s3121 + $0x38] sm:$0xf]
        %v3137 = vld [vmem:[%s3121 + $0x3c] sm:$0xf]
        %v3138 = vunpack.c.l.b16 %v3012
        %v3139 = vunpack.c.l.b16 %v3015
        %v3140 = vunpack.c.l.b16 %v3019
        %v3141 = vunpack.c.l.b16 %v3022
        %v3142 = vunpack.c.l.b16 %v3026
        %v3143 = vunpack.c.l.b16 %v3029
        %v3144 = vunpack.c.l.b16 %v3033
        %v3145 = vunpack.c.l.b16 %v3036
        %v3146 = vunpack.c.l.b16 %v3040
        %v3147 = vunpack.c.l.b16 %v3043
        %v3148 = vunpack.c.l.b16 %v3047
        %v3149 = vunpack.c.l.b16 %v3050
        %v3150 = vunpack.c.l.b16 %v3054
        %v3151 = vunpack.c.l.b16 %v3057
        %v3152 = vunpack.c.l.b16 %v3061
        %v3153 = vunpack.c.l.b16 %v3064
        %v3154 = vunpack.c.l.b16 %v3068
        %v3155 = vunpack.c.l.b16 %v3071
        %v3156 = vunpack.c.l.b16 %v3075
        %v3157 = vunpack.c.l.b16 %v3078
        %v3158 = vunpack.c.l.b16 %v3082
        %v3159 = vunpack.c.l.b16 %v3085
        %v3160 = vunpack.c.l.b16 %v3089
        %v3161 = vunpack.c.l.b16 %v3092
        %v3162 = vunpack.c.l.b16 %v3096
        %v3163 = vunpack.c.l.b16 %v3099
        %v3164 = vunpack.c.l.b16 %v3103
        %v3165 = vunpack.c.l.b16 %v3106
        %v3166 = vunpack.c.l.b16 %v3110
        %v3167 = vunpack.c.l.b16 %v3113
        %v3168 = vunpack.c.l.b16 %v3117
        %v3169 = vunpack.c.l.b16 %v3120
        %v3170 = vpack.c.b16 %v3139, %v3138
        %v3171 = vpack.c.b16 %v3141, %v3140
        %v3172 = vpack.c.b16 %v3143, %v3142
        %v3173 = vpack.c.b16 %v3145, %v3144
        %v3174 = vpack.c.b16 %v3147, %v3146
        %v3175 = vpack.c.b16 %v3149, %v3148
        %v3176 = vpack.c.b16 %v3151, %v3150
        %v3177 = vpack.c.b16 %v3153, %v3152
        %v3178 = vpack.c.b16 %v3155, %v3154
        %v3179 = vpack.c.b16 %v3157, %v3156
        %v3180 = vpack.c.b16 %v3159, %v3158
        %v3181 = vpack.c.b16 %v3161, %v3160
        %v3182 = vpack.c.b16 %v3163, %v3162
        %v3183 = vpack.c.b16 %v3165, %v3164
        %v3184 = vpack.c.b16 %v3167, %v3166
        %v3185 = vpack.c.b16 %v3169, %v3168
        %v3218 = vunpack.c.l.b16 %v3122
        %v3219 = vunpack.c.l.b16 %v3123
        %v3220 = vunpack.c.l.b16 %v3124
        %v3221 = vunpack.c.l.b16 %v3125
        %v3222 = vunpack.c.l.b16 %v3126
        %v3223 = vunpack.c.l.b16 %v3127
        %v3224 = vunpack.c.l.b16 %v3128
        %v3225 = vunpack.c.l.b16 %v3129
        %v3226 = vunpack.c.l.b16 %v3130
        %v3227 = vunpack.c.l.b16 %v3131
        %v3228 = vunpack.c.l.b16 %v3132
        %v3229 = vunpack.c.l.b16 %v3133
        %v3230 = vunpack.c.l.b16 %v3134
        %v3231 = vunpack.c.l.b16 %v3135
        %v3232 = vunpack.c.l.b16 %v3136
        %v3233 = vunpack.c.l.b16 %v3137
        %v3234 = vpack.c.b16 %v3219, %v3218
        %v3235 = vpack.c.b16 %v3221, %v3220
        %v3236 = vpack.c.b16 %v3223, %v3222
        %v3237 = vpack.c.b16 %v3225, %v3224
        %v3238 = vpack.c.b16 %v3227, %v3226
        %v3239 = vpack.c.b16 %v3229, %v3228
        %v3240 = vpack.c.b16 %v3231, %v3230
        %v3241 = vpack.c.b16 %v3233, %v3232
        %3250 = vmatprep.subr.bf16.mxu0 0
        %3251 = vmatpush1.bf16.msra.mxu0 %v3234
        %3252 = vmatprep.subr.bf16.mxu0 0
        %3253 = vmatpush1.bf16.msra.mxu0 %v3235
        %3254 = vmatprep.subr.bf16.mxu0 0
        %3255 = vmatpush1.bf16.msra.mxu0 %v3236
        %3256 = vmatprep.subr.bf16.mxu0 0
        %3257 = vmatpush1.bf16.msra.mxu0 %v3237
        %3258 = vmatprep.subr.bf16.mxu0 0
        %3259 = vmatpush1.bf16.msra.mxu0 %v3238
        %3260 = vmatprep.subr.bf16.mxu0 0
        %3261 = vmatpush1.bf16.msra.mxu0 %v3239
        %3262 = vmatprep.subr.bf16.mxu0 0
        %3263 = vmatpush1.bf16.msra.mxu0 %v3240
        %3264 = vmatprep.subr.bf16.mxu0 0
        %3265 = vmatpush1.bf16.msra.mxu0 %v3241
        %3266 = vmatprep.subr.bf16.mxu0 0
        %3267 = vmatpush1.bf16.msra.mxu0 0
        %3268 = vmatprep.subr.bf16.mxu0 0
        %3269 = vmatpush1.bf16.msra.mxu0 0
        %3270 = vmatprep.subr.bf16.mxu0 0
        %3271 = vmatpush1.bf16.msra.mxu0 0
        %3272 = vmatprep.subr.bf16.mxu0 0
        %3273 = vmatpush1.bf16.msra.mxu0 0
        %3274 = vmatprep.subr.bf16.mxu0 0
        %3275 = vmatpush1.bf16.msra.mxu0 0
        %3276 = vmatprep.subr.bf16.mxu0 0
        %3277 = vmatpush1.bf16.msra.mxu0 0
        %3278 = vmatprep.subr.bf16.mxu0 0
        %3279 = vmatpush1.bf16.msra.mxu0 0
        %3280 = vmatprep.subr.bf16.mxu0 0
        %3281 = vmatpush1.bf16.msra.mxu0 0
        %3282 = vmatprep.mubr.bf16.mxu0 0
        %3283 = vmatmul.mubr.bf16.gmra.mrb[0].mxu0 %v3170
        %v3284 = vpop.f32.mrb[0].mxu0
        %v3285 = vadd.f32 0.0, %v3284
        %v3286 = vpop.f32.mrb[0].mxu0
        %v3287 = vpop.f32.mrb[0].mxu0
        %v3288 = vadd.f32 0.0, %v3287
        %v3289 = vpop.f32.mrb[0].mxu0
        %3290 = vmatprep.mubr.bf16.mxu0 0
        %3291 = vmatmul.mubr.bf16.gmra.mrb[0].mxu0 %v3171
        %v3292 = vpop.f32.mrb[0].mxu0
        %v3293 = vadd.f32 0.0, %v3292
        %v3294 = vpop.f32.mrb[0].mxu0
        %v3295 = vpop.f32.mrb[0].mxu0
        %v3296 = vadd.f32 0.0, %v3295
        %v3297 = vpop.f32.mrb[0].mxu0
        %3298 = vmatprep.mubr.bf16.mxu0 0
        %3299 = vmatmul.mubr.bf16.gmra.mrb[0].mxu0 %v3172
        %v3300 = vpop.f32.mrb[0].mxu0
        %v3301 = vadd.f32 0.0, %v3300
        %v3302 = vpop.f32.mrb[0].mxu0
        %v3303 = vpop.f32.mrb[0].mxu0
        %v3304 = vadd.f32 0.0, %v3303
        %v3305 = vpop.f32.mrb[0].mxu0
        %3306 = vmatprep.mubr.bf16.mxu0 0
        %3307 = vmatmul.mubr.bf16.gmra.mrb[0].mxu0 %v3173
        %v3308 = vpop.f32.mrb[0].mxu0
        %v3309 = vadd.f32 0.0, %v3308
        %v3310 = vpop.f32.mrb[0].mxu0
        %v3311 = vpop.f32.mrb[0].mxu0
        %v3312 = vadd.f32 0.0, %v3311
        %v3313 = vpop.f32.mrb[0].mxu0
        %3314 = vmatprep.mubr.bf16.mxu0 0
        %3315 = vmatmul.mubr.bf16.gmra.mrb[0].mxu0 %v3174
        %v3316 = vpop.f32.mrb[0].mxu0
        %v3317 = vadd.f32 0.0, %v3316
        %v3318 = vpop.f32.mrb[0].mxu0
        %v3319 = vpop.f32.mrb[0].mxu0
        %v3320 = vadd.f32 0.0, %v3319
        %v3321 = vpop.f32.mrb[0].mxu0
        %3322 = vmatprep.mubr.bf16.mxu0 0
        %3323 = vmatmul.mubr.bf16.gmra.mrb[0].mxu0 %v3175
        %v3324 = vpop.f32.mrb[0].mxu0
        %v3325 = vadd.f32 0.0, %v3324
        %v3326 = vpop.f32.mrb[0].mxu0
        %v3327 = vpop.f32.mrb[0].mxu0
        %v3328 = vadd.f32 0.0, %v3327
        %v3329 = vpop.f32.mrb[0].mxu0
        %3330 = vmatprep.mubr.bf16.mxu0 0
        %3331 = vmatmul.mubr.bf16.gmra.mrb[0].mxu0 %v3176
        %v3332 = vpop.f32.mrb[0].mxu0
        %v3333 = vadd.f32 0.0, %v3332
        %v3334 = vpop.f32.mrb[0].mxu0
        %v3335 = vpop.f32.mrb[0].mxu0
        %v3336 = vadd.f32 0.0, %v3335
        %v3337 = vpop.f32.mrb[0].mxu0
        %3338 = vmatprep.mubr.bf16.mxu0 0
        %3339 = vmatmul.mubr.bf16.gmra.mrb[0].mxu0 %v3177
        %v3340 = vpop.f32.mrb[0].mxu0
        %v3341 = vadd.f32 0.0, %v3340
        %v3342 = vpop.f32.mrb[0].mxu0
        %v3343 = vpop.f32.mrb[0].mxu0
        %v3344 = vadd.f32 0.0, %v3343
        %v3345 = vpop.f32.mrb[0].mxu0
        %3346 = vmatprep.mubr.bf16.mxu0 0
        %3347 = vmatmul.mubr.bf16.gmra.mrb[0].mxu0 %v3178
        %v3348 = vpop.f32.mrb[0].mxu0
        %v3349 = vadd.f32 0.0, %v3348
        %v3350 = vpop.f32.mrb[0].mxu0
        %v3351 = vpop.f32.mrb[0].mxu0
        %v3352 = vadd.f32 0.0, %v3351
        %v3353 = vpop.f32.mrb[0].mxu0
        %3354 = vmatprep.mubr.bf16.mxu0 0
        %3355 = vmatmul.mubr.bf16.gmra.mrb[0].mxu0 %v3179
        %v3356 = vpop.f32.mrb[0].mxu0
        %v3357 = vadd.f32 0.0, %v3356
        %v3358 = vpop.f32.mrb[0].mxu0
        %v3359 = vpop.f32.mrb[0].mxu0
        %v3360 = vadd.f32 0.0, %v3359
        %v3361 = vpop.f32.mrb[0].mxu0
        %3362 = vmatprep.mubr.bf16.mxu0 0
        %3363 = vmatmul.mubr.bf16.gmra.mrb[0].mxu0 %v3180
        %v3364 = vpop.f32.mrb[0].mxu0
        %v3365 = vadd.f32 0.0, %v3364
        %v3366 = vpop.f32.mrb[0].mxu0
        %v3367 = vpop.f32.mrb[0].mxu0
        %v3368 = vadd.f32 0.0, %v3367
        %v3369 = vpop.f32.mrb[0].mxu0
        %3370 = vmatprep.mubr.bf16.mxu0 0
        %3371 = vmatmul.mubr.bf16.gmra.mrb[0].mxu0 %v3181
        %v3372 = vpop.f32.mrb[0].mxu0
        %v3373 = vadd.f32 0.0, %v3372
        %v3374 = vpop.f32.mrb[0].mxu0
        %v3375 = vpop.f32.mrb[0].mxu0
        %v3376 = vadd.f32 0.0, %v3375
        %v3377 = vpop.f32.mrb[0].mxu0
        %3378 = vmatprep.mubr.bf16.mxu0 0
        %3379 = vmatmul.mubr.bf16.gmra.mrb[0].mxu0 %v3182
        %v3380 = vpop.f32.mrb[0].mxu0
        %v3381 = vadd.f32 0.0, %v3380
        %v3382 = vpop.f32.mrb[0].mxu0
        %v3383 = vpop.f32.mrb[0].mxu0
        %v3384 = vadd.f32 0.0, %v3383
        %v3385 = vpop.f32.mrb[0].mxu0
        %3386 = vmatprep.mubr.bf16.mxu0 0
        %3387 = vmatmul.mubr.bf16.gmra.mrb[0].mxu0 %v3183
        %v3388 = vpop.f32.mrb[0].mxu0
        %v3389 = vadd.f32 0.0, %v3388
        %v3390 = vpop.f32.mrb[0].mxu0
        %v3391 = vpop.f32.mrb[0].mxu0
        %v3392 = vadd.f32 0.0, %v3391
        %v3393 = vpop.f32.mrb[0].mxu0
        %3394 = vmatprep.mubr.bf16.mxu0 0
        %3395 = vmatmul.mubr.bf16.gmra.mrb[0].mxu0 %v3184
        %v3396 = vpop.f32.mrb[0].mxu0
        %v3397 = vadd.f32 0.0, %v3396
        %v3398 = vpop.f32.mrb[0].mxu0
        %v3399 = vpop.f32.mrb[0].mxu0
        %v3400 = vadd.f32 0.0, %v3399
        %v3401 = vpop.f32.mrb[0].mxu0
        %3402 = vmatprep.mubr.bf16.mxu0 0
        %3403 = vmatmul.mubr.bf16.gmra.mrb[0].mxu0 %v3185
        %v3404 = vpop.f32.mrb[0].mxu0
        %v3405 = vadd.f32 0.0, %v3404
        %v3406 = vpop.f32.mrb[0].mxu0
        %v3407 = vpop.f32.mrb[0].mxu0
        %v3408 = vadd.f32 0.0, %v3407
        %v3409 = vpop.f32.mrb[0].mxu0
        %3410 = vdwg.mxu0
        %v3411 = vadd.f32 %v2913, %v3285
        %v3412 = vadd.f32 %v2914, %v3288
        %v3413 = vadd.f32 %v2915, %v3293
        %v3414 = vadd.f32 %v2916, %v3296
        %v3415 = vadd.f32 %v2917, %v3301
        %v3416 = vadd.f32 %v2918, %v3304
        %v3417 = vadd.f32 %v2919, %v3309
        %v3418 = vadd.f32 %v2920, %v3312
        %v3419 = vadd.f32 %v2921, %v3317
        %v3420 = vadd.f32 %v2922, %v3320
        %v3421 = vadd.f32 %v2923, %v3325
        %v3422 = vadd.f32 %v2924, %v3328
        %v3423 = vadd.f32 %v2925, %v3333
        %v3424 = vadd.f32 %v2926, %v3336
        %v3425 = vadd.f32 %v2927, %v3341
        %v3426 = vadd.f32 %v2928, %v3344
        %v3427 = vadd.f32 %v2929, %v3349
        %v3428 = vadd.f32 %v2930, %v3352
        %v3429 = vadd.f32 %v2931, %v3357
        %v3430 = vadd.f32 %v2932, %v3360
        %v3431 = vadd.f32 %v2933, %v3365
        %v3432 = vadd.f32 %v2934, %v3368
        %v3433 = vadd.f32 %v2935, %v3373
        %v3434 = vadd.f32 %v2936, %v3376
        %v3435 = vadd.f32 %v2937, %v3381
        %v3436 = vadd.f32 %v2938, %v3384
        %v3437 = vadd.f32 %v2939, %v3389
        %v3438 = vadd.f32 %v2940, %v3392
        %v3439 = vadd.f32 %v2941, %v3397
        %v3440 = vadd.f32 %v2942, %v3400
        %v3441 = vadd.f32 %v2943, %v3405
        %v3442 = vadd.f32 %v2944, %v3408
        %s3443 = sadd.s32 %s266, 2
        %s3444 = smul.u32 %s3443, 3
        %s3445 = smul.addr %s3444, 4
        %s3446 = scalar_lea.vmem %s253, %s3445
        %v3447 = vld [vmem:[%s3446] sm:$0xf]
        %v3448 = vld [vmem:[%s3446 + $0x4] sm:$0xf]
        %v3449 = vld [vmem:[%s3446 + $0xc] sm:$0xf]
        %v3450 = vld [vmem:[%s3446 + $0x10] sm:$0xf]
        %v3451 = vld [vmem:[%s3446 + $0x18] sm:$0xf]
        %v3452 = vld [vmem:[%s3446 + $0x1c] sm:$0xf]
        %v3453 = vld [vmem:[%s3446 + $0x24] sm:$0xf]
        %v3454 = vld [vmem:[%s3446 + $0x28] sm:$0xf]
        %v3455 = vld [vmem:[%s3446 + $0x30] sm:$0xf]
        %v3456 = vld [vmem:[%s3446 + $0x34] sm:$0xf]
        %v3457 = vld [vmem:[%s3446 + $0x3c] sm:$0xf]
        %v3458 = vld [vmem:[%s3446 + $0x40] sm:$0xf]
        %v3459 = vld [vmem:[%s3446 + $0x48] sm:$0xf]
        %v3460 = vld [vmem:[%s3446 + $0x4c] sm:$0xf]
        %v3461 = vld [vmem:[%s3446 + $0x54] sm:$0xf]
        %v3462 = vld [vmem:[%s3446 + $0x58] sm:$0xf]
        %v3463 = vld [vmem:[%s3446 + $0x60] sm:$0xf]
        %v3464 = vld [vmem:[%s3446 + $0x64] sm:$0xf]
        %v3465 = vld [vmem:[%s3446 + $0x6c] sm:$0xf]
        %v3466 = vld [vmem:[%s3446 + $0x70] sm:$0xf]
        %v3467 = vld [vmem:[%s3446 + $0x78] sm:$0xf]
        %v3468 = vld [vmem:[%s3446 + $0x7c] sm:$0xf]
        %v3469 = vld [vmem:[%s3446 + $0x84] sm:$0xf]
        %v3470 = vld [vmem:[%s3446 + $0x88] sm:$0xf]
        %v3471 = vld [vmem:[%s3446 + $0x90] sm:$0xf]
        %v3472 = vld [vmem:[%s3446 + $0x94] sm:$0xf]
        %v3473 = vld [vmem:[%s3446 + $0x9c] sm:$0xf]
        %v3474 = vld [vmem:[%s3446 + $0xa0] sm:$0xf]
        %v3475 = vld [vmem:[%s3446 + $0xa8] sm:$0xf]
        %v3476 = vld [vmem:[%s3446 + $0xac] sm:$0xf]
        %v3477 = vld [vmem:[%s3446 + $0xb4] sm:$0xf]
        %v3478 = vld [vmem:[%s3446 + $0xb8] sm:$0xf]
        %s3479 = scalar_lea.vmem %s257, 384
        %v3480 = vld [vmem:[%s3479] sm:$0xf]
        %v3481 = vld [vmem:[%s3479 + $0x4] sm:$0xf]
        %v3482 = vld [vmem:[%s3479 + $0x8] sm:$0xf]
        %v3483 = vld [vmem:[%s3479 + $0xc] sm:$0xf]
        %v3484 = vld [vmem:[%s3479 + $0x10] sm:$0xf]
        %v3485 = vld [vmem:[%s3479 + $0x14] sm:$0xf]
        %v3486 = vld [vmem:[%s3479 + $0x18] sm:$0xf]
        %v3487 = vld [vmem:[%s3479 + $0x1c] sm:$0xf]
        %v3488 = vld [vmem:[%s3479 + $0x20] sm:$0xf]
        %v3489 = vld [vmem:[%s3479 + $0x24] sm:$0xf]
        %v3490 = vld [vmem:[%s3479 + $0x28] sm:$0xf]
        %v3491 = vld [vmem:[%s3479 + $0x2c] sm:$0xf]
        %v3492 = vld [vmem:[%s3479 + $0x30] sm:$0xf]
        %v3493 = vld [vmem:[%s3479 + $0x34] sm:$0xf]
        %v3494 = vld [vmem:[%s3479 + $0x38] sm:$0xf]
        %v3495 = vld [vmem:[%s3479 + $0x3c] sm:$0xf]
        %v3528 = vunpack.c.l.b16 %v3447
        %v3529 = vunpack.c.l.b16 %v3448
        %v3530 = vunpack.c.l.b16 %v3449
        %v3531 = vunpack.c.l.b16 %v3450
        %v3532 = vunpack.c.l.b16 %v3451
        %v3533 = vunpack.c.l.b16 %v3452
        %v3534 = vunpack.c.l.b16 %v3453
        %v3535 = vunpack.c.l.b16 %v3454
        %v3536 = vunpack.c.l.b16 %v3455
        %v3537 = vunpack.c.l.b16 %v3456
        %v3538 = vunpack.c.l.b16 %v3457
        %v3539 = vunpack.c.l.b16 %v3458
        %v3540 = vunpack.c.l.b16 %v3459
        %v3541 = vunpack.c.l.b16 %v3460
        %v3542 = vunpack.c.l.b16 %v3461
        %v3543 = vunpack.c.l.b16 %v3462
        %v3544 = vunpack.c.l.b16 %v3463
        %v3545 = vunpack.c.l.b16 %v3464
        %v3546 = vunpack.c.l.b16 %v3465
        %v3547 = vunpack.c.l.b16 %v3466
        %v3548 = vunpack.c.l.b16 %v3467
        %v3549 = vunpack.c.l.b16 %v3468
        %v3550 = vunpack.c.l.b16 %v3469
        %v3551 = vunpack.c.l.b16 %v3470
        %v3552 = vunpack.c.l.b16 %v3471
        %v3553 = vunpack.c.l.b16 %v3472
        %v3554 = vunpack.c.l.b16 %v3473
        %v3555 = vunpack.c.l.b16 %v3474
        %v3556 = vunpack.c.l.b16 %v3475
        %v3557 = vunpack.c.l.b16 %v3476
        %v3558 = vunpack.c.l.b16 %v3477
        %v3559 = vunpack.c.l.b16 %v3478
        %v3560 = vpack.c.b16 %v3529, %v3528
        %v3561 = vpack.c.b16 %v3531, %v3530
        %v3562 = vpack.c.b16 %v3533, %v3532
        %v3563 = vpack.c.b16 %v3535, %v3534
        %v3564 = vpack.c.b16 %v3537, %v3536
        %v3565 = vpack.c.b16 %v3539, %v3538
        %v3566 = vpack.c.b16 %v3541, %v3540
        %v3567 = vpack.c.b16 %v3543, %v3542
        %v3568 = vpack.c.b16 %v3545, %v3544
        %v3569 = vpack.c.b16 %v3547, %v3546
        %v3570 = vpack.c.b16 %v3549, %v3548
        %v3571 = vpack.c.b16 %v3551, %v3550
        %v3572 = vpack.c.b16 %v3553, %v3552
        %v3573 = vpack.c.b16 %v3555, %v3554
        %v3574 = vpack.c.b16 %v3557, %v3556
        %v3575 = vpack.c.b16 %v3559, %v3558
        %v3608 = vunpack.c.l.b16 %v3480
        %v3609 = vunpack.c.l.b16 %v3481
        %v3610 = vunpack.c.l.b16 %v3482
        %v3611 = vunpack.c.l.b16 %v3483
        %v3612 = vunpack.c.l.b16 %v3484
        %v3613 = vunpack.c.l.b16 %v3485
        %v3614 = vunpack.c.l.b16 %v3486
        %v3615 = vunpack.c.l.b16 %v3487
        %v3616 = vunpack.c.l.b16 %v3488
        %v3617 = vunpack.c.l.b16 %v3489
        %v3618 = vunpack.c.l.b16 %v3490
        %v3619 = vunpack.c.l.b16 %v3491
        %v3620 = vunpack.c.l.b16 %v3492
        %v3621 = vunpack.c.l.b16 %v3493
        %v3622 = vunpack.c.l.b16 %v3494
        %v3623 = vunpack.c.l.b16 %v3495
        %v3624 = vpack.c.b16 %v3609, %v3608
        %v3625 = vpack.c.b16 %v3611, %v3610
        %v3626 = vpack.c.b16 %v3613, %v3612
        %v3627 = vpack.c.b16 %v3615, %v3614
        %v3628 = vpack.c.b16 %v3617, %v3616
        %v3629 = vpack.c.b16 %v3619, %v3618
        %v3630 = vpack.c.b16 %v3621, %v3620
        %v3631 = vpack.c.b16 %v3623, %v3622
        %3640 = vmatprep.subr.bf16.mxu0 0
        %3641 = vmatpush1.bf16.msra.mxu0 %v3624
        %3642 = vmatprep.subr.bf16.mxu0 0
        %3643 = vmatpush1.bf16.msra.mxu0 %v3625
        %3644 = vmatprep.subr.bf16.mxu0 0
        %3645 = vmatpush1.bf16.msra.mxu0 %v3626
        %3646 = vmatprep.subr.bf16.mxu0 0
        %3647 = vmatpush1.bf16.msra.mxu0 %v3627
        %3648 = vmatprep.subr.bf16.mxu0 0
        %3649 = vmatpush1.bf16.msra.mxu0 %v3628
        %3650 = vmatprep.subr.bf16.mxu0 0
        %3651 = vmatpush1.bf16.msra.mxu0 %v3629
        %3652 = vmatprep.subr.bf16.mxu0 0
        %3653 = vmatpush1.bf16.msra.mxu0 %v3630
        %3654 = vmatprep.subr.bf16.mxu0 0
        %3655 = vmatpush1.bf16.msra.mxu0 %v3631
        %3656 = vmatprep.subr.bf16.mxu0 0
        %3657 = vmatpush1.bf16.msra.mxu0 0
        %3658 = vmatprep.subr.bf16.mxu0 0
        %3659 = vmatpush1.bf16.msra.mxu0 0
        %3660 = vmatprep.subr.bf16.mxu0 0
        %3661 = vmatpush1.bf16.msra.mxu0 0
        %3662 = vmatprep.subr.bf16.mxu0 0
        %3663 = vmatpush1.bf16.msra.mxu0 0
        %3664 = vmatprep.subr.bf16.mxu0 0
        %3665 = vmatpush1.bf16.msra.mxu0 0
        %3666 = vmatprep.subr.bf16.mxu0 0
        %3667 = vmatpush1.bf16.msra.mxu0 0
        %3668 = vmatprep.subr.bf16.mxu0 0
        %3669 = vmatpush1.bf16.msra.mxu0 0
        %3670 = vmatprep.subr.bf16.mxu0 0
        %3671 = vmatpush1.bf16.msra.mxu0 0
        %3672 = vmatprep.mubr.bf16.mxu0 0
        %3673 = vmatmul.mubr.bf16.gmra.mrb[0].mxu0 %v3560
        %v3674 = vpop.f32.mrb[0].mxu0
        %v3675 = vadd.f32 0.0, %v3674
        %v3676 = vpop.f32.mrb[0].mxu0
        %v3677 = vpop.f32.mrb[0].mxu0
        %v3678 = vadd.f32 0.0, %v3677
        %v3679 = vpop.f32.mrb[0].mxu0
        %3680 = vmatprep.mubr.bf16.mxu0 0
        %3681 = vmatmul.mubr.bf16.gmra.mrb[0].mxu0 %v3561
        %v3682 = vpop.f32.mrb[0].mxu0
        %v3683 = vadd.f32 0.0, %v3682
        %v3684 = vpop.f32.mrb[0].mxu0
        %v3685 = vpop.f32.mrb[0].mxu0
        %v3686 = vadd.f32 0.0, %v3685
        %v3687 = vpop.f32.mrb[0].mxu0
        %3688 = vmatprep.mubr.bf16.mxu0 0
        %3689 = vmatmul.mubr.bf16.gmra.mrb[0].mxu0 %v3562
        %v3690 = vpop.f32.mrb[0].mxu0
        %v3691 = vadd.f32 0.0, %v3690
        %v3692 = vpop.f32.mrb[0].mxu0
        %v3693 = vpop.f32.mrb[0].mxu0
        %v3694 = vadd.f32 0.0, %v3693
        %v3695 = vpop.f32.mrb[0].mxu0
        %3696 = vmatprep.mubr.bf16.mxu0 0
        %3697 = vmatmul.mubr.bf16.gmra.mrb[0].mxu0 %v3563
        %v3698 = vpop.f32.mrb[0].mxu0
        %v3699 = vadd.f32 0.0, %v3698
        %v3700 = vpop.f32.mrb[0].mxu0
        %v3701 = vpop.f32.mrb[0].mxu0
        %v3702 = vadd.f32 0.0, %v3701
        %v3703 = vpop.f32.mrb[0].mxu0
        %3704 = vmatprep.mubr.bf16.mxu0 0
        %3705 = vmatmul.mubr.bf16.gmra.mrb[0].mxu0 %v3564
        %v3706 = vpop.f32.mrb[0].mxu0
        %v3707 = vadd.f32 0.0, %v3706
        %v3708 = vpop.f32.mrb[0].mxu0
        %v3709 = vpop.f32.mrb[0].mxu0
        %v3710 = vadd.f32 0.0, %v3709
        %v3711 = vpop.f32.mrb[0].mxu0
        %3712 = vmatprep.mubr.bf16.mxu0 0
        %3713 = vmatmul.mubr.bf16.gmra.mrb[0].mxu0 %v3565
        %v3714 = vpop.f32.mrb[0].mxu0
        %v3715 = vadd.f32 0.0, %v3714
        %v3716 = vpop.f32.mrb[0].mxu0
        %v3717 = vpop.f32.mrb[0].mxu0
        %v3718 = vadd.f32 0.0, %v3717
        %v3719 = vpop.f32.mrb[0].mxu0
        %3720 = vmatprep.mubr.bf16.mxu0 0
        %3721 = vmatmul.mubr.bf16.gmra.mrb[0].mxu0 %v3566
        %v3722 = vpop.f32.mrb[0].mxu0
        %v3723 = vadd.f32 0.0, %v3722
        %v3724 = vpop.f32.mrb[0].mxu0
        %v3725 = vpop.f32.mrb[0].mxu0
        %v3726 = vadd.f32 0.0, %v3725
        %v3727 = vpop.f32.mrb[0].mxu0
        %3728 = vmatprep.mubr.bf16.mxu0 0
        %3729 = vmatmul.mubr.bf16.gmra.mrb[0].mxu0 %v3567
        %v3730 = vpop.f32.mrb[0].mxu0
        %v3731 = vadd.f32 0.0, %v3730
        %v3732 = vpop.f32.mrb[0].mxu0
        %v3733 = vpop.f32.mrb[0].mxu0
        %v3734 = vadd.f32 0.0, %v3733
        %v3735 = vpop.f32.mrb[0].mxu0
        %3736 = vmatprep.mubr.bf16.mxu0 0
        %3737 = vmatmul.mubr.bf16.gmra.mrb[0].mxu0 %v3568
        %v3738 = vpop.f32.mrb[0].mxu0
        %v3739 = vadd.f32 0.0, %v3738
        %v3740 = vpop.f32.mrb[0].mxu0
        %v3741 = vpop.f32.mrb[0].mxu0
        %v3742 = vadd.f32 0.0, %v3741
        %v3743 = vpop.f32.mrb[0].mxu0
        %3744 = vmatprep.mubr.bf16.mxu0 0
        %3745 = vmatmul.mubr.bf16.gmra.mrb[0].mxu0 %v3569
        %v3746 = vpop.f32.mrb[0].mxu0
        %v3747 = vadd.f32 0.0, %v3746
        %v3748 = vpop.f32.mrb[0].mxu0
        %v3749 = vpop.f32.mrb[0].mxu0
        %v3750 = vadd.f32 0.0, %v3749
        %v3751 = vpop.f32.mrb[0].mxu0
        %3752 = vmatprep.mubr.bf16.mxu0 0
        %3753 = vmatmul.mubr.bf16.gmra.mrb[0].mxu0 %v3570
        %v3754 = vpop.f32.mrb[0].mxu0
        %v3755 = vadd.f32 0.0, %v3754
        %v3756 = vpop.f32.mrb[0].mxu0
        %v3757 = vpop.f32.mrb[0].mxu0
        %v3758 = vadd.f32 0.0, %v3757
        %v3759 = vpop.f32.mrb[0].mxu0
        %3760 = vmatprep.mubr.bf16.mxu0 0
        %3761 = vmatmul.mubr.bf16.gmra.mrb[0].mxu0 %v3571
        %v3762 = vpop.f32.mrb[0].mxu0
        %v3763 = vadd.f32 0.0, %v3762
        %v3764 = vpop.f32.mrb[0].mxu0
        %v3765 = vpop.f32.mrb[0].mxu0
        %v3766 = vadd.f32 0.0, %v3765
        %v3767 = vpop.f32.mrb[0].mxu0
        %3768 = vmatprep.mubr.bf16.mxu0 0
        %3769 = vmatmul.mubr.bf16.gmra.mrb[0].mxu0 %v3572
        %v3770 = vpop.f32.mrb[0].mxu0
        %v3771 = vadd.f32 0.0, %v3770
        %v3772 = vpop.f32.mrb[0].mxu0
        %v3773 = vpop.f32.mrb[0].mxu0
        %v3774 = vadd.f32 0.0, %v3773
        %v3775 = vpop.f32.mrb[0].mxu0
        %3776 = vmatprep.mubr.bf16.mxu0 0
        %3777 = vmatmul.mubr.bf16.gmra.mrb[0].mxu0 %v3573
        %v3778 = vpop.f32.mrb[0].mxu0
        %v3779 = vadd.f32 0.0, %v3778
        %v3780 = vpop.f32.mrb[0].mxu0
        %v3781 = vpop.f32.mrb[0].mxu0
        %v3782 = vadd.f32 0.0, %v3781
        %v3783 = vpop.f32.mrb[0].mxu0
        %3784 = vmatprep.mubr.bf16.mxu0 0
        %3785 = vmatmul.mubr.bf16.gmra.mrb[0].mxu0 %v3574
        %v3786 = vpop.f32.mrb[0].mxu0
        %v3787 = vadd.f32 0.0, %v3786
        %v3788 = vpop.f32.mrb[0].mxu0
        %v3789 = vpop.f32.mrb[0].mxu0
        %v3790 = vadd.f32 0.0, %v3789
        %v3791 = vpop.f32.mrb[0].mxu0
        %3792 = vmatprep.mubr.bf16.mxu0 0
        %3793 = vmatmul.mubr.bf16.gmra.mrb[0].mxu0 %v3575
        %v3794 = vpop.f32.mrb[0].mxu0
        %v3795 = vadd.f32 0.0, %v3794
        %v3796 = vpop.f32.mrb[0].mxu0
        %v3797 = vpop.f32.mrb[0].mxu0
        %v3798 = vadd.f32 0.0, %v3797
        %v3799 = vpop.f32.mrb[0].mxu0
        %3800 = vdwg.mxu0
        %v3801 = vadd.f32 %v3411, %v3675
        %v3802 = vadd.f32 %v3412, %v3678
        %v3803 = vadd.f32 %v3413, %v3683
        %v3804 = vadd.f32 %v3414, %v3686
        %v3805 = vadd.f32 %v3415, %v3691
        %v3806 = vadd.f32 %v3416, %v3694
        %v3807 = vadd.f32 %v3417, %v3699
        %v3808 = vadd.f32 %v3418, %v3702
        %v3809 = vadd.f32 %v3419, %v3707
        %v3810 = vadd.f32 %v3420, %v3710
        %v3811 = vadd.f32 %v3421, %v3715
        %v3812 = vadd.f32 %v3422, %v3718
        %v3813 = vadd.f32 %v3423, %v3723
        %v3814 = vadd.f32 %v3424, %v3726
        %v3815 = vadd.f32 %v3425, %v3731
        %v3816 = vadd.f32 %v3426, %v3734
        %v3817 = vadd.f32 %v3427, %v3739
        %v3818 = vadd.f32 %v3428, %v3742
        %v3819 = vadd.f32 %v3429, %v3747
        %v3820 = vadd.f32 %v3430, %v3750
        %v3821 = vadd.f32 %v3431, %v3755
        %v3822 = vadd.f32 %v3432, %v3758
        %v3823 = vadd.f32 %v3433, %v3763
        %v3824 = vadd.f32 %v3434, %v3766
        %v3825 = vadd.f32 %v3435, %v3771
        %v3826 = vadd.f32 %v3436, %v3774
        %v3827 = vadd.f32 %v3437, %v3779
        %v3828 = vadd.f32 %v3438, %v3782
        %v3829 = vadd.f32 %v3439, %v3787
        %v3830 = vadd.f32 %v3440, %v3790
        %v3831 = vadd.f32 %v3441, %v3795
        %v3832 = vadd.f32 %v3442, %v3798
        %v3833 = vld [vmem:[%s3446] sm:$0xf]
        %v3834 = vld [vmem:[%s3446 + $0x4] sm:$0xf]
        %v3835 = vld [vmem:[%s3446 + $0x8] sm:$0x1]
        %v3836 = vld [vmem:[%s3446 + $0xc] sm:$0xf]
        %v3837 = vld [vmem:[%s3446 + $0x10] sm:$0xf]
        %v3838 = vld [vmem:[%s3446 + $0x14] sm:$0x1]
        %v3839 = vld [vmem:[%s3446 + $0x18] sm:$0xf]
        %v3840 = vld [vmem:[%s3446 + $0x1c] sm:$0xf]
        %v3841 = vld [vmem:[%s3446 + $0x20] sm:$0x1]
        %v3842 = vld [vmem:[%s3446 + $0x24] sm:$0xf]
        %v3843 = vld [vmem:[%s3446 + $0x28] sm:$0xf]
        %v3844 = vld [vmem:[%s3446 + $0x2c] sm:$0x1]
        %v3845 = vld [vmem:[%s3446 + $0x30] sm:$0xf]
        %v3846 = vld [vmem:[%s3446 + $0x34] sm:$0xf]
        %v3847 = vld [vmem:[%s3446 + $0x38] sm:$0x1]
        %v3848 = vld [vmem:[%s3446 + $0x3c] sm:$0xf]
        %v3849 = vld [vmem:[%s3446 + $0x40] sm:$0xf]
        %v3850 = vld [vmem:[%s3446 + $0x44] sm:$0x1]
        %v3851 = vld [vmem:[%s3446 + $0x48] sm:$0xf]
        %v3852 = vld [vmem:[%s3446 + $0x4c] sm:$0xf]
        %v3853 = vld [vmem:[%s3446 + $0x50] sm:$0x1]
        %v3854 = vld [vmem:[%s3446 + $0x54] sm:$0xf]
        %v3855 = vld [vmem:[%s3446 + $0x58] sm:$0xf]
        %v3856 = vld [vmem:[%s3446 + $0x5c] sm:$0x1]
        %v3857 = vld [vmem:[%s3446 + $0x60] sm:$0xf]
        %v3858 = vld [vmem:[%s3446 + $0x64] sm:$0xf]
        %v3859 = vld [vmem:[%s3446 + $0x68] sm:$0x1]
        %v3860 = vld [vmem:[%s3446 + $0x6c] sm:$0xf]
        %v3861 = vld [vmem:[%s3446 + $0x70] sm:$0xf]
        %v3862 = vld [vmem:[%s3446 + $0x74] sm:$0x1]
        %v3863 = vld [vmem:[%s3446 + $0x78] sm:$0xf]
        %v3864 = vld [vmem:[%s3446 + $0x7c] sm:$0xf]
        %v3865 = vld [vmem:[%s3446 + $0x80] sm:$0x1]
        %v3866 = vld [vmem:[%s3446 + $0x84] sm:$0xf]
        %v3867 = vld [vmem:[%s3446 + $0x88] sm:$0xf]
        %v3868 = vld [vmem:[%s3446 + $0x8c] sm:$0x1]
        %v3869 = vld [vmem:[%s3446 + $0x90] sm:$0xf]
        %v3870 = vld [vmem:[%s3446 + $0x94] sm:$0xf]
        %v3871 = vld [vmem:[%s3446 + $0x98] sm:$0x1]
        %v3872 = vld [vmem:[%s3446 + $0x9c] sm:$0xf]
        %v3873 = vld [vmem:[%s3446 + $0xa0] sm:$0xf]
        %v3874 = vld [vmem:[%s3446 + $0xa4] sm:$0x1]
        %v3875 = vld [vmem:[%s3446 + $0xa8] sm:$0xf]
        %v3876 = vld [vmem:[%s3446 + $0xac] sm:$0xf]
        %v3877 = vld [vmem:[%s3446 + $0xb0] sm:$0x1]
        %v3878 = vld [vmem:[%s3446 + $0xb4] sm:$0xf]
        %v3879 = vld [vmem:[%s3446 + $0xb8] sm:$0xf]
        %v3880 = vld [vmem:[%s3446 + $0xbc] sm:$0x1]
        %v3882 = vshrl.u32 %v3833, 16
        %v3884 = vrot.slane %v3882, 4
        %v3885 = vshll.u32 %v3833, 16
        %v3887 = vrot.slane %v3885, 5
        %v3888 = vor.u32 %v3884, %v3887
        %v3889 = vrot.slane %v3888, 4
        %v3891 = vshll.u32 %v3834, 16
        %v3893 = vrot.slane %v3891, 5
        %v3894 = vsel %vm336, %v3889, %v3893
        %v3895 = vshrl.u32 %v3834, 16
        %v3897 = vrot.slane %v3895, 4
        %v3898 = vor.u32 %v3897, %v3893
        %v3899 = vrot.slane %v3898, 4
        %v3901 = vshll.u32 %v3835, 16
        %v3903 = vrot.slane %v3901, 5
        %v3904 = vsel %vm336, %v3899, %v3903
        %v3906 = vshrl.u32 %v3836, 16
        %v3908 = vrot.slane %v3906, 4
        %v3909 = vshll.u32 %v3836, 16
        %v3911 = vrot.slane %v3909, 5
        %v3912 = vor.u32 %v3908, %v3911
        %v3913 = vrot.slane %v3912, 4
        %v3915 = vshll.u32 %v3837, 16
        %v3917 = vrot.slane %v3915, 5
        %v3918 = vsel %vm336, %v3913, %v3917
        %v3919 = vshrl.u32 %v3837, 16
        %v3921 = vrot.slane %v3919, 4
        %v3922 = vor.u32 %v3921, %v3917
        %v3923 = vrot.slane %v3922, 4
        %v3925 = vshll.u32 %v3838, 16
        %v3927 = vrot.slane %v3925, 5
        %v3928 = vsel %vm336, %v3923, %v3927
        %v3930 = vshrl.u32 %v3839, 16
        %v3932 = vrot.slane %v3930, 4
        %v3933 = vshll.u32 %v3839, 16
        %v3935 = vrot.slane %v3933, 5
        %v3936 = vor.u32 %v3932, %v3935
        %v3937 = vrot.slane %v3936, 4
        %v3939 = vshll.u32 %v3840, 16
        %v3941 = vrot.slane %v3939, 5
        %v3942 = vsel %vm336, %v3937, %v3941
        %v3943 = vshrl.u32 %v3840, 16
        %v3945 = vrot.slane %v3943, 4
        %v3946 = vor.u32 %v3945, %v3941
        %v3947 = vrot.slane %v3946, 4
        %v3949 = vshll.u32 %v3841, 16
        %v3951 = vrot.slane %v3949, 5
        %v3952 = vsel %vm336, %v3947, %v3951
        %v3954 = vshrl.u32 %v3842, 16
        %v3956 = vrot.slane %v3954, 4
        %v3957 = vshll.u32 %v3842, 16
        %v3959 = vrot.slane %v3957, 5
        %v3960 = vor.u32 %v3956, %v3959
        %v3961 = vrot.slane %v3960, 4
        %v3963 = vshll.u32 %v3843, 16
        %v3965 = vrot.slane %v3963, 5
        %v3966 = vsel %vm336, %v3961, %v3965
        %v3967 = vshrl.u32 %v3843, 16
        %v3969 = vrot.slane %v3967, 4
        %v3970 = vor.u32 %v3969, %v3965
        %v3971 = vrot.slane %v3970, 4
        %v3973 = vshll.u32 %v3844, 16
        %v3975 = vrot.slane %v3973, 5
        %v3976 = vsel %vm336, %v3971, %v3975
        %v3978 = vshrl.u32 %v3845, 16
        %v3980 = vrot.slane %v3978, 4
        %v3981 = vshll.u32 %v3845, 16
        %v3983 = vrot.slane %v3981, 5
        %v3984 = vor.u32 %v3980, %v3983
        %v3985 = vrot.slane %v3984, 4
        %v3987 = vshll.u32 %v3846, 16
        %v3989 = vrot.slane %v3987, 5
        %v3990 = vsel %vm336, %v3985, %v3989
        %v3991 = vshrl.u32 %v3846, 16
        %v3993 = vrot.slane %v3991, 4
        %v3994 = vor.u32 %v3993, %v3989
        %v3995 = vrot.slane %v3994, 4
        %v3997 = vshll.u32 %v3847, 16
        %v3999 = vrot.slane %v3997, 5
        %v4000 = vsel %vm336, %v3995, %v3999
        %v4002 = vshrl.u32 %v3848, 16
        %v4004 = vrot.slane %v4002, 4
        %v4005 = vshll.u32 %v3848, 16
        %v4007 = vrot.slane %v4005, 5
        %v4008 = vor.u32 %v4004, %v4007
        %v4009 = vrot.slane %v4008, 4
        %v4011 = vshll.u32 %v3849, 16
        %v4013 = vrot.slane %v4011, 5
        %v4014 = vsel %vm336, %v4009, %v4013
        %v4015 = vshrl.u32 %v3849, 16
        %v4017 = vrot.slane %v4015, 4
        %v4018 = vor.u32 %v4017, %v4013
        %v4019 = vrot.slane %v4018, 4
        %v4021 = vshll.u32 %v3850, 16
        %v4023 = vrot.slane %v4021, 5
        %v4024 = vsel %vm336, %v4019, %v4023
        %v4026 = vshrl.u32 %v3851, 16
        %v4028 = vrot.slane %v4026, 4
        %v4029 = vshll.u32 %v3851, 16
        %v4031 = vrot.slane %v4029, 5
        %v4032 = vor.u32 %v4028, %v4031
        %v4033 = vrot.slane %v4032, 4
        %v4035 = vshll.u32 %v3852, 16
        %v4037 = vrot.slane %v4035, 5
        %v4038 = vsel %vm336, %v4033, %v4037
        %v4039 = vshrl.u32 %v3852, 16
        %v4041 = vrot.slane %v4039, 4
        %v4042 = vor.u32 %v4041, %v4037
        %v4043 = vrot.slane %v4042, 4
        %v4045 = vshll.u32 %v3853, 16
        %v4047 = vrot.slane %v4045, 5
        %v4048 = vsel %vm336, %v4043, %v4047
        %v4050 = vshrl.u32 %v3854, 16
        %v4052 = vrot.slane %v4050, 4
        %v4053 = vshll.u32 %v3854, 16
        %v4055 = vrot.slane %v4053, 5
        %v4056 = vor.u32 %v4052, %v4055
        %v4057 = vrot.slane %v4056, 4
        %v4059 = vshll.u32 %v3855, 16
        %v4061 = vrot.slane %v4059, 5
        %v4062 = vsel %vm336, %v4057, %v4061
        %v4063 = vshrl.u32 %v3855, 16
        %v4065 = vrot.slane %v4063, 4
        %v4066 = vor.u32 %v4065, %v4061
        %v4067 = vrot.slane %v4066, 4
        %v4069 = vshll.u32 %v3856, 16
        %v4071 = vrot.slane %v4069, 5
        %v4072 = vsel %vm336, %v4067, %v4071
        %v4074 = vshrl.u32 %v3857, 16
        %v4076 = vrot.slane %v4074, 4
        %v4077 = vshll.u32 %v3857, 16
        %v4079 = vrot.slane %v4077, 5
        %v4080 = vor.u32 %v4076, %v4079
        %v4081 = vrot.slane %v4080, 4
        %v4083 = vshll.u32 %v3858, 16
        %v4085 = vrot.slane %v4083, 5
        %v4086 = vsel %vm336, %v4081, %v4085
        %v4087 = vshrl.u32 %v3858, 16
        %v4089 = vrot.slane %v4087, 4
        %v4090 = vor.u32 %v4089, %v4085
        %v4091 = vrot.slane %v4090, 4
        %v4093 = vshll.u32 %v3859, 16
        %v4095 = vrot.slane %v4093, 5
        %v4096 = vsel %vm336, %v4091, %v4095
        %v4098 = vshrl.u32 %v3860, 16
        %v4100 = vrot.slane %v4098, 4
        %v4101 = vshll.u32 %v3860, 16
        %v4103 = vrot.slane %v4101, 5
        %v4104 = vor.u32 %v4100, %v4103
        %v4105 = vrot.slane %v4104, 4
        %v4107 = vshll.u32 %v3861, 16
        %v4109 = vrot.slane %v4107, 5
        %v4110 = vsel %vm336, %v4105, %v4109
        %v4111 = vshrl.u32 %v3861, 16
        %v4113 = vrot.slane %v4111, 4
        %v4114 = vor.u32 %v4113, %v4109
        %v4115 = vrot.slane %v4114, 4
        %v4117 = vshll.u32 %v3862, 16
        %v4119 = vrot.slane %v4117, 5
        %v4120 = vsel %vm336, %v4115, %v4119
        %v4122 = vshrl.u32 %v3863, 16
        %v4124 = vrot.slane %v4122, 4
        %v4125 = vshll.u32 %v3863, 16
        %v4127 = vrot.slane %v4125, 5
        %v4128 = vor.u32 %v4124, %v4127
        %v4129 = vrot.slane %v4128, 4
        %v4131 = vshll.u32 %v3864, 16
        %v4133 = vrot.slane %v4131, 5
        %v4134 = vsel %vm336, %v4129, %v4133
        %v4135 = vshrl.u32 %v3864, 16
        %v4137 = vrot.slane %v4135, 4
        %v4138 = vor.u32 %v4137, %v4133
        %v4139 = vrot.slane %v4138, 4
        %v4141 = vshll.u32 %v3865, 16
        %v4143 = vrot.slane %v4141, 5
        %v4144 = vsel %vm336, %v4139, %v4143
        %v4146 = vshrl.u32 %v3866, 16
        %v4148 = vrot.slane %v4146, 4
        %v4149 = vshll.u32 %v3866, 16
        %v4151 = vrot.slane %v4149, 5
        %v4152 = vor.u32 %v4148, %v4151
        %v4153 = vrot.slane %v4152, 4
        %v4155 = vshll.u32 %v3867, 16
        %v4157 = vrot.slane %v4155, 5
        %v4158 = vsel %vm336, %v4153, %v4157
        %v4159 = vshrl.u32 %v3867, 16
        %v4161 = vrot.slane %v4159, 4
        %v4162 = vor.u32 %v4161, %v4157
        %v4163 = vrot.slane %v4162, 4
        %v4165 = vshll.u32 %v3868, 16
        %v4167 = vrot.slane %v4165, 5
        %v4168 = vsel %vm336, %v4163, %v4167
        %v4170 = vshrl.u32 %v3869, 16
        %v4172 = vrot.slane %v4170, 4
        %v4173 = vshll.u32 %v3869, 16
        %v4175 = vrot.slane %v4173, 5
        %v4176 = vor.u32 %v4172, %v4175
        %v4177 = vrot.slane %v4176, 4
        %v4179 = vshll.u32 %v3870, 16
        %v4181 = vrot.slane %v4179, 5
        %v4182 = vsel %vm336, %v4177, %v4181
        %v4183 = vshrl.u32 %v3870, 16
        %v4185 = vrot.slane %v4183, 4
        %v4186 = vor.u32 %v4185, %v4181
        %v4187 = vrot.slane %v4186, 4
        %v4189 = vshll.u32 %v3871, 16
        %v4191 = vrot.slane %v4189, 5
        %v4192 = vsel %vm336, %v4187, %v4191
        %v4194 = vshrl.u32 %v3872, 16
        %v4196 = vrot.slane %v4194, 4
        %v4197 = vshll.u32 %v3872, 16
        %v4199 = vrot.slane %v4197, 5
        %v4200 = vor.u32 %v4196, %v4199
        %v4201 = vrot.slane %v4200, 4
        %v4203 = vshll.u32 %v3873, 16
        %v4205 = vrot.slane %v4203, 5
        %v4206 = vsel %vm336, %v4201, %v4205
        %v4207 = vshrl.u32 %v3873, 16
        %v4209 = vrot.slane %v4207, 4
        %v4210 = vor.u32 %v4209, %v4205
        %v4211 = vrot.slane %v4210, 4
        %v4213 = vshll.u32 %v3874, 16
        %v4215 = vrot.slane %v4213, 5
        %v4216 = vsel %vm336, %v4211, %v4215
        %v4218 = vshrl.u32 %v3875, 16
        %v4220 = vrot.slane %v4218, 4
        %v4221 = vshll.u32 %v3875, 16
        %v4223 = vrot.slane %v4221, 5
        %v4224 = vor.u32 %v4220, %v4223
        %v4225 = vrot.slane %v4224, 4
        %v4227 = vshll.u32 %v3876, 16
        %v4229 = vrot.slane %v4227, 5
        %v4230 = vsel %vm336, %v4225, %v4229
        %v4231 = vshrl.u32 %v3876, 16
        %v4233 = vrot.slane %v4231, 4
        %v4234 = vor.u32 %v4233, %v4229
        %v4235 = vrot.slane %v4234, 4
        %v4237 = vshll.u32 %v3877, 16
        %v4239 = vrot.slane %v4237, 5
        %v4240 = vsel %vm336, %v4235, %v4239
        %v4242 = vshrl.u32 %v3878, 16
        %v4244 = vrot.slane %v4242, 4
        %v4245 = vshll.u32 %v3878, 16
        %v4247 = vrot.slane %v4245, 5
        %v4248 = vor.u32 %v4244, %v4247
        %v4249 = vrot.slane %v4248, 4
        %v4251 = vshll.u32 %v3879, 16
        %v4253 = vrot.slane %v4251, 5
        %v4254 = vsel %vm336, %v4249, %v4253
        %v4255 = vshrl.u32 %v3879, 16
        %v4257 = vrot.slane %v4255, 4
        %v4258 = vor.u32 %v4257, %v4253
        %v4259 = vrot.slane %v4258, 4
        %v4261 = vshll.u32 %v3880, 16
        %v4263 = vrot.slane %v4261, 5
        %v4264 = vsel %vm336, %v4259, %v4263
        %s4265 = scalar_lea.vmem %s257, 448
        %v4266 = vld [vmem:[%s4265] sm:$0xf]
        %v4267 = vld [vmem:[%s4265 + $0x4] sm:$0xf]
        %v4268 = vld [vmem:[%s4265 + $0x8] sm:$0xf]
        %v4269 = vld [vmem:[%s4265 + $0xc] sm:$0xf]
        %v4270 = vld [vmem:[%s4265 + $0x10] sm:$0xf]
        %v4271 = vld [vmem:[%s4265 + $0x14] sm:$0xf]
        %v4272 = vld [vmem:[%s4265 + $0x18] sm:$0xf]
        %v4273 = vld [vmem:[%s4265 + $0x1c] sm:$0xf]
        %v4274 = vld [vmem:[%s4265 + $0x20] sm:$0xf]
        %v4275 = vld [vmem:[%s4265 + $0x24] sm:$0xf]
        %v4276 = vld [vmem:[%s4265 + $0x28] sm:$0xf]
        %v4277 = vld [vmem:[%s4265 + $0x2c] sm:$0xf]
        %v4278 = vld [vmem:[%s4265 + $0x30] sm:$0xf]
        %v4279 = vld [vmem:[%s4265 + $0x34] sm:$0xf]
        %v4280 = vld [vmem:[%s4265 + $0x38] sm:$0xf]
        %v4281 = vld [vmem:[%s4265 + $0x3c] sm:$0xf]
        %v4282 = vunpack.c.l.b16 %v3894
        %v4283 = vunpack.c.l.b16 %v3904
        %v4284 = vunpack.c.l.b16 %v3918
        %v4285 = vunpack.c.l.b16 %v3928
        %v4286 = vunpack.c.l.b16 %v3942
        %v4287 = vunpack.c.l.b16 %v3952
        %v4288 = vunpack.c.l.b16 %v3966
        %v4289 = vunpack.c.l.b16 %v3976
        %v4290 = vunpack.c.l.b16 %v3990
        %v4291 = vunpack.c.l.b16 %v4000
        %v4292 = vunpack.c.l.b16 %v4014
        %v4293 = vunpack.c.l.b16 %v4024
        %v4294 = vunpack.c.l.b16 %v4038
        %v4295 = vunpack.c.l.b16 %v4048
        %v4296 = vunpack.c.l.b16 %v4062
        %v4297 = vunpack.c.l.b16 %v4072
        %v4298 = vunpack.c.l.b16 %v4086
        %v4299 = vunpack.c.l.b16 %v4096
        %v4300 = vunpack.c.l.b16 %v4110
        %v4301 = vunpack.c.l.b16 %v4120
        %v4302 = vunpack.c.l.b16 %v4134
        %v4303 = vunpack.c.l.b16 %v4144
        %v4304 = vunpack.c.l.b16 %v4158
        %v4305 = vunpack.c.l.b16 %v4168
        %v4306 = vunpack.c.l.b16 %v4182
        %v4307 = vunpack.c.l.b16 %v4192
        %v4308 = vunpack.c.l.b16 %v4206
        %v4309 = vunpack.c.l.b16 %v4216
        %v4310 = vunpack.c.l.b16 %v4230
        %v4311 = vunpack.c.l.b16 %v4240
        %v4312 = vunpack.c.l.b16 %v4254
        %v4313 = vunpack.c.l.b16 %v4264
        %v4314 = vpack.c.b16 %v4283, %v4282
        %v4315 = vpack.c.b16 %v4285, %v4284
        %v4316 = vpack.c.b16 %v4287, %v4286
        %v4317 = vpack.c.b16 %v4289, %v4288
        %v4318 = vpack.c.b16 %v4291, %v4290
        %v4319 = vpack.c.b16 %v4293, %v4292
        %v4320 = vpack.c.b16 %v4295, %v4294
        %v4321 = vpack.c.b16 %v4297, %v4296
        %v4322 = vpack.c.b16 %v4299, %v4298
        %v4323 = vpack.c.b16 %v4301, %v4300
        %v4324 = vpack.c.b16 %v4303, %v4302
        %v4325 = vpack.c.b16 %v4305, %v4304
        %v4326 = vpack.c.b16 %v4307, %v4306
        %v4327 = vpack.c.b16 %v4309, %v4308
        %v4328 = vpack.c.b16 %v4311, %v4310
        %v4329 = vpack.c.b16 %v4313, %v4312
        %v4362 = vunpack.c.l.b16 %v4266
        %v4363 = vunpack.c.l.b16 %v4267
        %v4364 = vunpack.c.l.b16 %v4268
        %v4365 = vunpack.c.l.b16 %v4269
        %v4366 = vunpack.c.l.b16 %v4270
        %v4367 = vunpack.c.l.b16 %v4271
        %v4368 = vunpack.c.l.b16 %v4272
        %v4369 = vunpack.c.l.b16 %v4273
        %v4370 = vunpack.c.l.b16 %v4274
        %v4371 = vunpack.c.l.b16 %v4275
        %v4372 = vunpack.c.l.b16 %v4276
        %v4373 = vunpack.c.l.b16 %v4277
        %v4374 = vunpack.c.l.b16 %v4278
        %v4375 = vunpack.c.l.b16 %v4279
        %v4376 = vunpack.c.l.b16 %v4280
        %v4377 = vunpack.c.l.b16 %v4281
        %v4378 = vpack.c.b16 %v4363, %v4362
        %v4379 = vpack.c.b16 %v4365, %v4364
        %v4380 = vpack.c.b16 %v4367, %v4366
        %v4381 = vpack.c.b16 %v4369, %v4368
        %v4382 = vpack.c.b16 %v4371, %v4370
        %v4383 = vpack.c.b16 %v4373, %v4372
        %v4384 = vpack.c.b16 %v4375, %v4374
        %v4385 = vpack.c.b16 %v4377, %v4376
        %4394 = vmatprep.subr.bf16.mxu0 0
        %4395 = vmatpush1.bf16.msra.mxu0 %v4378
        %4396 = vmatprep.subr.bf16.mxu0 0
        %4397 = vmatpush1.bf16.msra.mxu0 %v4379
        %4398 = vmatprep.subr.bf16.mxu0 0
        %4399 = vmatpush1.bf16.msra.mxu0 %v4380
        %4400 = vmatprep.subr.bf16.mxu0 0
        %4401 = vmatpush1.bf16.msra.mxu0 %v4381
        %4402 = vmatprep.subr.bf16.mxu0 0
        %4403 = vmatpush1.bf16.msra.mxu0 %v4382
        %4404 = vmatprep.subr.bf16.mxu0 0
        %4405 = vmatpush1.bf16.msra.mxu0 %v4383
        %4406 = vmatprep.subr.bf16.mxu0 0
        %4407 = vmatpush1.bf16.msra.mxu0 %v4384
        %4408 = vmatprep.subr.bf16.mxu0 0
        %4409 = vmatpush1.bf16.msra.mxu0 %v4385
        %4410 = vmatprep.subr.bf16.mxu0 0
        %4411 = vmatpush1.bf16.msra.mxu0 0
        %4412 = vmatprep.subr.bf16.mxu0 0
        %4413 = vmatpush1.bf16.msra.mxu0 0
        %4414 = vmatprep.subr.bf16.mxu0 0
        %4415 = vmatpush1.bf16.msra.mxu0 0
        %4416 = vmatprep.subr.bf16.mxu0 0
        %4417 = vmatpush1.bf16.msra.mxu0 0
        %4418 = vmatprep.subr.bf16.mxu0 0
        %4419 = vmatpush1.bf16.msra.mxu0 0
        %4420 = vmatprep.subr.bf16.mxu0 0
        %4421 = vmatpush1.bf16.msra.mxu0 0
        %4422 = vmatprep.subr.bf16.mxu0 0
        %4423 = vmatpush1.bf16.msra.mxu0 0
        %4424 = vmatprep.subr.bf16.mxu0 0
        %4425 = vmatpush1.bf16.msra.mxu0 0
        %4426 = vmatprep.mubr.bf16.mxu0 0
        %4427 = vmatmul.mubr.bf16.gmra.mrb[0].mxu0 %v4314
        %v4428 = vpop.f32.mrb[0].mxu0
        %v4429 = vadd.f32 0.0, %v4428
        %v4430 = vpop.f32.mrb[0].mxu0
        %v4431 = vpop.f32.mrb[0].mxu0
        %v4432 = vadd.f32 0.0, %v4431
        %v4433 = vpop.f32.mrb[0].mxu0
        %4434 = vmatprep.mubr.bf16.mxu0 0
        %4435 = vmatmul.mubr.bf16.gmra.mrb[0].mxu0 %v4315
        %v4436 = vpop.f32.mrb[0].mxu0
        %v4437 = vadd.f32 0.0, %v4436
        %v4438 = vpop.f32.mrb[0].mxu0
        %v4439 = vpop.f32.mrb[0].mxu0
        %v4440 = vadd.f32 0.0, %v4439
        %v4441 = vpop.f32.mrb[0].mxu0
        %4442 = vmatprep.mubr.bf16.mxu0 0
        %4443 = vmatmul.mubr.bf16.gmra.mrb[0].mxu0 %v4316
        %v4444 = vpop.f32.mrb[0].mxu0
        %v4445 = vadd.f32 0.0, %v4444
        %v4446 = vpop.f32.mrb[0].mxu0
        %v4447 = vpop.f32.mrb[0].mxu0
        %v4448 = vadd.f32 0.0, %v4447
        %v4449 = vpop.f32.mrb[0].mxu0
        %4450 = vmatprep.mubr.bf16.mxu0 0
        %4451 = vmatmul.mubr.bf16.gmra.mrb[0].mxu0 %v4317
        %v4452 = vpop.f32.mrb[0].mxu0
        %v4453 = vadd.f32 0.0, %v4452
        %v4454 = vpop.f32.mrb[0].mxu0
        %v4455 = vpop.f32.mrb[0].mxu0
        %v4456 = vadd.f32 0.0, %v4455
        %v4457 = vpop.f32.mrb[0].mxu0
        %4458 = vmatprep.mubr.bf16.mxu0 0
        %4459 = vmatmul.mubr.bf16.gmra.mrb[0].mxu0 %v4318
        %v4460 = vpop.f32.mrb[0].mxu0
        %v4461 = vadd.f32 0.0, %v4460
        %v4462 = vpop.f32.mrb[0].mxu0
        %v4463 = vpop.f32.mrb[0].mxu0
        %v4464 = vadd.f32 0.0, %v4463
        %v4465 = vpop.f32.mrb[0].mxu0
        %4466 = vmatprep.mubr.bf16.mxu0 0
        %4467 = vmatmul.mubr.bf16.gmra.mrb[0].mxu0 %v4319
        %v4468 = vpop.f32.mrb[0].mxu0
        %v4469 = vadd.f32 0.0, %v4468
        %v4470 = vpop.f32.mrb[0].mxu0
        %v4471 = vpop.f32.mrb[0].mxu0
        %v4472 = vadd.f32 0.0, %v4471
        %v4473 = vpop.f32.mrb[0].mxu0
        %4474 = vmatprep.mubr.bf16.mxu0 0
        %4475 = vmatmul.mubr.bf16.gmra.mrb[0].mxu0 %v4320
        %v4476 = vpop.f32.mrb[0].mxu0
        %v4477 = vadd.f32 0.0, %v4476
        %v4478 = vpop.f32.mrb[0].mxu0
        %v4479 = vpop.f32.mrb[0].mxu0
        %v4480 = vadd.f32 0.0, %v4479
        %v4481 = vpop.f32.mrb[0].mxu0
        %4482 = vmatprep.mubr.bf16.mxu0 0
        %4483 = vmatmul.mubr.bf16.gmra.mrb[0].mxu0 %v4321
        %v4484 = vpop.f32.mrb[0].mxu0
        %v4485 = vadd.f32 0.0, %v4484
        %v4486 = vpop.f32.mrb[0].mxu0
        %v4487 = vpop.f32.mrb[0].mxu0
        %v4488 = vadd.f32 0.0, %v4487
        %v4489 = vpop.f32.mrb[0].mxu0
        %4490 = vmatprep.mubr.bf16.mxu0 0
        %4491 = vmatmul.mubr.bf16.gmra.mrb[0].mxu0 %v4322
        %v4492 = vpop.f32.mrb[0].mxu0
        %v4493 = vadd.f32 0.0, %v4492
        %v4494 = vpop.f32.mrb[0].mxu0
        %v4495 = vpop.f32.mrb[0].mxu0
        %v4496 = vadd.f32 0.0, %v4495
        %v4497 = vpop.f32.mrb[0].mxu0
        %4498 = vmatprep.mubr.bf16.mxu0 0
        %4499 = vmatmul.mubr.bf16.gmra.mrb[0].mxu0 %v4323
        %v4500 = vpop.f32.mrb[0].mxu0
        %v4501 = vadd.f32 0.0, %v4500
        %v4502 = vpop.f32.mrb[0].mxu0
        %v4503 = vpop.f32.mrb[0].mxu0
        %v4504 = vadd.f32 0.0, %v4503
        %v4505 = vpop.f32.mrb[0].mxu0
        %4506 = vmatprep.mubr.bf16.mxu0 0
        %4507 = vmatmul.mubr.bf16.gmra.mrb[0].mxu0 %v4324
        %v4508 = vpop.f32.mrb[0].mxu0
        %v4509 = vadd.f32 0.0, %v4508
        %v4510 = vpop.f32.mrb[0].mxu0
        %v4511 = vpop.f32.mrb[0].mxu0
        %v4512 = vadd.f32 0.0, %v4511
        %v4513 = vpop.f32.mrb[0].mxu0
        %4514 = vmatprep.mubr.bf16.mxu0 0
        %4515 = vmatmul.mubr.bf16.gmra.mrb[0].mxu0 %v4325
        %v4516 = vpop.f32.mrb[0].mxu0
        %v4517 = vadd.f32 0.0, %v4516
        %v4518 = vpop.f32.mrb[0].mxu0
        %v4519 = vpop.f32.mrb[0].mxu0
        %v4520 = vadd.f32 0.0, %v4519
        %v4521 = vpop.f32.mrb[0].mxu0
        %4522 = vmatprep.mubr.bf16.mxu0 0
        %4523 = vmatmul.mubr.bf16.gmra.mrb[0].mxu0 %v4326
        %v4524 = vpop.f32.mrb[0].mxu0
        %v4525 = vadd.f32 0.0, %v4524
        %v4526 = vpop.f32.mrb[0].mxu0
        %v4527 = vpop.f32.mrb[0].mxu0
        %v4528 = vadd.f32 0.0, %v4527
        %v4529 = vpop.f32.mrb[0].mxu0
        %4530 = vmatprep.mubr.bf16.mxu0 0
        %4531 = vmatmul.mubr.bf16.gmra.mrb[0].mxu0 %v4327
        %v4532 = vpop.f32.mrb[0].mxu0
        %v4533 = vadd.f32 0.0, %v4532
        %v4534 = vpop.f32.mrb[0].mxu0
        %v4535 = vpop.f32.mrb[0].mxu0
        %v4536 = vadd.f32 0.0, %v4535
        %v4537 = vpop.f32.mrb[0].mxu0
        %4538 = vmatprep.mubr.bf16.mxu0 0
        %4539 = vmatmul.mubr.bf16.gmra.mrb[0].mxu0 %v4328
        %v4540 = vpop.f32.mrb[0].mxu0
        %v4541 = vadd.f32 0.0, %v4540
        %v4542 = vpop.f32.mrb[0].mxu0
        %v4543 = vpop.f32.mrb[0].mxu0
        %v4544 = vadd.f32 0.0, %v4543
        %v4545 = vpop.f32.mrb[0].mxu0
        %4546 = vmatprep.mubr.bf16.mxu0 0
        %4547 = vmatmul.mubr.bf16.gmra.mrb[0].mxu0 %v4329
        %v4548 = vpop.f32.mrb[0].mxu0
        %v4549 = vadd.f32 0.0, %v4548
        %v4550 = vpop.f32.mrb[0].mxu0
        %v4551 = vpop.f32.mrb[0].mxu0
        %v4552 = vadd.f32 0.0, %v4551
        %v4553 = vpop.f32.mrb[0].mxu0
        %4554 = vdwg.mxu0
        %v4555 = vadd.f32 %v3801, %v4429
        %v4556 = vadd.f32 %v3802, %v4432
        %v4557 = vadd.f32 %v3803, %v4437
        %v4558 = vadd.f32 %v3804, %v4440
        %v4559 = vadd.f32 %v3805, %v4445
        %v4560 = vadd.f32 %v3806, %v4448
        %v4561 = vadd.f32 %v3807, %v4453
        %v4562 = vadd.f32 %v3808, %v4456
        %v4563 = vadd.f32 %v3809, %v4461
        %v4564 = vadd.f32 %v3810, %v4464
        %v4565 = vadd.f32 %v3811, %v4469
        %v4566 = vadd.f32 %v3812, %v4472
        %v4567 = vadd.f32 %v3813, %v4477
        %v4568 = vadd.f32 %v3814, %v4480
        %v4569 = vadd.f32 %v3815, %v4485
        %v4570 = vadd.f32 %v3816, %v4488
        %v4571 = vadd.f32 %v3817, %v4493
        %v4572 = vadd.f32 %v3818, %v4496
        %v4573 = vadd.f32 %v3819, %v4501
        %v4574 = vadd.f32 %v3820, %v4504
        %v4575 = vadd.f32 %v3821, %v4509
        %v4576 = vadd.f32 %v3822, %v4512
        %v4577 = vadd.f32 %v3823, %v4517
        %v4578 = vadd.f32 %v3824, %v4520
        %v4579 = vadd.f32 %v3825, %v4525
        %v4580 = vadd.f32 %v3826, %v4528
        %v4581 = vadd.f32 %v3827, %v4533
        %v4582 = vadd.f32 %v3828, %v4536
        %v4583 = vadd.f32 %v3829, %v4541
        %v4584 = vadd.f32 %v3830, %v4544
        %v4585 = vadd.f32 %v3831, %v4549
        %v4586 = vadd.f32 %v3832, %v4552
        %v4587 = vld [vmem:[%s3446] sm:$0xe]
        %v4588 = vld [vmem:[%s3446 + $0xc] sm:$0xe]
        %v4589 = vld [vmem:[%s3446 + $0x18] sm:$0xe]
        %v4590 = vld [vmem:[%s3446 + $0x24] sm:$0xe]
        %v4591 = vld [vmem:[%s3446 + $0x30] sm:$0xe]
        %v4592 = vld [vmem:[%s3446 + $0x3c] sm:$0xe]
        %v4593 = vld [vmem:[%s3446 + $0x48] sm:$0xe]
        %v4594 = vld [vmem:[%s3446 + $0x54] sm:$0xe]
        %v4595 = vld [vmem:[%s3446 + $0x60] sm:$0xe]
        %v4596 = vld [vmem:[%s3446 + $0x6c] sm:$0xe]
        %v4597 = vld [vmem:[%s3446 + $0x78] sm:$0xe]
        %v4598 = vld [vmem:[%s3446 + $0x84] sm:$0xe]
        %v4599 = vld [vmem:[%s3446 + $0x90] sm:$0xe]
        %v4600 = vld [vmem:[%s3446 + $0x9c] sm:$0xe]
        %v4601 = vld [vmem:[%s3446 + $0xa8] sm:$0xe]
        %v4602 = vld [vmem:[%s3446 + $0xb4] sm:$0xe]
        %v4651 = vrot.slane %v4587, 5
        %v4652 = vrot.slane %v4651, 4
        %v4653 = vrot.slane %v3834, 5
        %v4654 = vsel %vm1366, %v4652, %v4653
        %v4655 = vrot.slane %v4653, 4
        %v4656 = vrot.slane %v3835, 5
        %v4657 = vsel %vm1366, %v4655, %v4656
        %v4658 = vrot.slane %v4588, 5
        %v4659 = vrot.slane %v4658, 4
        %v4660 = vrot.slane %v3837, 5
        %v4661 = vsel %vm1366, %v4659, %v4660
        %v4662 = vrot.slane %v4660, 4
        %v4663 = vrot.slane %v3838, 5
        %v4664 = vsel %vm1366, %v4662, %v4663
        %v4665 = vrot.slane %v4589, 5
        %v4666 = vrot.slane %v4665, 4
        %v4667 = vrot.slane %v3840, 5
        %v4668 = vsel %vm1366, %v4666, %v4667
        %v4669 = vrot.slane %v4667, 4
        %v4670 = vrot.slane %v3841, 5
        %v4671 = vsel %vm1366, %v4669, %v4670
        %v4672 = vrot.slane %v4590, 5
        %v4673 = vrot.slane %v4672, 4
        %v4674 = vrot.slane %v3843, 5
        %v4675 = vsel %vm1366, %v4673, %v4674
        %v4676 = vrot.slane %v4674, 4
        %v4677 = vrot.slane %v3844, 5
        %v4678 = vsel %vm1366, %v4676, %v4677
        %v4679 = vrot.slane %v4591, 5
        %v4680 = vrot.slane %v4679, 4
        %v4681 = vrot.slane %v3846, 5
        %v4682 = vsel %vm1366, %v4680, %v4681
        %v4683 = vrot.slane %v4681, 4
        %v4684 = vrot.slane %v3847, 5
        %v4685 = vsel %vm1366, %v4683, %v4684
        %v4686 = vrot.slane %v4592, 5
        %v4687 = vrot.slane %v4686, 4
        %v4688 = vrot.slane %v3849, 5
        %v4689 = vsel %vm1366, %v4687, %v4688
        %v4690 = vrot.slane %v4688, 4
        %v4691 = vrot.slane %v3850, 5
        %v4692 = vsel %vm1366, %v4690, %v4691
        %v4693 = vrot.slane %v4593, 5
        %v4694 = vrot.slane %v4693, 4
        %v4695 = vrot.slane %v3852, 5
        %v4696 = vsel %vm1366, %v4694, %v4695
        %v4697 = vrot.slane %v4695, 4
        %v4698 = vrot.slane %v3853, 5
        %v4699 = vsel %vm1366, %v4697, %v4698
        %v4700 = vrot.slane %v4594, 5
        %v4701 = vrot.slane %v4700, 4
        %v4702 = vrot.slane %v3855, 5
        %v4703 = vsel %vm1366, %v4701, %v4702
        %v4704 = vrot.slane %v4702, 4
        %v4705 = vrot.slane %v3856, 5
        %v4706 = vsel %vm1366, %v4704, %v4705
        %v4707 = vrot.slane %v4595, 5
        %v4708 = vrot.slane %v4707, 4
        %v4709 = vrot.slane %v3858, 5
        %v4710 = vsel %vm1366, %v4708, %v4709
        %v4711 = vrot.slane %v4709, 4
        %v4712 = vrot.slane %v3859, 5
        %v4713 = vsel %vm1366, %v4711, %v4712
        %v4714 = vrot.slane %v4596, 5
        %v4715 = vrot.slane %v4714, 4
        %v4716 = vrot.slane %v3861, 5
        %v4717 = vsel %vm1366, %v4715, %v4716
        %v4718 = vrot.slane %v4716, 4
        %v4719 = vrot.slane %v3862, 5
        %v4720 = vsel %vm1366, %v4718, %v4719
        %v4721 = vrot.slane %v4597, 5
        %v4722 = vrot.slane %v4721, 4
        %v4723 = vrot.slane %v3864, 5
        %v4724 = vsel %vm1366, %v4722, %v4723
        %v4725 = vrot.slane %v4723, 4
        %v4726 = vrot.slane %v3865, 5
        %v4727 = vsel %vm1366, %v4725, %v4726
        %v4728 = vrot.slane %v4598, 5
        %v4729 = vrot.slane %v4728, 4
        %v4730 = vrot.slane %v3867, 5
        %v4731 = vsel %vm1366, %v4729, %v4730
        %v4732 = vrot.slane %v4730, 4
        %v4733 = vrot.slane %v3868, 5
        %v4734 = vsel %vm1366, %v4732, %v4733
        %v4735 = vrot.slane %v4599, 5
        %v4736 = vrot.slane %v4735, 4
        %v4737 = vrot.slane %v3870, 5
        %v4738 = vsel %vm1366, %v4736, %v4737
        %v4739 = vrot.slane %v4737, 4
        %v4740 = vrot.slane %v3871, 5
        %v4741 = vsel %vm1366, %v4739, %v4740
        %v4742 = vrot.slane %v4600, 5
        %v4743 = vrot.slane %v4742, 4
        %v4744 = vrot.slane %v3873, 5
        %v4745 = vsel %vm1366, %v4743, %v4744
        %v4746 = vrot.slane %v4744, 4
        %v4747 = vrot.slane %v3874, 5
        %v4748 = vsel %vm1366, %v4746, %v4747
        %v4749 = vrot.slane %v4601, 5
        %v4750 = vrot.slane %v4749, 4
        %v4751 = vrot.slane %v3876, 5
        %v4752 = vsel %vm1366, %v4750, %v4751
        %v4753 = vrot.slane %v4751, 4
        %v4754 = vrot.slane %v3877, 5
        %v4755 = vsel %vm1366, %v4753, %v4754
        %v4756 = vrot.slane %v4602, 5
        %v4757 = vrot.slane %v4756, 4
        %v4758 = vrot.slane %v3879, 5
        %v4759 = vsel %vm1366, %v4757, %v4758
        %v4760 = vrot.slane %v4758, 4
        %v4761 = vrot.slane %v3880, 5
        %v4762 = vsel %vm1366, %v4760, %v4761
        %s4763 = scalar_lea.vmem %s257, 512
        %v4764 = vld [vmem:[%s4763] sm:$0xf]
        %v4765 = vld [vmem:[%s4763 + $0x4] sm:$0xf]
        %v4766 = vld [vmem:[%s4763 + $0x8] sm:$0xf]
        %v4767 = vld [vmem:[%s4763 + $0xc] sm:$0xf]
        %v4768 = vld [vmem:[%s4763 + $0x10] sm:$0xf]
        %v4769 = vld [vmem:[%s4763 + $0x14] sm:$0xf]
        %v4770 = vld [vmem:[%s4763 + $0x18] sm:$0xf]
        %v4771 = vld [vmem:[%s4763 + $0x1c] sm:$0xf]
        %v4772 = vld [vmem:[%s4763 + $0x20] sm:$0xf]
        %v4773 = vld [vmem:[%s4763 + $0x24] sm:$0xf]
        %v4774 = vld [vmem:[%s4763 + $0x28] sm:$0xf]
        %v4775 = vld [vmem:[%s4763 + $0x2c] sm:$0xf]
        %v4776 = vld [vmem:[%s4763 + $0x30] sm:$0xf]
        %v4777 = vld [vmem:[%s4763 + $0x34] sm:$0xf]
        %v4778 = vld [vmem:[%s4763 + $0x38] sm:$0xf]
        %v4779 = vld [vmem:[%s4763 + $0x3c] sm:$0xf]
        %v4780 = vunpack.c.l.b16 %v4654
        %v4781 = vunpack.c.l.b16 %v4657
        %v4782 = vunpack.c.l.b16 %v4661
        %v4783 = vunpack.c.l.b16 %v4664
        %v4784 = vunpack.c.l.b16 %v4668
        %v4785 = vunpack.c.l.b16 %v4671
        %v4786 = vunpack.c.l.b16 %v4675
        %v4787 = vunpack.c.l.b16 %v4678
        %v4788 = vunpack.c.l.b16 %v4682
        %v4789 = vunpack.c.l.b16 %v4685
        %v4790 = vunpack.c.l.b16 %v4689
        %v4791 = vunpack.c.l.b16 %v4692
        %v4792 = vunpack.c.l.b16 %v4696
        %v4793 = vunpack.c.l.b16 %v4699
        %v4794 = vunpack.c.l.b16 %v4703
        %v4795 = vunpack.c.l.b16 %v4706
        %v4796 = vunpack.c.l.b16 %v4710
        %v4797 = vunpack.c.l.b16 %v4713
        %v4798 = vunpack.c.l.b16 %v4717
        %v4799 = vunpack.c.l.b16 %v4720
        %v4800 = vunpack.c.l.b16 %v4724
        %v4801 = vunpack.c.l.b16 %v4727
        %v4802 = vunpack.c.l.b16 %v4731
        %v4803 = vunpack.c.l.b16 %v4734
        %v4804 = vunpack.c.l.b16 %v4738
        %v4805 = vunpack.c.l.b16 %v4741
        %v4806 = vunpack.c.l.b16 %v4745
        %v4807 = vunpack.c.l.b16 %v4748
        %v4808 = vunpack.c.l.b16 %v4752
        %v4809 = vunpack.c.l.b16 %v4755
        %v4810 = vunpack.c.l.b16 %v4759
        %v4811 = vunpack.c.l.b16 %v4762
        %v4812 = vpack.c.b16 %v4781, %v4780
        %v4813 = vpack.c.b16 %v4783, %v4782
        %v4814 = vpack.c.b16 %v4785, %v4784
        %v4815 = vpack.c.b16 %v4787, %v4786
        %v4816 = vpack.c.b16 %v4789, %v4788
        %v4817 = vpack.c.b16 %v4791, %v4790
        %v4818 = vpack.c.b16 %v4793, %v4792
        %v4819 = vpack.c.b16 %v4795, %v4794
        %v4820 = vpack.c.b16 %v4797, %v4796
        %v4821 = vpack.c.b16 %v4799, %v4798
        %v4822 = vpack.c.b16 %v4801, %v4800
        %v4823 = vpack.c.b16 %v4803, %v4802
        %v4824 = vpack.c.b16 %v4805, %v4804
        %v4825 = vpack.c.b16 %v4807, %v4806
        %v4826 = vpack.c.b16 %v4809, %v4808
        %v4827 = vpack.c.b16 %v4811, %v4810
        %v4860 = vunpack.c.l.b16 %v4764
        %v4861 = vunpack.c.l.b16 %v4765
        %v4862 = vunpack.c.l.b16 %v4766
        %v4863 = vunpack.c.l.b16 %v4767
        %v4864 = vunpack.c.l.b16 %v4768
        %v4865 = vunpack.c.l.b16 %v4769
        %v4866 = vunpack.c.l.b16 %v4770
        %v4867 = vunpack.c.l.b16 %v4771
        %v4868 = vunpack.c.l.b16 %v4772
        %v4869 = vunpack.c.l.b16 %v4773
        %v4870 = vunpack.c.l.b16 %v4774
        %v4871 = vunpack.c.l.b16 %v4775
        %v4872 = vunpack.c.l.b16 %v4776
        %v4873 = vunpack.c.l.b16 %v4777
        %v4874 = vunpack.c.l.b16 %v4778
        %v4875 = vunpack.c.l.b16 %v4779
        %v4876 = vpack.c.b16 %v4861, %v4860
        %v4877 = vpack.c.b16 %v4863, %v4862
        %v4878 = vpack.c.b16 %v4865, %v4864
        %v4879 = vpack.c.b16 %v4867, %v4866
        %v4880 = vpack.c.b16 %v4869, %v4868
        %v4881 = vpack.c.b16 %v4871, %v4870
        %v4882 = vpack.c.b16 %v4873, %v4872
        %v4883 = vpack.c.b16 %v4875, %v4874
        %4892 = vmatprep.subr.bf16.mxu0 0
        %4893 = vmatpush1.bf16.msra.mxu0 %v4876
        %4894 = vmatprep.subr.bf16.mxu0 0
        %4895 = vmatpush1.bf16.msra.mxu0 %v4877
        %4896 = vmatprep.subr.bf16.mxu0 0
        %4897 = vmatpush1.bf16.msra.mxu0 %v4878
        %4898 = vmatprep.subr.bf16.mxu0 0
        %4899 = vmatpush1.bf16.msra.mxu0 %v4879
        %4900 = vmatprep.subr.bf16.mxu0 0
        %4901 = vmatpush1.bf16.msra.mxu0 %v4880
        %4902 = vmatprep.subr.bf16.mxu0 0
        %4903 = vmatpush1.bf16.msra.mxu0 %v4881
        %4904 = vmatprep.subr.bf16.mxu0 0
        %4905 = vmatpush1.bf16.msra.mxu0 %v4882
        %4906 = vmatprep.subr.bf16.mxu0 0
        %4907 = vmatpush1.bf16.msra.mxu0 %v4883
        %4908 = vmatprep.subr.bf16.mxu0 0
        %4909 = vmatpush1.bf16.msra.mxu0 0
        %4910 = vmatprep.subr.bf16.mxu0 0
        %4911 = vmatpush1.bf16.msra.mxu0 0
        %4912 = vmatprep.subr.bf16.mxu0 0
        %4913 = vmatpush1.bf16.msra.mxu0 0
        %4914 = vmatprep.subr.bf16.mxu0 0
        %4915 = vmatpush1.bf16.msra.mxu0 0
        %4916 = vmatprep.subr.bf16.mxu0 0
        %4917 = vmatpush1.bf16.msra.mxu0 0
        %4918 = vmatprep.subr.bf16.mxu0 0
        %4919 = vmatpush1.bf16.msra.mxu0 0
        %4920 = vmatprep.subr.bf16.mxu0 0
        %4921 = vmatpush1.bf16.msra.mxu0 0
        %4922 = vmatprep.subr.bf16.mxu0 0
        %4923 = vmatpush1.bf16.msra.mxu0 0
        %4924 = vmatprep.mubr.bf16.mxu0 0
        %4925 = vmatmul.mubr.bf16.gmra.mrb[0].mxu0 %v4812
        %v4926 = vpop.f32.mrb[0].mxu0
        %v4927 = vadd.f32 0.0, %v4926
        %v4928 = vpop.f32.mrb[0].mxu0
        %v4929 = vpop.f32.mrb[0].mxu0
        %v4930 = vadd.f32 0.0, %v4929
        %v4931 = vpop.f32.mrb[0].mxu0
        %4932 = vmatprep.mubr.bf16.mxu0 0
        %4933 = vmatmul.mubr.bf16.gmra.mrb[0].mxu0 %v4813
        %v4934 = vpop.f32.mrb[0].mxu0
        %v4935 = vadd.f32 0.0, %v4934
        %v4936 = vpop.f32.mrb[0].mxu0
        %v4937 = vpop.f32.mrb[0].mxu0
        %v4938 = vadd.f32 0.0, %v4937
        %v4939 = vpop.f32.mrb[0].mxu0
        %4940 = vmatprep.mubr.bf16.mxu0 0
        %4941 = vmatmul.mubr.bf16.gmra.mrb[0].mxu0 %v4814
        %v4942 = vpop.f32.mrb[0].mxu0
        %v4943 = vadd.f32 0.0, %v4942
        %v4944 = vpop.f32.mrb[0].mxu0
        %v4945 = vpop.f32.mrb[0].mxu0
        %v4946 = vadd.f32 0.0, %v4945
        %v4947 = vpop.f32.mrb[0].mxu0
        %4948 = vmatprep.mubr.bf16.mxu0 0
        %4949 = vmatmul.mubr.bf16.gmra.mrb[0].mxu0 %v4815
        %v4950 = vpop.f32.mrb[0].mxu0
        %v4951 = vadd.f32 0.0, %v4950
        %v4952 = vpop.f32.mrb[0].mxu0
        %v4953 = vpop.f32.mrb[0].mxu0
        %v4954 = vadd.f32 0.0, %v4953
        %v4955 = vpop.f32.mrb[0].mxu0
        %4956 = vmatprep.mubr.bf16.mxu0 0
        %4957 = vmatmul.mubr.bf16.gmra.mrb[0].mxu0 %v4816
        %v4958 = vpop.f32.mrb[0].mxu0
        %v4959 = vadd.f32 0.0, %v4958
        %v4960 = vpop.f32.mrb[0].mxu0
        %v4961 = vpop.f32.mrb[0].mxu0
        %v4962 = vadd.f32 0.0, %v4961
        %v4963 = vpop.f32.mrb[0].mxu0
        %4964 = vmatprep.mubr.bf16.mxu0 0
        %4965 = vmatmul.mubr.bf16.gmra.mrb[0].mxu0 %v4817
        %v4966 = vpop.f32.mrb[0].mxu0
        %v4967 = vadd.f32 0.0, %v4966
        %v4968 = vpop.f32.mrb[0].mxu0
        %v4969 = vpop.f32.mrb[0].mxu0
        %v4970 = vadd.f32 0.0, %v4969
        %v4971 = vpop.f32.mrb[0].mxu0
        %4972 = vmatprep.mubr.bf16.mxu0 0
        %4973 = vmatmul.mubr.bf16.gmra.mrb[0].mxu0 %v4818
        %v4974 = vpop.f32.mrb[0].mxu0
        %v4975 = vadd.f32 0.0, %v4974
        %v4976 = vpop.f32.mrb[0].mxu0
        %v4977 = vpop.f32.mrb[0].mxu0
        %v4978 = vadd.f32 0.0, %v4977
        %v4979 = vpop.f32.mrb[0].mxu0
        %4980 = vmatprep.mubr.bf16.mxu0 0
        %4981 = vmatmul.mubr.bf16.gmra.mrb[0].mxu0 %v4819
        %v4982 = vpop.f32.mrb[0].mxu0
        %v4983 = vadd.f32 0.0, %v4982
        %v4984 = vpop.f32.mrb[0].mxu0
        %v4985 = vpop.f32.mrb[0].mxu0
        %v4986 = vadd.f32 0.0, %v4985
        %v4987 = vpop.f32.mrb[0].mxu0
        %4988 = vmatprep.mubr.bf16.mxu0 0
        %4989 = vmatmul.mubr.bf16.gmra.mrb[0].mxu0 %v4820
        %v4990 = vpop.f32.mrb[0].mxu0
        %v4991 = vadd.f32 0.0, %v4990
        %v4992 = vpop.f32.mrb[0].mxu0
        %v4993 = vpop.f32.mrb[0].mxu0
        %v4994 = vadd.f32 0.0, %v4993
        %v4995 = vpop.f32.mrb[0].mxu0
        %4996 = vmatprep.mubr.bf16.mxu0 0
        %4997 = vmatmul.mubr.bf16.gmra.mrb[0].mxu0 %v4821
        %v4998 = vpop.f32.mrb[0].mxu0
        %v4999 = vadd.f32 0.0, %v4998
        %v5000 = vpop.f32.mrb[0].mxu0
        %v5001 = vpop.f32.mrb[0].mxu0
        %v5002 = vadd.f32 0.0, %v5001
        %v5003 = vpop.f32.mrb[0].mxu0
        %5004 = vmatprep.mubr.bf16.mxu0 0
        %5005 = vmatmul.mubr.bf16.gmra.mrb[0].mxu0 %v4822
        %v5006 = vpop.f32.mrb[0].mxu0
        %v5007 = vadd.f32 0.0, %v5006
        %v5008 = vpop.f32.mrb[0].mxu0
        %v5009 = vpop.f32.mrb[0].mxu0
        %v5010 = vadd.f32 0.0, %v5009
        %v5011 = vpop.f32.mrb[0].mxu0
        %5012 = vmatprep.mubr.bf16.mxu0 0
        %5013 = vmatmul.mubr.bf16.gmra.mrb[0].mxu0 %v4823
        %v5014 = vpop.f32.mrb[0].mxu0
        %v5015 = vadd.f32 0.0, %v5014
        %v5016 = vpop.f32.mrb[0].mxu0
        %v5017 = vpop.f32.mrb[0].mxu0
        %v5018 = vadd.f32 0.0, %v5017
        %v5019 = vpop.f32.mrb[0].mxu0
        %5020 = vmatprep.mubr.bf16.mxu0 0
        %5021 = vmatmul.mubr.bf16.gmra.mrb[0].mxu0 %v4824
        %v5022 = vpop.f32.mrb[0].mxu0
        %v5023 = vadd.f32 0.0, %v5022
        %v5024 = vpop.f32.mrb[0].mxu0
        %v5025 = vpop.f32.mrb[0].mxu0
        %v5026 = vadd.f32 0.0, %v5025
        %v5027 = vpop.f32.mrb[0].mxu0
        %5028 = vmatprep.mubr.bf16.mxu0 0
        %5029 = vmatmul.mubr.bf16.gmra.mrb[0].mxu0 %v4825
        %v5030 = vpop.f32.mrb[0].mxu0
        %v5031 = vadd.f32 0.0, %v5030
        %v5032 = vpop.f32.mrb[0].mxu0
        %v5033 = vpop.f32.mrb[0].mxu0
        %v5034 = vadd.f32 0.0, %v5033
        %v5035 = vpop.f32.mrb[0].mxu0
        %5036 = vmatprep.mubr.bf16.mxu0 0
        %5037 = vmatmul.mubr.bf16.gmra.mrb[0].mxu0 %v4826
        %v5038 = vpop.f32.mrb[0].mxu0
        %v5039 = vadd.f32 0.0, %v5038
        %v5040 = vpop.f32.mrb[0].mxu0
        %v5041 = vpop.f32.mrb[0].mxu0
        %v5042 = vadd.f32 0.0, %v5041
        %v5043 = vpop.f32.mrb[0].mxu0
        %5044 = vmatprep.mubr.bf16.mxu0 0
        %5045 = vmatmul.mubr.bf16.gmra.mrb[0].mxu0 %v4827
        %v5046 = vpop.f32.mrb[0].mxu0
        %v5047 = vadd.f32 0.0, %v5046
        %v5048 = vpop.f32.mrb[0].mxu0
        %v5049 = vpop.f32.mrb[0].mxu0
        %v5050 = vadd.f32 0.0, %v5049
        %v5051 = vpop.f32.mrb[0].mxu0
        %5052 = vdwg.mxu0
        %v5053 = vadd.f32 %v4555, %v4927
        %v5054 = vadd.f32 %v4556, %v4930
        %v5055 = vadd.f32 %v4557, %v4935
        %v5056 = vadd.f32 %v4558, %v4938
        %v5057 = vadd.f32 %v4559, %v4943
        %v5058 = vadd.f32 %v4560, %v4946
        %v5059 = vadd.f32 %v4561, %v4951
        %v5060 = vadd.f32 %v4562, %v4954
        %v5061 = vadd.f32 %v4563, %v4959
        %v5062 = vadd.f32 %v4564, %v4962
        %v5063 = vadd.f32 %v4565, %v4967
        %v5064 = vadd.f32 %v4566, %v4970
        %v5065 = vadd.f32 %v4567, %v4975
        %v5066 = vadd.f32 %v4568, %v4978
        %v5067 = vadd.f32 %v4569, %v4983
        %v5068 = vadd.f32 %v4570, %v4986
        %v5069 = vadd.f32 %v4571, %v4991
        %v5070 = vadd.f32 %v4572, %v4994
        %v5071 = vadd.f32 %v4573, %v4999
        %v5072 = vadd.f32 %v4574, %v5002
        %v5073 = vadd.f32 %v4575, %v5007
        %v5074 = vadd.f32 %v4576, %v5010
        %v5075 = vadd.f32 %v4577, %v5015
        %v5076 = vadd.f32 %v4578, %v5018
        %v5077 = vadd.f32 %v4579, %v5023
        %v5078 = vadd.f32 %v4580, %v5026
        %v5079 = vadd.f32 %v4581, %v5031
        %v5080 = vadd.f32 %v4582, %v5034
        %v5081 = vadd.f32 %v4583, %v5039
        %v5082 = vadd.f32 %v4584, %v5042
        %v5083 = vadd.f32 %v4585, %v5047
        %v5084 = vadd.f32 %v4586, %v5050
        %v5085 = vld [vmem:[%s260] sm:$0x1]
        %v5087 = vlaneseq
        %v5088 = vshrl.u32 %v5087, 7
        %v5089 = vsub.s32 0, %v5088
        %v5090 = vrot.slane %v5085, %v5089
        %v5092 = vmul.f32 %v5053, %v5090
        %v5093 = vmul.f32 %v5054, %v5090
        %v5094 = vmul.f32 %v5055, %v5090
        %v5095 = vmul.f32 %v5056, %v5090
        %v5096 = vmul.f32 %v5057, %v5090
        %v5097 = vmul.f32 %v5058, %v5090
        %v5098 = vmul.f32 %v5059, %v5090
        %v5099 = vmul.f32 %v5060, %v5090
        %v5100 = vmul.f32 %v5061, %v5090
        %v5101 = vmul.f32 %v5062, %v5090
        %v5102 = vmul.f32 %v5063, %v5090
        %v5103 = vmul.f32 %v5064, %v5090
        %v5104 = vmul.f32 %v5065, %v5090
        %v5105 = vmul.f32 %v5066, %v5090
        %v5106 = vmul.f32 %v5067, %v5090
        %v5107 = vmul.f32 %v5068, %v5090
        %v5108 = vmul.f32 %v5069, %v5090
        %v5109 = vmul.f32 %v5070, %v5090
        %v5110 = vmul.f32 %v5071, %v5090
        %v5111 = vmul.f32 %v5072, %v5090
        %v5112 = vmul.f32 %v5073, %v5090
        %v5113 = vmul.f32 %v5074, %v5090
        %v5114 = vmul.f32 %v5075, %v5090
        %v5115 = vmul.f32 %v5076, %v5090
        %v5116 = vmul.f32 %v5077, %v5090
        %v5117 = vmul.f32 %v5078, %v5090
        %v5118 = vmul.f32 %v5079, %v5090
        %v5119 = vmul.f32 %v5080, %v5090
        %v5120 = vmul.f32 %v5081, %v5090
        %v5121 = vmul.f32 %v5082, %v5090
        %v5122 = vmul.f32 %v5083, %v5090
        %v5123 = vmul.f32 %v5084, %v5090
        %v5124 = vld [vmem:[%s263] sm:$0x1]
        %v5126 = vlaneseq
        %v5127 = vshrl.u32 %v5126, 7
        %v5128 = vsub.s32 0, %v5127
        %v5129 = vrot.slane %v5124, %v5128
        %v5131 = vadd.f32 %v5092, %v5129
        %v5132 = vadd.f32 %v5093, %v5129
        %v5133 = vadd.f32 %v5094, %v5129
        %v5134 = vadd.f32 %v5095, %v5129
        %v5135 = vadd.f32 %v5096, %v5129
        %v5136 = vadd.f32 %v5097, %v5129
        %v5137 = vadd.f32 %v5098, %v5129
        %v5138 = vadd.f32 %v5099, %v5129
        %v5139 = vadd.f32 %v5100, %v5129
        %v5140 = vadd.f32 %v5101, %v5129
        %v5141 = vadd.f32 %v5102, %v5129
        %v5142 = vadd.f32 %v5103, %v5129
        %v5143 = vadd.f32 %v5104, %v5129
        %v5144 = vadd.f32 %v5105, %v5129
        %v5145 = vadd.f32 %v5106, %v5129
        %v5146 = vadd.f32 %v5107, %v5129
        %v5147 = vadd.f32 %v5108, %v5129
        %v5148 = vadd.f32 %v5109, %v5129
        %v5149 = vadd.f32 %v5110, %v5129
        %v5150 = vadd.f32 %v5111, %v5129
        %v5151 = vadd.f32 %v5112, %v5129
        %v5152 = vadd.f32 %v5113, %v5129
        %v5153 = vadd.f32 %v5114, %v5129
        %v5154 = vadd.f32 %v5115, %v5129
        %v5155 = vadd.f32 %v5116, %v5129
        %v5156 = vadd.f32 %v5117, %v5129
        %v5157 = vadd.f32 %v5118, %v5129
        %v5158 = vadd.f32 %v5119, %v5129
        %v5159 = vadd.f32 %v5120, %v5129
        %v5160 = vadd.f32 %v5121, %v5129
        %v5161 = vadd.f32 %v5122, %v5129
        %v5162 = vadd.f32 %v5123, %v5129
        %v5163 = vmax.f32 %v5131, 0.0
        %v5164 = vmax.f32 %v5132, 0.0
        %v5165 = vmax.f32 %v5133, 0.0
        %v5166 = vmax.f32 %v5134, 0.0
        %v5167 = vmax.f32 %v5135, 0.0
        %v5168 = vmax.f32 %v5136, 0.0
        %v5169 = vmax.f32 %v5137, 0.0
        %v5170 = vmax.f32 %v5138, 0.0
        %v5171 = vmax.f32 %v5139, 0.0
        %v5172 = vmax.f32 %v5140, 0.0
        %v5173 = vmax.f32 %v5141, 0.0
        %v5174 = vmax.f32 %v5142, 0.0
        %v5175 = vmax.f32 %v5143, 0.0
        %v5176 = vmax.f32 %v5144, 0.0
        %v5177 = vmax.f32 %v5145, 0.0
        %v5178 = vmax.f32 %v5146, 0.0
        %v5179 = vmax.f32 %v5147, 0.0
        %v5180 = vmax.f32 %v5148, 0.0
        %v5181 = vmax.f32 %v5149, 0.0
        %v5182 = vmax.f32 %v5150, 0.0
        %v5183 = vmax.f32 %v5151, 0.0
        %v5184 = vmax.f32 %v5152, 0.0
        %v5185 = vmax.f32 %v5153, 0.0
        %v5186 = vmax.f32 %v5154, 0.0
        %v5187 = vmax.f32 %v5155, 0.0
        %v5188 = vmax.f32 %v5156, 0.0
        %v5189 = vmax.f32 %v5157, 0.0
        %v5190 = vmax.f32 %v5158, 0.0
        %v5191 = vmax.f32 %v5159, 0.0
        %v5192 = vmax.f32 %v5160, 0.0
        %v5193 = vmax.f32 %v5161, 0.0
        %v5194 = vmax.f32 %v5162, 0.0
        %v5195 = vpack.c.bf16 %v5164, %v5163
        %v5196 = vpack.c.bf16 %v5166, %v5165
        %v5197 = vpack.c.bf16 %v5168, %v5167
        %v5198 = vpack.c.bf16 %v5170, %v5169
        %v5199 = vpack.c.bf16 %v5172, %v5171
        %v5200 = vpack.c.bf16 %v5174, %v5173
        %v5201 = vpack.c.bf16 %v5176, %v5175
        %v5202 = vpack.c.bf16 %v5178, %v5177
        %v5203 = vpack.c.bf16 %v5180, %v5179
        %v5204 = vpack.c.bf16 %v5182, %v5181
        %v5205 = vpack.c.bf16 %v5184, %v5183
        %v5206 = vpack.c.bf16 %v5186, %v5185
        %v5207 = vpack.c.bf16 %v5188, %v5187
        %v5208 = vpack.c.bf16 %v5190, %v5189
        %v5209 = vpack.c.bf16 %v5192, %v5191
        %v5210 = vpack.c.bf16 %v5194, %v5193
        %v5227 = vunpack.c.l.b16 %v5195
        %v5228 = vunpack.c.h.b16 %v5195
        %v5229 = vunpack.c.l.b16 %v5196
        %v5230 = vunpack.c.h.b16 %v5196
        %v5231 = vunpack.c.l.b16 %v5197
        %v5232 = vunpack.c.h.b16 %v5197
        %v5233 = vunpack.c.l.b16 %v5198
        %v5234 = vunpack.c.h.b16 %v5198
        %v5235 = vunpack.c.l.b16 %v5199
        %v5236 = vunpack.c.h.b16 %v5199
        %v5237 = vunpack.c.l.b16 %v5200
        %v5238 = vunpack.c.h.b16 %v5200
        %v5239 = vunpack.c.l.b16 %v5201
        %v5240 = vunpack.c.h.b16 %v5201
        %v5241 = vunpack.c.l.b16 %v5202
        %v5242 = vunpack.c.h.b16 %v5202
        %v5243 = vunpack.c.l.b16 %v5203
        %v5244 = vunpack.c.h.b16 %v5203
        %v5245 = vunpack.c.l.b16 %v5204
        %v5246 = vunpack.c.h.b16 %v5204
        %v5247 = vunpack.c.l.b16 %v5205
        %v5248 = vunpack.c.h.b16 %v5205
        %v5249 = vunpack.c.l.b16 %v5206
        %v5250 = vunpack.c.h.b16 %v5206
        %v5251 = vunpack.c.l.b16 %v5207
        %v5252 = vunpack.c.h.b16 %v5207
        %v5253 = vunpack.c.l.b16 %v5208
        %v5254 = vunpack.c.h.b16 %v5208
        %v5255 = vunpack.c.l.b16 %v5209
        %v5256 = vunpack.c.h.b16 %v5209
        %v5257 = vunpack.c.l.b16 %v5210
        %v5258 = vunpack.c.h.b16 %v5210
        %v5259 = vpack.c.b16 %v5227, %v5227
        %v5260 = vpack.c.b16 %v5228, %v5228
        %v5261 = vpack.c.b16 %v5229, %v5229
        %v5262 = vpack.c.b16 %v5230, %v5230
        %v5263 = vpack.c.b16 %v5231, %v5231
        %v5264 = vpack.c.b16 %v5232, %v5232
        %v5265 = vpack.c.b16 %v5233, %v5233
        %v5266 = vpack.c.b16 %v5234, %v5234
        %v5267 = vpack.c.b16 %v5235, %v5235
        %v5268 = vpack.c.b16 %v5236, %v5236
        %v5269 = vpack.c.b16 %v5237, %v5237
        %v5270 = vpack.c.b16 %v5238, %v5238
        %v5271 = vpack.c.b16 %v5239, %v5239
        %v5272 = vpack.c.b16 %v5240, %v5240
        %v5273 = vpack.c.b16 %v5241, %v5241
        %v5274 = vpack.c.b16 %v5242, %v5242
        %v5275 = vpack.c.b16 %v5243, %v5243
        %v5276 = vpack.c.b16 %v5244, %v5244
        %v5277 = vpack.c.b16 %v5245, %v5245
        %v5278 = vpack.c.b16 %v5246, %v5246
        %v5279 = vpack.c.b16 %v5247, %v5247
        %v5280 = vpack.c.b16 %v5248, %v5248
        %v5281 = vpack.c.b16 %v5249, %v5249
        %v5282 = vpack.c.b16 %v5250, %v5250
        %v5283 = vpack.c.b16 %v5251, %v5251
        %v5284 = vpack.c.b16 %v5252, %v5252
        %v5285 = vpack.c.b16 %v5253, %v5253
        %v5286 = vpack.c.b16 %v5254, %v5254
        %v5287 = vpack.c.b16 %v5255, %v5255
        %v5288 = vpack.c.b16 %v5256, %v5256
        %v5289 = vpack.c.b16 %v5257, %v5257
        %v5290 = vpack.c.b16 %v5258, %v5258
        %5323 = vst [vmem:[%s248] sm:$0xf] %v5259
        %5324 = vst [vmem:[%s248 + $0x4] sm:$0xf] %v5260
        %5325 = vst [vmem:[%s248 + $0x8] sm:$0xf] %v5261
        %5326 = vst [vmem:[%s248 + $0xc] sm:$0xf] %v5262
        %5327 = vst [vmem:[%s248 + $0x10] sm:$0xf] %v5263
        %5328 = vst [vmem:[%s248 + $0x14] sm:$0xf] %v5264
        %5329 = vst [vmem:[%s248 + $0x18] sm:$0xf] %v5265
        %5330 = vst [vmem:[%s248 + $0x1c] sm:$0xf] %v5266
        %5331 = vst [vmem:[%s248 + $0x20] sm:$0xf] %v5267
        %5332 = vst [vmem:[%s248 + $0x24] sm:$0xf] %v5268
        %5333 = vst [vmem:[%s248 + $0x28] sm:$0xf] %v5269
        %5334 = vst [vmem:[%s248 + $0x2c] sm:$0xf] %v5270
        %5335 = vst [vmem:[%s248 + $0x30] sm:$0xf] %v5271
        %5336 = vst [vmem:[%s248 + $0x34] sm:$0xf] %v5272
        %5337 = vst [vmem:[%s248 + $0x38] sm:$0xf] %v5273
        %5338 = vst [vmem:[%s248 + $0x3c] sm:$0xf] %v5274
        %5339 = vst [vmem:[%s248 + $0x40] sm:$0xf] %v5275
        %5340 = vst [vmem:[%s248 + $0x44] sm:$0xf] %v5276
        %5341 = vst [vmem:[%s248 + $0x48] sm:$0xf] %v5277
        %5342 = vst [vmem:[%s248 + $0x4c] sm:$0xf] %v5278
        %5343 = vst [vmem:[%s248 + $0x50] sm:$0xf] %v5279
        %5344 = vst [vmem:[%s248 + $0x54] sm:$0xf] %v5280
        %5345 = vst [vmem:[%s248 + $0x58] sm:$0xf] %v5281
        %5346 = vst [vmem:[%s248 + $0x5c] sm:$0xf] %v5282
        %5347 = vst [vmem:[%s248 + $0x60] sm:$0xf] %v5283
        %5348 = vst [vmem:[%s248 + $0x64] sm:$0xf] %v5284
        %5349 = vst [vmem:[%s248 + $0x68] sm:$0xf] %v5285
        %5350 = vst [vmem:[%s248 + $0x6c] sm:$0xf] %v5286
        %5351 = vst [vmem:[%s248 + $0x70] sm:$0xf] %v5287
        %5352 = vst [vmem:[%s248 + $0x74] sm:$0xf] %v5288
        %5353 = vst [vmem:[%s248 + $0x78] sm:$0xf] %v5289
        %5354 = vst [vmem:[%s248 + $0x7c] sm:$0xf] %v5290
        %s5355 = sand.u32 %s153, 1
        %s5356 = scalar_lea.sflag [#allocation3], %s5355
        %s5357 = sand.u32 %s153, 1
        %s5358 = smul.addr %s5357, 128
        %s5359 = scalar_lea.vmem [#allocation2], %s5358
        // Predicated region
        $region37: #{tpu_custom_call.1} parent=35 // pred_check
          %p5360 = pneg %p163
        $region38: #{tpu_custom_call.1} parent=35 // pred_check_branch
          %5362 = sbr.rel (%p5360) target = $region40
        $region39: #{tpu_custom_call.1} parent=35 // pred_region
          %s5363 = smul.u32 16, %s25
          %s5365 = ssub.s32 2048, 2048
          %5366 = vsyncadd %s5356, %s5365
          %s5367 = smul.addr %s5363, 2
          %s5368 = sadd.s32 %s23, %s5367
          %s5369 = smul.addr %s24, 32
          %s5370 = sadd.s32 %s5368, %s5369
          %s5371 = smul.addr %s5370, 64
          %s5372 = scalar_lea.hbm %s4, %s5371
          %s5373 = sshll.u32 %s5359, 4
          %s5374 = int_to_ptr.vmem [resolvable:$true] %s5373
          %5379 = dma.vmem_to_hbm [thread:$0]  %s5374, 2048, %s5372, %s5356, 64, 64, 4
        $region40: #{tpu_custom_call.1} parent=35 // pred_fallthru
          _
      $region36: #{tpu_custom_call.1} parent=5 // pred_fallthru
        _
      %p5380 = scmp.le.s32.totalorder 2, %s13
      // Predicated region
      $region41: #{tpu_custom_call.1} parent=5 // pred_check
        %p5381 = pneg %p5380
      $region42: #{tpu_custom_call.1} parent=5 // pred_check_branch
        %5383 = sbr.rel (%p5381) target = $region44
      $region43: #{tpu_custom_call.1} parent=5 // pred_region
        %s5384 = ssub.s32 %s13, 2
        // Predicated region
        $region45: #{tpu_custom_call.1} parent=43 // pred_check
          %p5385 = pneg %p169
        $region46: #{tpu_custom_call.1} parent=43 // pred_check_branch
          %5387 = sbr.rel (%p5385) target = $region48
        $region47: #{tpu_custom_call.1} parent=43 // pred_region
          %s5388 = sand.u32 %s154, 1
          %s5389 = scalar_lea.sflag [#allocation3], %s5388
          %s5390 = sand.u32 %s154, 1
          %s5391 = smul.addr %s5390, 128
          %s5392 = scalar_lea.vmem [#allocation2], %s5391
          %5393 = dma.done %s5389, 2048
        $region48: #{tpu_custom_call.1} parent=43 // pred_fallthru
          _
      $region44: #{tpu_custom_call.1} parent=5 // pred_fallthru
        _
    $region6: #{tpu_custom_call.1} parent=1 // loop_footer
      %s17 = sadd.s32 1, %s13
    $region7: #{tpu_custom_call.1} parent=1 // loop_footer_branch
      %12 = sbr.rel target = $region3
    $region8: #{tpu_custom_call.1} parent=1 // loop_exit
      _
    %5394 = vsyncpa [#allocation3], 1
    %s5395 = scalar_lea.sflag [#allocation3], 1
    %5396 = vsyncpa %s5395, 1

</llo_original>
